<compile_context>
chip_gen: v7x
topology: tpu7x:2x2x1
jax: 0.10.0
libtpu: 0.0.40
codegen_flags: <defaults>
</compile_context>

<pallas_src>
import functools

import jax
import jax.numpy as jnp
import numpy as np
from jax.experimental import pallas as pl
from jax.experimental.pallas import tpu as pltpu

_BN_EPS = 1e-5


def _round_up(x, m):
    return ((x + m - 1) // m) * m


@functools.lru_cache(maxsize=None)
def _tpu_prefs():
    """Generation-dependent tiling / VMEM budget (v5e/v6e: 128 MiB, v7x: 64 MiB)."""
    vmem = None
    try:
        info = pltpu.get_tpu_info()
        for attr in ("vmem_capacity_bytes", "vmem_size_bytes", "vmem_bytes"):
            v = getattr(info, attr, None)
            if isinstance(v, int) and v > 0:
                vmem = v
                break
    except Exception:
        vmem = None
    if vmem is not None and vmem >= 100 * 1024 * 1024:
        # v5e / v6e: plenty of VMEM -> large tiles, generous scoped limit.
        return {"tm": 1024, "tn": 1024, "tk": 1024,
                "vmem_limit": 96 * 1024 * 1024}
    # v7x (64 MiB physical) or unknown generation: conservative settings.
    return {"tm": 512, "tn": 512, "tk": 512, "vmem_limit": 40 * 1024 * 1024}


# ----------------------------- Pallas kernels -----------------------------

def _matmul_bias_kernel(x_ref, w_ref, b_ref, o_ref, acc_ref, *, relu):
    """acc += x @ w (bf16 in, f32 acc); on last K step: out = [relu](acc + bias)."""
    @pl.when(pl.program_id(2) == 0)
    def _():
        acc_ref[...] = jnp.zeros_like(acc_ref)

    acc_ref[...] += jnp.dot(x_ref[...], w_ref[...],
                            preferred_element_type=jnp.float32)

    @pl.when(pl.program_id(2) == pl.num_programs(2) - 1)
    def _():
        out = acc_ref[...] + b_ref[...]
        if relu:
            out = jnp.maximum(out, 0.0)
        o_ref[...] = out.astype(o_ref.dtype)


def _matmul_bias_add_kernel(x_ref, w_ref, b_ref, res_ref, o_ref, acc_ref, *, relu):
    """Same as above, plus a fused residual add before the (optional) ReLU."""
    @pl.when(pl.program_id(2) == 0)
    def _():
        acc_ref[...] = jnp.zeros_like(acc_ref)

    acc_ref[...] += jnp.dot(x_ref[...], w_ref[...],
                            preferred_element_type=jnp.float32)

    @pl.when(pl.program_id(2) == pl.num_programs(2) - 1)
    def _():
        out = acc_ref[...] + b_ref[...] + res_ref[...].astype(jnp.float32)
        if relu:
            out = jnp.maximum(out, 0.0)
        o_ref[...] = out.astype(o_ref.dtype)


def _conv3x3_kernel(x_ref, w01_ref, wr_ref, b_ref, o_ref, acc_ref,
                    *, stride, t, wo, c):
    """3x3 / pad=1 / stride conv + folded-BN bias + ReLU for `t` output rows.

    x_ref  : (Hq, s, Wq, s*C)  padded image, stride phases innermost (pure
             reshape: x_ref[hq, hr, wq, wr*C + c] == padded[hq*s+hr, wq*s+wr, c])
    w01_ref: (3, s*C, Cout)    taps kw = 0..s-1 packed along K (BN scale folded)
    wr_ref : (3, 3-s, C, Cout) remaining taps kw = s..2
    b_ref  : (1, Cout)         BN bias (f32)
    o_ref  : (t, Wo, Cout)     `t` output rows (bf16)
    acc_ref: (t*Wo, Cout) f32  VMEM accumulator
    """
    s = stride
    r0 = pl.program_id(1) * t                      # first output row of this tile
    acc_ref[...] = jnp.zeros_like(acc_ref)
    for kh in range(3):
        dh, hr = kh // s, kh % s
        # Taps kw = 0..s-1 share wq-offset 0: consume the full packed lane slab
        # with a single, larger MXU matmul (lane-aligned, fewer matmuls).
        tap = x_ref[pl.ds(r0 + dh, t), hr, pl.ds(0, wo), :]          # (t, wo, s*C)
        acc_ref[...] += jnp.dot(tap.reshape(t * wo, s * c), w01_ref[kh],
                                preferred_element_type=jnp.float32)
        for kw in range(s, 3):                                        # remaining taps
            tap = x_ref[pl.ds(r0 + dh, t), hr, pl.ds(kw // s, wo), pl.ds(0, c)]
            acc_ref[...] += jnp.dot(tap.reshape(t * wo, c), wr_ref[kh, kw - s],
                                    preferred_element_type=jnp.float32)
    out = jnp.maximum(acc_ref[...] + b_ref[...], 0.0)
    o_ref[...] = out.reshape(t, wo, -1).astype(o_ref.dtype)


def _conv1x1_stride_kernel(x_ref, w_ref, b_ref, o_ref, *, t, wo, c):
    """Shortcut: 1x1 conv with spatial stride + folded-BN bias (no ReLU).

    x_ref: (t, 1, Wq, s*Cin)  stride-phase-(0,0) rows for this row tile
    w_ref: (Cin, Cout)   b_ref: (1, Cout)   o_ref: (t, Wo, Cout)
    """
    tap = x_ref[:, 0, pl.ds(0, wo), pl.ds(0, c)]                      # (t, wo, Cin)
    acc = jnp.dot(tap.reshape(t * wo, c), w_ref[...],
                  preferred_element_type=jnp.float32)
    out = acc + b_ref[...]
    o_ref[...] = out.reshape(t, wo, -1).astype(o_ref.dtype)


# ------------------------------ kernel wrappers -----------------------------

def bn_fold(p):
    scale = p["gamma"] / jnp.sqrt(p["var"] + _BN_EPS)
    bias = p["beta"] - p["mean"] * scale
    return scale, bias


def _pick_m_tiling(M, tm_max):
    """Row tiling for flat matmuls: biggest tile allowed that still gives >=2 steps."""
    for tm in (1024, 512, 256):
        if tm <= tm_max and M > tm:
            return _round_up(M, tm), tm
    return _round_up(M, 128), 128


def _pick_row_tile(Ho, Wo, target_rows=256):
    """Smallest divisor t of Ho with t*Wo >= target_rows (whole image otherwise)."""
    for t in range(1, Ho + 1):
        if Ho % t == 0 and t * Wo >= target_rows:
            return t
    return Ho


def matmul_bias(x2d, w2d, bias, *, relu, residual=None, out_padded=False):
    """out = [relu]((x @ w) + bias [+ residual]); bf16 operands, f32 accumulate."""
    prefs = _tpu_prefs()
    M, K = x2d.shape
    K2, Cout = w2d.shape
    assert K == K2

    Mp, tm = _pick_m_tiling(M, prefs["tm"])
    tk = K if K <= prefs["tk"] else prefs["tk"]
    Kp = _round_up(K, tk)
    if Cout <= prefs["tn"]:
        tn = Cout
    else:
        tn = prefs["tn"] if Cout % prefs["tn"] == 0 else 512
    Np = _round_up(Cout, tn)

    x = x2d.astype(jnp.bfloat16)
    w = w2d.astype(jnp.bfloat16)
    if (Mp, Kp) != (M, K):
        x = jnp.pad(x, ((0, Mp - M), (0, Kp - K)))
    if (Kp, Np) != (K, Cout):
        w = jnp.pad(w, ((0, Kp - K), (0, Np - Cout)))
    b = bias.reshape(1, Cout).astype(jnp.float32)
    if Np != Cout:
        b = jnp.pad(b, ((0, 0), (0, Np - Cout)))

    grid = (Mp // tm, Np // tn, Kp // tk)
    in_specs = [
        pl.BlockSpec((tm, tk), lambda i, j, k: (i, k)),
        pl.BlockSpec((tk, tn), lambda i, j, k: (k, j)),
        pl.BlockSpec((1, tn), lambda i, j, k: (0, j)),
    ]
    args = [x, w, b]
    bytes_accessed = 2 * (Mp * Kp + Kp * Np + Mp * Np) + 4 * Np

    if residual is None:
        kernel = functools.partial(_matmul_bias_kernel, relu=relu)
    else:
        kernel = functools.partial(_matmul_bias_add_kernel, relu=relu)
        res = residual.astype(jnp.bfloat16)
        if res.shape != (Mp, Np):
            res = jnp.pad(res, ((0, Mp - res.shape[0]), (0, Np - res.shape[1])))
        in_specs.append(pl.BlockSpec((tm, tn), lambda i, j, k: (i, j)))
        args.append(res)
        bytes_accessed += 2 * Mp * Np

    out = pl.pallas_call(
        kernel,
        out_shape=jax.ShapeDtypeStruct((Mp, Np), jnp.bfloat16),
        grid_spec=pltpu.PrefetchScalarGridSpec(
            num_scalar_prefetch=0,
            grid=grid,
            in_specs=in_specs,
            out_specs=pl.BlockSpec((tm, tn), lambda i, j, k: (i, j)),
            scratch_shapes=[pltpu.VMEM((tm, tn), jnp.float32)],
        ),
        compiler_params=pltpu.CompilerParams(
            dimension_semantics=("parallel", "parallel", "arbitrary"),
            vmem_limit_bytes=prefs["vmem_limit"],
        ),
        cost_estimate=pl.CostEstimate(
            flops=2 * Mp * Kp * Np, transcendentals=0,
            bytes_accessed=bytes_accessed),
    )(*args)

    if not out_padded and (Mp, Np) != (M, Cout):
        out = out[:M, :Cout]
    return out


def conv3x3_bn_relu(x_nhwc, w_oihw, bn_params, stride):
    """3x3 conv (pad=1, stride) + folded BN + ReLU; row-tiled, no im2col/transpose."""
    prefs = _tpu_prefs()
    N, H, W, C = x_nhwc.shape
    Cout = w_oihw.shape[0]
    s = stride
    assert s in (1, 2), "ResNet ConvBlock uses stride 1 or 2"
    Ho = (H - 1) // s + 1
    Wo = (W - 1) // s + 1

    scale, bias = bn_fold(bn_params)
    w_t = (jnp.transpose(w_oihw, (2, 3, 1, 0)) * scale[None, None, None, :]
           ).astype(jnp.bfloat16)                       # (3, 3, C, Cout), scale folded
    w01 = w_t[:, :s].reshape(3, s * C, Cout)            # taps kw=0..s-1 packed along K
    wrest = w_t[:, s:]                                  # (3, 3-s, C, Cout)
    b = bias.reshape(1, Cout).astype(jnp.float32)

    # Zero-pad (pad=1 plus stride alignment) and fold stride phases into the
    # minor dims with a PURE reshape (identical memory layout, no transpose):
    #   xr[n, hq, hr, wq, wr*C + c] == padded[n, hq*s + hr, wq*s + wr, c]
    Hp = _round_up(max(H + 2, (Ho - 1) * s + 3), s)
    Wp = _round_up(max(W + 2, (Wo - 1) * s + 3), s)
    xp = jnp.pad(x_nhwc.astype(jnp.bfloat16),
                 ((0, 0), (1, Hp - H - 1), (1, Wp - W - 1), (0, 0)))
    Hq, Wq = Hp // s, Wp // s
    xr = xp.reshape(N, Hq, s, Wq, s * C)

    t = _pick_row_tile(Ho, Wo)
    n_rt = Ho // t

    kernel = functools.partial(_conv3x3_kernel, stride=s, t=t, wo=Wo, c=C)
    out = pl.pallas_call(
        kernel,
        out_shape=jax.ShapeDtypeStruct((N, Ho, Wo, Cout), jnp.bfloat16),
        grid_spec=pltpu.PrefetchScalarGridSpec(
            num_scalar_prefetch=0,
            grid=(N, n_rt),
            in_specs=[
                # whole padded image stays VMEM-resident across the row tiles
                pl.BlockSpec((None, Hq, s, Wq, s * C),
                             lambda n, r: (n, 0, 0, 0, 0)),
                pl.BlockSpec((3, s * C, Cout), lambda n, r: (0, 0, 0)),
                pl.BlockSpec((3, 3 - s, C, Cout), lambda n, r: (0, 0, 0, 0)),
                pl.BlockSpec((1, Cout), lambda n, r: (0, 0)),
            ],
            out_specs=pl.BlockSpec((None, t, Wo, Cout), lambda n, r: (n, r, 0, 0)),
            scratch_shapes=[pltpu.VMEM((t * Wo, Cout), jnp.float32)],
        ),
        compiler_params=pltpu.CompilerParams(
            dimension_semantics=("parallel", "parallel"),
            vmem_limit_bytes=prefs["vmem_limit"],
        ),
        cost_estimate=pl.CostEstimate(
            flops=2 * N * Ho * Wo * 9 * C * Cout, transcendentals=0,
            bytes_accessed=2 * (xr.size + w_t.size + N * Ho * Wo * Cout) + 4 * Cout),
    )(xr, w01, wrest, b)
    return out


def shortcut_conv_bn(x_nhwc, w_oihw, bn_params, stride):
    """1x1 conv with spatial stride + folded BN (no ReLU); the stride is folded
    into the kernel's BlockSpec (no host-side strided gather over x)."""
    prefs = _tpu_prefs()
    N, H, W, Cin = x_nhwc.shape
    Cout = w_oihw.shape[0]
    s = stride
    Ho = (H - 1) // s + 1
    Wo = (W - 1) // s + 1

    scale, bias = bn_fold(bn_params)
    w = (jnp.transpose(w_oihw[:, :, 0, 0], (1, 0)) * scale[None, :]
         ).astype(jnp.bfloat16)
    b = bias.reshape(1, Cout).astype(jnp.float32)

    Hs, Ws = _round_up(H, s), _round_up(W, s)
    xp = x_nhwc.astype(jnp.bfloat16)
    if (Hs, Ws) != (H, W):
        xp = jnp.pad(xp, ((0, 0), (0, Hs - H), (0, Ws - W), (0, 0)))
    xr = xp.reshape(N, Hs // s, s, Ws // s, s * Cin)     # pure reshape, phases inner

    t = _pick_row_tile(Ho, Wo)
    n_rt = Ho // t

    kernel = functools.partial(_conv1x1_stride_kernel, t=t, wo=Wo, c=Cin)
    out = pl.pallas_call(
        kernel,
        out_shape=jax.ShapeDtypeStruct((N, Ho, Wo, Cout), jnp.bfloat16),
        grid_spec=pltpu.PrefetchScalarGridSpec(
            num_scalar_prefetch=0,
            grid=(N, n_rt),
            in_specs=[
                # only the hr = 0 stride-phase rows of this row tile are DMA'd
                pl.BlockSpec((None, t, 1, Ws // s, s * Cin),
                             lambda n, r: (n, r, 0, 0, 0)),
                pl.BlockSpec((Cin, Cout), lambda n, r: (0, 0)),
                pl.BlockSpec((1, Cout), lambda n, r: (0, 0)),
            ],
            out_specs=pl.BlockSpec((None, t, Wo, Cout), lambda n, r: (n, r, 0, 0)),
        ),
        compiler_params=pltpu.CompilerParams(
            dimension_semantics=("parallel", "parallel"),
            vmem_limit_bytes=prefs["vmem_limit"],
        ),
        cost_estimate=pl.CostEstimate(
            flops=2 * N * Ho * Wo * Cin * Cout, transcendentals=0,
            bytes_accessed=2 * (N * Ho * Wo * (s * Cin + Cout) + Cin * Cout)
            + 4 * Cout),
    )(xr, w, b)
    return out


# ------------------------------ forward pass --------------------------------

def conv_block_forward(x_nchw, params, stride):
    """Pallas ConvBlock.forward.  x is NCHW (PyTorch layout); NHWC/bf16 inside."""
    N, Cin, H, W = x_nchw.shape
    x = jnp.transpose(x_nchw, (0, 2, 3, 1)).astype(jnp.bfloat16)       # NHWC once

    # conv1 (1x1) + bn1 + relu
    w1 = params["conv1_w"]
    planes = w1.shape[0]
    s1, b1 = bn_fold(params["bn1"])
    w1f = jnp.transpose(w1[:, :, 0, 0], (1, 0)) * s1[None, :]
    out1 = matmul_bias(x.reshape(N * H * W, Cin), w1f, b1, relu=True)
    out1 = out1.reshape(N, H, W, planes)

    # conv2 (3x3, stride, pad=1) + bn2 + relu — row-tiled fused kernel
    out2 = conv3x3_bn_relu(out1, params["conv2_w"], params["bn2"], stride)
    Ho, Wo = out2.shape[1], out2.shape[2]

    # shortcut: 1x1 conv (stride) + bn
    cout4 = params["sc_w"].shape[0]
    if stride == 1:
        ss, bs = bn_fold(params["bn_sc"])
        wsf = jnp.transpose(params["sc_w"][:, :, 0, 0], (1, 0)) * ss[None, :]
        # keep padded layout so conv3 consumes it without slice -> re-pad churn
        sc_res = matmul_bias(x.reshape(N * H * W, Cin), wsf, bs,
                             relu=False, out_padded=True)
    else:
        sc = shortcut_conv_bn(x, params["sc_w"], params["bn_sc"], stride)
        sc_res = sc.reshape(N * Ho * Wo, cout4)

    # conv3 (1x1) + bn3 + residual add + relu  (all fused in one kernel)
    s3, b3 = bn_fold(params["bn3"])
    w3f = jnp.transpose(params["conv3_w"][:, :, 0, 0], (1, 0)) * s3[None, :]
    out3 = matmul_bias(out2.reshape(N * Ho * Wo, planes), w3f, b3,
                       relu=True, residual=sc_res)

    out = out3.reshape(N, Ho, Wo, cout4).astype(jnp.float32)
    return jnp.transpose(out, (0, 3, 1, 2))                  # back to NCHW


# --------------------------- reference (pure JAX) ---------------------------

def _ref_conv(x, w, stride, padding):
    return jax.lax.conv_general_dilated(
        x, w, (stride, stride), padding,
        dimension_numbers=("NCHW", "OIHW", "NCHW"),
        precision=jax.lax.Precision.HIGHEST)


def _ref_bn(x, p):
    s, b = bn_fold(p)
    return x * s[None, :, None, None] + b[None, :, None, None]


def ref_forward(x, params, stride):
    out = jax.nn.relu(_ref_bn(_ref_conv(x, params["conv1_w"], 1, "VALID"), params["bn1"]))
    out = jax.nn.relu(_ref_bn(_ref_conv(out, params["conv2_w"], stride, [(1, 1), (1, 1)]), params["bn2"]))
    out = _ref_bn(_ref_conv(out, params["conv3_w"], 1, "VALID"), params["bn3"])
    sc = _ref_bn(_ref_conv(x, params["sc_w"], stride, "VALID"), params["bn_sc"])
    return jax.nn.relu(out + sc)


# --------------------------------- params -----------------------------------

def init_bn(key, c):
    k1, k2, k3, k4 = jax.random.split(key, 4)
    return dict(
        gamma=1.0 + 0.1 * jax.random.normal(k1, (c,), jnp.float32),
        beta=0.1 * jax.random.normal(k2, (c,), jnp.float32),
        mean=0.1 * jax.random.normal(k3, (c,), jnp.float32),
        var=0.5 + jnp.abs(jax.random.normal(k4, (c,), jnp.float32)),
    )


def init_params(key, in_planes, planes):
    ks = jax.random.split(key, 8)
    return dict(
        conv1_w=0.2 * jax.random.normal(ks[0], (planes, in_planes, 1, 1), jnp.float32),
        bn1=init_bn(ks[1], planes),
        conv2_w=0.2 * jax.random.normal(ks[2], (planes, planes, 3, 3), jnp.float32),
        bn2=init_bn(ks[3], planes),
        conv3_w=0.2 * jax.random.normal(ks[4], (4 * planes, planes, 1, 1), jnp.float32),
        bn3=init_bn(ks[5], 4 * planes),
        sc_w=0.2 * jax.random.normal(ks[6], (4 * planes, in_planes, 1, 1), jnp.float32),
        bn_sc=init_bn(ks[7], 4 * planes),
    )


# ----------------------------------- main ------------------------------------

if __name__ == "__main__":
    in_planes, planes, stride = 4, 4, 2
    N, H, W = 2, 16, 16

    key = jax.random.PRNGKey(0)
    kx, kp = jax.random.split(key)
    x = jax.random.normal(kx, (N, in_planes, H, W), jnp.float32)
    params = init_params(kp, in_planes, planes)

    fwd = jax.jit(conv_block_forward, static_argnums=2)

    # Primary config: downsampling bottleneck block (stride 2).
    out = jax.block_until_ready(fwd(x, params, stride))
    ref = jax.block_until_ready(ref_forward(x, params, stride))
    assert out.shape == ref.shape == (N, 4 * planes, H // stride, W // stride)
    # bf16 MXU operands + bf16 intermediates -> tolerance appropriate for bf16.
    np.testing.assert_allclose(np.asarray(out), np.asarray(ref), rtol=2e-2, atol=2e-2)

    # Secondary config: stride-1 block exercises the other conv2 / shortcut path.
    out_s1 = jax.block_until_ready(fwd(x, params, 1))
    ref_s1 = jax.block_until_ready(ref_forward(x, params, 1))
    assert out_s1.shape == ref_s1.shape == (N, 4 * planes, H, W)
    np.testing.assert_allclose(np.asarray(out_s1), np.asarray(ref_s1),
                               rtol=2e-2, atol=2e-2)

    print("KERNEL_OK")
</pallas_src>

<mosaic_0001>
module attributes {stable_mosaic.version = 11 : i64} {
  func.func @_conv1x1_stride_kernel(%arg0: i32, %arg1: i32, %arg2: memref<1x8x1x8x8xbf16, #tpu.memory_space<vmem>>, %arg3: memref<4x16xbf16, #tpu.memory_space<vmem>>, %arg4: memref<1x16xf32, #tpu.memory_space<vmem>>, %arg5: memref<1x8x8x16xbf16, #tpu.memory_space<vmem>>) attributes {dimension_semantics = [#tpu.dimension_semantics<parallel>, #tpu.dimension_semantics<parallel>], iteration_bounds = array<i64: 2, 1>, scalar_prefetch = 0 : i64, scratch_operands = 0 : i64, tpu.core_type = #tpu.core_type<tc>, window_params = [{transform_indices = @transform_0, window_bounds = array<i64: 1, 8, 1, 8, 8>}, {pipeline_mode = #tpu.pipeline_mode<synchronous>, transform_indices = @transform_1, window_bounds = array<i64: 4, 16>}, {pipeline_mode = #tpu.pipeline_mode<synchronous>, transform_indices = @transform_2, window_bounds = array<i64: 1, 16>}, {transform_indices = @transform_3, window_bounds = array<i64: 1, 8, 8, 16>}]} {
    %c0 = arith.constant 0 : index
    %c0_0 = arith.constant 0 : index
    %c0_1 = arith.constant 0 : index
    %c0_2 = arith.constant 0 : index
    %c0_3 = arith.constant 0 : index
    %0 = vector.load %arg2[%c0, %c0_0, %c0_1, %c0_2, %c0_3] : memref<1x8x1x8x8xbf16, #tpu.memory_space<vmem>>, vector<1x8x1x8x4xbf16>
    %1 = vector.shape_cast %0 : vector<1x8x1x8x4xbf16> to vector<8x8x4xbf16>
    %2 = vector.shape_cast %1 : vector<8x8x4xbf16> to vector<64x4xbf16>
    %c0_4 = arith.constant 0 : index
    %c0_5 = arith.constant 0 : index
    %3 = vector.load %arg3[%c0_4, %c0_5] : memref<4x16xbf16, #tpu.memory_space<vmem>>, vector<4x16xbf16>
    %cst = arith.constant dense<0.000000e+00> : vector<64x16xf32>
    %4 = tpu.matmul %2, %3, %cst {dimension_numbers = #tpu.dot_dimension_numbers<[1], [0], [0], [1], [0, 0, 1, 1], [], []>} : vector<64x4xbf16>, vector<4x16xbf16>, vector<64x16xf32> -> vector<64x16xf32>
    %c0_6 = arith.constant 0 : index
    %c0_7 = arith.constant 0 : index
    %5 = vector.load %arg4[%c0_6, %c0_7] : memref<1x16xf32, #tpu.memory_space<vmem>>, vector<1x16xf32>
    %6 = vector.broadcast %5 : vector<1x16xf32> to vector<64x16xf32>
    %7 = arith.addf %4, %6 : vector<64x16xf32>
    %8 = vector.shape_cast %7 : vector<64x16xf32> to vector<8x8x16xf32>
    %9 = arith.truncf %8 : vector<8x8x16xf32> to vector<8x8x16xbf16>
    %c0_8 = arith.constant 0 : index
    %c0_9 = arith.constant 0 : index
    %c0_10 = arith.constant 0 : index
    %c0_11 = arith.constant 0 : index
    %10 = vector.load %arg5[%c0_8, %c0_9, %c0_10, %c0_11] : memref<1x8x8x16xbf16, #tpu.memory_space<vmem>>, vector<1x8x8x16xbf16>
    %11 = vector.shape_cast %10 : vector<1x8x8x16xbf16> to vector<8x8x16xbf16>
    %12 = vector.shape_cast %9 : vector<8x8x16xbf16> to vector<1x8x8x16xbf16>
    tpu.vector_store %arg5[%c0_8, %c0_9, %c0_10, %c0_11], %12 {strides = array<i32>} : memref<1x8x8x16xbf16, #tpu.memory_space<vmem>>, vector<1x8x8x16xbf16>,
    return
  }
  func.func @transform_0(%arg0: i32, %arg1: i32) -> (i32, i32, i32, i32, i32) {
    %c0_i32 = arith.constant 0 : i32
    %c0_i32_0 = arith.constant 0 : i32
    %c0_i32_1 = arith.constant 0 : i32
    %c0_i32_2 = arith.constant 0 : i32
    return %arg0, %arg1, %c0_i32, %c0_i32_0, %c0_i32_1 : i32, i32, i32, i32, i32
  }
  func.func @transform_1(%arg0: i32, %arg1: i32) -> (i32, i32) {
    %c0_i32 = arith.constant 0 : i32
    %c0_i32_0 = arith.constant 0 : i32
    %c0_i32_1 = arith.constant 0 : i32
    return %c0_i32, %c0_i32_0 : i32, i32
  }
  func.func @transform_2(%arg0: i32, %arg1: i32) -> (i32, i32) {
    %c0_i32 = arith.constant 0 : i32
    %c0_i32_0 = arith.constant 0 : i32
    %c0_i32_1 = arith.constant 0 : i32
    return %c0_i32, %c0_i32_0 : i32, i32
  }
  func.func @transform_3(%arg0: i32, %arg1: i32) -> (i32, i32, i32, i32) {
    %c0_i32 = arith.constant 0 : i32
    %c0_i32_0 = arith.constant 0 : i32
    %c0_i32_1 = arith.constant 0 : i32
    return %arg0, %arg1, %c0_i32, %c0_i32_0 : i32, i32, i32, i32
  }
}

module attributes {stable_mosaic.version = 11 : i64} {
  func.func @_matmul_bias_kernel(%arg0: i32, %arg1: i32, %arg2: i32, %arg3: memref<256x4xbf16, #tpu.memory_space<vmem>>, %arg4: memref<4x4xbf16, #tpu.memory_space<vmem>>, %arg5: memref<1x4xf32, #tpu.memory_space<vmem>>, %arg6: memref<256x4xbf16, #tpu.memory_space<vmem>>, %arg7: memref<256x4xf32, #tpu.memory_space<vmem>>) attributes {dimension_semantics = [#tpu.dimension_semantics<parallel>, #tpu.dimension_semantics<parallel>, #tpu.dimension_semantics<arbitrary>], iteration_bounds = array<i64: 2, 1, 1>, scalar_prefetch = 0 : i64, scratch_operands = 1 : i64, tpu.core_type = #tpu.core_type<tc>, window_params = [{transform_indices = @transform_0, window_bounds = array<i64: 256, 4>}, {transform_indices = @transform_1, window_bounds = array<i64: 4, 4>}, {transform_indices = @transform_2, window_bounds = array<i64: 1, 4>}, {transform_indices = @transform_3, window_bounds = array<i64: 256, 4>}]} {
    %c0_i32 = arith.constant 0 : i32
    %0 = arith.cmpi eq, %arg2, %c0_i32 : i32
    %1 = arith.extui %0 : i1 to i32
    %c0_i32_0 = arith.constant 0 : i32
    %2 = arith.cmpi ne, %1, %c0_i32_0 : i32
    scf.if %2 {
      %cst_10 = arith.constant 0.000000e+00 : f32
      %12 = vector.broadcast %cst_10 : f32 to vector<256x4xf32>
      %c0_11 = arith.constant 0 : index
      %c0_12 = arith.constant 0 : index
      %13 = vector.load %arg7[%c0_11, %c0_12] : memref<256x4xf32, #tpu.memory_space<vmem>>, vector<256x4xf32>
      tpu.vector_store %arg7[%c0_11, %c0_12], %12 {strides = array<i32>} : memref<256x4xf32, #tpu.memory_space<vmem>>, vector<256x4xf32>,
    } else {
    }
    %c0 = arith.constant 0 : index
    %c0_1 = arith.constant 0 : index
    %3 = vector.load %arg7[%c0, %c0_1] : memref<256x4xf32, #tpu.memory_space<vmem>>, vector<256x4xf32>
    %c0_2 = arith.constant 0 : index
    %c0_3 = arith.constant 0 : index
    %4 = vector.load %arg3[%c0_2, %c0_3] : memref<256x4xbf16, #tpu.memory_space<vmem>>, vector<256x4xbf16>
    %c0_4 = arith.constant 0 : index
    %c0_5 = arith.constant 0 : index
    %5 = vector.load %arg4[%c0_4, %c0_5] : memref<4x4xbf16, #tpu.memory_space<vmem>>, vector<4x4xbf16>
    %cst = arith.constant dense<0.000000e+00> : vector<256x4xf32>
    %6 = tpu.matmul %4, %5, %cst {dimension_numbers = #tpu.dot_dimension_numbers<[1], [0], [0], [1], [0, 0, 1, 1], [], []>} : vector<256x4xbf16>, vector<4x4xbf16>, vector<256x4xf32> -> vector<256x4xf32>
    %7 = arith.addf %3, %6 : vector<256x4xf32>
    %c0_6 = arith.constant 0 : index
    %c0_7 = arith.constant 0 : index
    %8 = vector.load %arg7[%c0_6, %c0_7] : memref<256x4xf32, #tpu.memory_space<vmem>>, vector<256x4xf32>
    tpu.vector_store %arg7[%c0_6, %c0_7], %7 {strides = array<i32>} : memref<256x4xf32, #tpu.memory_space<vmem>>, vector<256x4xf32>,
    %c0_i32_8 = arith.constant 0 : i32
    %9 = arith.cmpi eq, %arg2, %c0_i32_8 : i32
    %10 = arith.extui %9 : i1 to i32
    %c0_i32_9 = arith.constant 0 : i32
    %11 = arith.cmpi ne, %10, %c0_i32_9 : i32
    scf.if %11 {
      %c0_10 = arith.constant 0 : index
      %c0_11 = arith.constant 0 : index
      %12 = vector.load %arg7[%c0_10, %c0_11] : memref<256x4xf32, #tpu.memory_space<vmem>>, vector<256x4xf32>
      %c0_12 = arith.constant 0 : index
      %c0_13 = arith.constant 0 : index
      %13 = vector.load %arg5[%c0_12, %c0_13] : memref<1x4xf32, #tpu.memory_space<vmem>>, vector<1x4xf32>
      %14 = vector.broadcast %13 : vector<1x4xf32> to vector<256x4xf32>
      %15 = arith.addf %12, %14 : vector<256x4xf32>
      %cst_14 = arith.constant 0.000000e+00 : f32
      %16 = vector.broadcast %cst_14 : f32 to vector<256x4xf32>
      %17 = arith.maximumf %15, %16 : vector<256x4xf32>
      %18 = arith.truncf %17 : vector<256x4xf32> to vector<256x4xbf16>
      %c0_15 = arith.constant 0 : index
      %c0_16 = arith.constant 0 : index
      %19 = vector.load %arg6[%c0_15, %c0_16] : memref<256x4xbf16, #tpu.memory_space<vmem>>, vector<256x4xbf16>
      tpu.vector_store %arg6[%c0_15, %c0_16], %18 {strides = array<i32>} : memref<256x4xbf16, #tpu.memory_space<vmem>>, vector<256x4xbf16>,
    } else {
    }
    return
  }
  func.func @transform_0(%arg0: i32, %arg1: i32, %arg2: i32) -> (i32, i32) {
    %c0_i32 = arith.constant 0 : i32
    return %arg0, %arg2 : i32, i32
  }
  func.func @transform_1(%arg0: i32, %arg1: i32, %arg2: i32) -> (i32, i32) {
    %c0_i32 = arith.constant 0 : i32
    return %arg2, %arg1 : i32, i32
  }
  func.func @transform_2(%arg0: i32, %arg1: i32, %arg2: i32) -> (i32, i32) {
    %c0_i32 = arith.constant 0 : i32
    %c0_i32_0 = arith.constant 0 : i32
    return %c0_i32, %arg1 : i32, i32
  }
  func.func @transform_3(%arg0: i32, %arg1: i32, %arg2: i32) -> (i32, i32) {
    %c0_i32 = arith.constant 0 : i32
    return %arg0, %arg1 : i32, i32
  }
}

module attributes {stable_mosaic.version = 11 : i64} {
  func.func @_conv3x3_kernel(%arg0: i32, %arg1: i32, %arg2: memref<1x9x2x9x8xbf16, #tpu.memory_space<vmem>>, %arg3: memref<3x8x4xbf16, #tpu.memory_space<vmem>>, %arg4: memref<3x1x4x4xbf16, #tpu.memory_space<vmem>>, %arg5: memref<1x4xf32, #tpu.memory_space<vmem>>, %arg6: memref<1x8x8x4xbf16, #tpu.memory_space<vmem>>, %arg7: memref<64x4xf32, #tpu.memory_space<vmem>>) attributes {dimension_semantics = [#tpu.dimension_semantics<parallel>, #tpu.dimension_semantics<parallel>], iteration_bounds = array<i64: 2, 1>, scalar_prefetch = 0 : i64, scratch_operands = 1 : i64, tpu.core_type = #tpu.core_type<tc>, window_params = [{transform_indices = @transform_0, window_bounds = array<i64: 1, 9, 2, 9, 8>}, {pipeline_mode = #tpu.pipeline_mode<synchronous>, transform_indices = @transform_1, window_bounds = array<i64: 3, 8, 4>}, {pipeline_mode = #tpu.pipeline_mode<synchronous>, transform_indices = @transform_2, window_bounds = array<i64: 3, 1, 4, 4>}, {pipeline_mode = #tpu.pipeline_mode<synchronous>, transform_indices = @transform_3, window_bounds = array<i64: 1, 4>}, {transform_indices = @transform_4, window_bounds = array<i64: 1, 8, 8, 4>}]} {
    %c8_i32 = arith.constant 8 : i32
    %0 = arith.muli %arg1, %c8_i32 : i32
    %cst = arith.constant 0.000000e+00 : f32
    %1 = vector.broadcast %cst : f32 to vector<64x4xf32>
    %c0 = arith.constant 0 : index
    %c0_0 = arith.constant 0 : index
    %2 = vector.load %arg7[%c0, %c0_0] : memref<64x4xf32, #tpu.memory_space<vmem>>, vector<64x4xf32>
    tpu.vector_store %arg7[%c0, %c0_0], %1 {strides = array<i32>} : memref<64x4xf32, #tpu.memory_space<vmem>>, vector<64x4xf32>,
    %c0_i32 = arith.constant 0 : i32
    %3 = arith.addi %0, %c0_i32 : i32
    %c0_1 = arith.constant 0 : index
    %4 = arith.index_cast %3 : i32 to index
    %c0_2 = arith.constant 0 : index
    %c0_3 = arith.constant 0 : index
    %c0_4 = arith.constant 0 : index
    %5 = vector.load %arg2[%c0_1, %4, %c0_2, %c0_3, %c0_4] : memref<1x9x2x9x8xbf16, #tpu.memory_space<vmem>>, vector<1x8x1x8x8xbf16>
    %6 = vector.shape_cast %5 : vector<1x8x1x8x8xbf16> to vector<8x8x8xbf16>
    %c0_5 = arith.constant 0 : index
    %c0_6 = arith.constant 0 : index
    %7 = vector.load %arg7[%c0_5, %c0_6] : memref<64x4xf32, #tpu.memory_space<vmem>>, vector<64x4xf32>
    %8 = vector.shape_cast %6 : vector<8x8x8xbf16> to vector<64x8xbf16>
    %c0_7 = arith.constant 0 : index
    %c0_8 = arith.constant 0 : index
    %c0_9 = arith.constant 0 : index
    %9 = vector.load %arg3[%c0_7, %c0_8, %c0_9] : memref<3x8x4xbf16, #tpu.memory_space<vmem>>, vector<1x8x4xbf16>
    %10 = vector.shape_cast %9 : vector<1x8x4xbf16> to vector<8x4xbf16>
    %cst_10 = arith.constant dense<0.000000e+00> : vector<64x4xf32>
    %11 = tpu.matmul %8, %10, %cst_10 {dimension_numbers = #tpu.dot_dimension_numbers<[1], [0], [0], [1], [0, 0, 1, 1], [], []>} : vector<64x8xbf16>, vector<8x4xbf16>, vector<64x4xf32> -> vector<64x4xf32>
    %12 = arith.addf %7, %11 : vector<64x4xf32>
    %c0_11 = arith.constant 0 : index
    %c0_12 = arith.constant 0 : index
    %13 = vector.load %arg7[%c0_11, %c0_12] : memref<64x4xf32, #tpu.memory_space<vmem>>, vector<64x4xf32>
    tpu.vector_store %arg7[%c0_11, %c0_12], %12 {strides = array<i32>} : memref<64x4xf32, #tpu.memory_space<vmem>>, vector<64x4xf32>,
    %c0_i32_13 = arith.constant 0 : i32
    %14 = arith.addi %0, %c0_i32_13 : i32
    %c0_14 = arith.constant 0 : index
    %15 = arith.index_cast %14 : i32 to index
    %c0_15 = arith.constant 0 : index
    %c1 = arith.constant 1 : index
    %c0_16 = arith.constant 0 : index
    %16 = vector.load %arg2[%c0_14, %15, %c0_15, %c1, %c0_16] : memref<1x9x2x9x8xbf16, #tpu.memory_space<vmem>>, vector<1x8x1x8x4xbf16>
    %17 = vector.shape_cast %16 : vector<1x8x1x8x4xbf16> to vector<8x8x4xbf16>
    %c0_17 = arith.constant 0 : index
    %c0_18 = arith.constant 0 : index
    %18 = vector.load %arg7[%c0_17, %c0_18] : memref<64x4xf32, #tpu.memory_space<vmem>>, vector<64x4xf32>
    %19 = vector.shape_cast %17 : vector<8x8x4xbf16> to vector<64x4xbf16>
    %c0_19 = arith.constant 0 : index
    %c0_20 = arith.constant 0 : index
    %c0_21 = arith.constant 0 : index
    %c0_22 = arith.constant 0 : index
    %20 = vector.load %arg4[%c0_19, %c0_20, %c0_21, %c0_22] : memref<3x1x4x4xbf16, #tpu.memory_space<vmem>>, vector<1x1x4x4xbf16>
    %21 = vector.shape_cast %20 : vector<1x1x4x4xbf16> to vector<4x4xbf16>
    %cst_23 = arith.constant dense<0.000000e+00> : vector<64x4xf32>
    %22 = tpu.matmul %19, %21, %cst_23 {dimension_numbers = #tpu.dot_dimension_numbers<[1], [0], [0], [1], [0, 0, 1, 1], [], []>} : vector<64x4xbf16>, vector<4x4xbf16>, vector<64x4xf32> -> vector<64x4xf32>
    %23 = arith.addf %18, %22 : vector<64x4xf32>
    %c0_24 = arith.constant 0 : index
    %c0_25 = arith.constant 0 : index
    %24 = vector.load %arg7[%c0_24, %c0_25] : memref<64x4xf32, #tpu.memory_space<vmem>>, vector<64x4xf32>
    tpu.vector_store %arg7[%c0_24, %c0_25], %23 {strides = array<i32>} : memref<64x4xf32, #tpu.memory_space<vmem>>, vector<64x4xf32>,
    %c0_i32_26 = arith.constant 0 : i32
    %25 = arith.addi %0, %c0_i32_26 : i32
    %c0_27 = arith.constant 0 : index
    %26 = arith.index_cast %25 : i32 to index
    %c1_28 = arith.constant 1 : index
    %c0_29 = arith.constant 0 : index
    %c0_30 = arith.constant 0 : index
    %27 = vector.load %arg2[%c0_27, %26, %c1_28, %c0_29, %c0_30] : memref<1x9x2x9x8xbf16, #tpu.memory_space<vmem>>, vector<1x8x1x8x8xbf16>
    %28 = vector.shape_cast %27 : vector<1x8x1x8x8xbf16> to vector<8x8x8xbf16>
    %c0_31 = arith.constant 0 : index
    %c0_32 = arith.constant 0 : index
    %29 = vector.load %arg7[%c0_31, %c0_32] : memref<64x4xf32, #tpu.memory_space<vmem>>, vector<64x4xf32>
    %30 = vector.shape_cast %28 : vector<8x8x8xbf16> to vector<64x8xbf16>
    %c1_33 = arith.constant 1 : index
    %c0_34 = arith.constant 0 : index
    %c0_35 = arith.constant 0 : index
    %31 = vector.load %arg3[%c1_33, %c0_34, %c0_35] : memref<3x8x4xbf16, #tpu.memory_space<vmem>>, vector<1x8x4xbf16>
    %32 = vector.shape_cast %31 : vector<1x8x4xbf16> to vector<8x4xbf16>
    %cst_36 = arith.constant dense<0.000000e+00> : vector<64x4xf32>
    %33 = tpu.matmul %30, %32, %cst_36 {dimension_numbers = #tpu.dot_dimension_numbers<[1], [0], [0], [1], [0, 0, 1, 1], [], []>} : vector<64x8xbf16>, vector<8x4xbf16>, vector<64x4xf32> -> vector<64x4xf32>
    %34 = arith.addf %29, %33 : vector<64x4xf32>
    %c0_37 = arith.constant 0 : index
    %c0_38 = arith.constant 0 : index
    %35 = vector.load %arg7[%c0_37, %c0_38] : memref<64x4xf32, #tpu.memory_space<vmem>>, vector<64x4xf32>
    tpu.vector_store %arg7[%c0_37, %c0_38], %34 {strides = array<i32>} : memref<64x4xf32, #tpu.memory_space<vmem>>, vector<64x4xf32>,
    %c0_i32_39 = arith.constant 0 : i32
    %36 = arith.addi %0, %c0_i32_39 : i32
    %c0_40 = arith.constant 0 : index
    %37 = arith.index_cast %36 : i32 to index
    %c1_41 = arith.constant 1 : index
    %c1_42 = arith.constant 1 : index
    %c0_43 = arith.constant 0 : index
    %38 = vector.load %arg2[%c0_40, %37, %c1_41, %c1_42, %c0_43] : memref<1x9x2x9x8xbf16, #tpu.memory_space<vmem>>, vector<1x8x1x8x4xbf16>
    %39 = vector.shape_cast %38 : vector<1x8x1x8x4xbf16> to vector<8x8x4xbf16>
    %c0_44 = arith.constant 0 : index
    %c0_45 = arith.constant 0 : index
    %40 = vector.load %arg7[%c0_44, %c0_45] : memref<64x4xf32, #tpu.memory_space<vmem>>, vector<64x4xf32>
    %41 = vector.shape_cast %39 : vector<8x8x4xbf16> to vector<64x4xbf16>
    %c1_46 = arith.constant 1 : index
    %c0_47 = arith.constant 0 : index
    %c0_48 = arith.constant 0 : index
    %c0_49 = arith.constant 0 : index
    %42 = vector.load %arg4[%c1_46, %c0_47, %c0_48, %c0_49] : memref<3x1x4x4xbf16, #tpu.memory_space<vmem>>, vector<1x1x4x4xbf16>
    %43 = vector.shape_cast %42 : vector<1x1x4x4xbf16> to vector<4x4xbf16>
    %cst_50 = arith.constant dense<0.000000e+00> : vector<64x4xf32>
    %44 = tpu.matmul %41, %43, %cst_50 {dimension_numbers = #tpu.dot_dimension_numbers<[1], [0], [0], [1], [0, 0, 1, 1], [], []>} : vector<64x4xbf16>, vector<4x4xbf16>, vector<64x4xf32> -> vector<64x4xf32>
    %45 = arith.addf %40, %44 : vector<64x4xf32>
    %c0_51 = arith.constant 0 : index
    %c0_52 = arith.constant 0 : index
    %46 = vector.load %arg7[%c0_51, %c0_52] : memref<64x4xf32, #tpu.memory_space<vmem>>, vector<64x4xf32>
    tpu.vector_store %arg7[%c0_51, %c0_52], %45 {strides = array<i32>} : memref<64x4xf32, #tpu.memory_space<vmem>>, vector<64x4xf32>,
    %c1_i32 = arith.constant 1 : i32
    %47 = arith.addi %0, %c1_i32 : i32
    %c0_53 = arith.constant 0 : index
    %48 = arith.index_cast %47 : i32 to index
    %c0_54 = arith.constant 0 : index
    %c0_55 = arith.constant 0 : index
    %c0_56 = arith.constant 0 : index
    %49 = vector.load %arg2[%c0_53, %48, %c0_54, %c0_55, %c0_56] : memref<1x9x2x9x8xbf16, #tpu.memory_space<vmem>>, vector<1x8x1x8x8xbf16>
    %50 = vector.shape_cast %49 : vector<1x8x1x8x8xbf16> to vector<8x8x8xbf16>
    %c0_57 = arith.constant 0 : index
    %c0_58 = arith.constant 0 : index
    %51 = vector.load %arg7[%c0_57, %c0_58] : memref<64x4xf32, #tpu.memory_space<vmem>>, vector<64x4xf32>
    %52 = vector.shape_cast %50 : vector<8x8x8xbf16> to vector<64x8xbf16>
    %c2 = arith.constant 2 : index
    %c0_59 = arith.constant 0 : index
    %c0_60 = arith.constant 0 : index
    %53 = vector.load %arg3[%c2, %c0_59, %c0_60] : memref<3x8x4xbf16, #tpu.memory_space<vmem>>, vector<1x8x4xbf16>
    %54 = vector.shape_cast %53 : vector<1x8x4xbf16> to vector<8x4xbf16>
    %cst_61 = arith.constant dense<0.000000e+00> : vector<64x4xf32>
    %55 = tpu.matmul %52, %54, %cst_61 {dimension_numbers = #tpu.dot_dimension_numbers<[1], [0], [0], [1], [0, 0, 1, 1], [], []>} : vector<64x8xbf16>, vector<8x4xbf16>, vector<64x4xf32> -> vector<64x4xf32>
    %56 = arith.addf %51, %55 : vector<64x4xf32>
    %c0_62 = arith.constant 0 : index
    %c0_63 = arith.constant 0 : index
    %57 = vector.load %arg7[%c0_62, %c0_63] : memref<64x4xf32, #tpu.memory_space<vmem>>, vector<64x4xf32>
    tpu.vector_store %arg7[%c0_62, %c0_63], %56 {strides = array<i32>} : memref<64x4xf32, #tpu.memory_space<vmem>>, vector<64x4xf32>,
    %c1_i32_64 = arith.constant 1 : i32
    %58 = arith.addi %0, %c1_i32_64 : i32
    %c0_65 = arith.constant 0 : index
    %59 = arith.index_cast %58 : i32 to index
    %c0_66 = arith.constant 0 : index
    %c1_67 = arith.constant 1 : index
    %c0_68 = arith.constant 0 : index
    %60 = vector.load %arg2[%c0_65, %59, %c0_66, %c1_67, %c0_68] : memref<1x9x2x9x8xbf16, #tpu.memory_space<vmem>>, vector<1x8x1x8x4xbf16>
    %61 = vector.shape_cast %60 : vector<1x8x1x8x4xbf16> to vector<8x8x4xbf16>
    %c0_69 = arith.constant 0 : index
    %c0_70 = arith.constant 0 : index
    %62 = vector.load %arg7[%c0_69, %c0_70] : memref<64x4xf32, #tpu.memory_space<vmem>>, vector<64x4xf32>
    %63 = vector.shape_cast %61 : vector<8x8x4xbf16> to vector<64x4xbf16>
    %c2_71 = arith.constant 2 : index
    %c0_72 = arith.constant 0 : index
    %c0_73 = arith.constant 0 : index
    %c0_74 = arith.constant 0 : index
    %64 = vector.load %arg4[%c2_71, %c0_72, %c0_73, %c0_74] : memref<3x1x4x4xbf16, #tpu.memory_space<vmem>>, vector<1x1x4x4xbf16>
    %65 = vector.shape_cast %64 : vector<1x1x4x4xbf16> to vector<4x4xbf16>
    %cst_75 = arith.constant dense<0.000000e+00> : vector<64x4xf32>
    %66 = tpu.matmul %63, %65, %cst_75 {dimension_numbers = #tpu.dot_dimension_numbers<[1], [0], [0], [1], [0, 0, 1, 1], [], []>} : vector<64x4xbf16>, vector<4x4xbf16>, vector<64x4xf32> -> vector<64x4xf32>
    %67 = arith.addf %62, %66 : vector<64x4xf32>
    %c0_76 = arith.constant 0 : index
    %c0_77 = arith.constant 0 : index
    %68 = vector.load %arg7[%c0_76, %c0_77] : memref<64x4xf32, #tpu.memory_space<vmem>>, vector<64x4xf32>
    tpu.vector_store %arg7[%c0_76, %c0_77], %67 {strides = array<i32>} : memref<64x4xf32, #tpu.memory_space<vmem>>, vector<64x4xf32>,
    %c0_78 = arith.constant 0 : index
    %c0_79 = arith.constant 0 : index
    %69 = vector.load %arg7[%c0_78, %c0_79] : memref<64x4xf32, #tpu.memory_space<vmem>>, vector<64x4xf32>
    %c0_80 = arith.constant 0 : index
    %c0_81 = arith.constant 0 : index
    %70 = vector.load %arg5[%c0_80, %c0_81] : memref<1x4xf32, #tpu.memory_space<vmem>>, vector<1x4xf32>
    %71 = vector.broadcast %70 : vector<1x4xf32> to vector<64x4xf32>
    %72 = arith.addf %69, %71 : vector<64x4xf32>
    %cst_82 = arith.constant 0.000000e+00 : f32
    %73 = vector.broadcast %cst_82 : f32 to vector<64x4xf32>
    %74 = arith.maximumf %72, %73 : vector<64x4xf32>
    %75 = vector.shape_cast %74 : vector<64x4xf32> to vector<8x8x4xf32>
    %76 = arith.truncf %75 : vector<8x8x4xf32> to vector<8x8x4xbf16>
    %c0_83 = arith.constant 0 : index
    %c0_84 = arith.constant 0 : index
    %c0_85 = arith.constant 0 : index
    %c0_86 = arith.constant 0 : index
    %77 = vector.load %arg6[%c0_83, %c0_84, %c0_85, %c0_86] : memref<1x8x8x4xbf16, #tpu.memory_space<vmem>>, vector<1x8x8x4xbf16>
    %78 = vector.shape_cast %77 : vector<1x8x8x4xbf16> to vector<8x8x4xbf16>
    %79 = vector.shape_cast %76 : vector<8x8x4xbf16> to vector<1x8x8x4xbf16>
    tpu.vector_store %arg6[%c0_83, %c0_84, %c0_85, %c0_86], %79 {strides = array<i32>} : memref<1x8x8x4xbf16, #tpu.memory_space<vmem>>, vector<1x8x8x4xbf16>,
    return
  }
  func.func @transform_0(%arg0: i32, %arg1: i32) -> (i32, i32, i32, i32, i32) {
    %c0_i32 = arith.constant 0 : i32
    %c0_i32_0 = arith.constant 0 : i32
    %c0_i32_1 = arith.constant 0 : i32
    %c0_i32_2 = arith.constant 0 : i32
    %c0_i32_3 = arith.constant 0 : i32
    return %arg0, %c0_i32, %c0_i32_0, %c0_i32_1, %c0_i32_2 : i32, i32, i32, i32, i32
  }
  func.func @transform_1(%arg0: i32, %arg1: i32) -> (i32, i32, i32) {
    %c0_i32 = arith.constant 0 : i32
    %c0_i32_0 = arith.constant 0 : i32
    %c0_i32_1 = arith.constant 0 : i32
    %c0_i32_2 = arith.constant 0 : i32
    return %c0_i32, %c0_i32_0, %c0_i32_1 : i32, i32, i32
  }
  func.func @transform_2(%arg0: i32, %arg1: i32) -> (i32, i32, i32, i32) {
    %c0_i32 = arith.constant 0 : i32
    %c0_i32_0 = arith.constant 0 : i32
    %c0_i32_1 = arith.constant 0 : i32
    %c0_i32_2 = arith.constant 0 : i32
    %c0_i32_3 = arith.constant 0 : i32
    return %c0_i32, %c0_i32_0, %c0_i32_1, %c0_i32_2 : i32, i32, i32, i32
  }
  func.func @transform_3(%arg0: i32, %arg1: i32) -> (i32, i32) {
    %c0_i32 = arith.constant 0 : i32
    %c0_i32_0 = arith.constant 0 : i32
    %c0_i32_1 = arith.constant 0 : i32
    return %c0_i32, %c0_i32_0 : i32, i32
  }
  func.func @transform_4(%arg0: i32, %arg1: i32) -> (i32, i32, i32, i32) {
    %c0_i32 = arith.constant 0 : i32
    %c0_i32_0 = arith.constant 0 : i32
    %c0_i32_1 = arith.constant 0 : i32
    return %arg0, %arg1, %c0_i32, %c0_i32_0 : i32, i32, i32, i32
  }
}

module attributes {stable_mosaic.version = 11 : i64} {
  func.func @_matmul_bias_add_kernel(%arg0: i32, %arg1: i32, %arg2: i32, %arg3: memref<128x4xbf16, #tpu.memory_space<vmem>>, %arg4: memref<4x16xbf16, #tpu.memory_space<vmem>>, %arg5: memref<1x16xf32, #tpu.memory_space<vmem>>, %arg6: memref<128x16xbf16, #tpu.memory_space<vmem>>, %arg7: memref<128x16xbf16, #tpu.memory_space<vmem>>, %arg8: memref<128x16xf32, #tpu.memory_space<vmem>>) attributes {dimension_semantics = [#tpu.dimension_semantics<parallel>, #tpu.dimension_semantics<parallel>, #tpu.dimension_semantics<arbitrary>], iteration_bounds = array<i64: 1, 1, 1>, scalar_prefetch = 0 : i64, scratch_operands = 1 : i64, tpu.core_type = #tpu.core_type<tc>, window_params = [{transform_indices = @transform_0, window_bounds = array<i64: 128, 4>}, {transform_indices = @transform_1, window_bounds = array<i64: 4, 16>}, {transform_indices = @transform_2, window_bounds = array<i64: 1, 16>}, {transform_indices = @transform_3, window_bounds = array<i64: 128, 16>}, {transform_indices = @transform_4, window_bounds = array<i64: 128, 16>}]} {
    %c0_i32 = arith.constant 0 : i32
    %0 = arith.cmpi eq, %arg2, %c0_i32 : i32
    %1 = arith.extui %0 : i1 to i32
    %c0_i32_0 = arith.constant 0 : i32
    %2 = arith.cmpi ne, %1, %c0_i32_0 : i32
    scf.if %2 {
      %cst_10 = arith.constant 0.000000e+00 : f32
      %12 = vector.broadcast %cst_10 : f32 to vector<128x16xf32>
      %c0_11 = arith.constant 0 : index
      %c0_12 = arith.constant 0 : index
      %13 = vector.load %arg8[%c0_11, %c0_12] : memref<128x16xf32, #tpu.memory_space<vmem>>, vector<128x16xf32>
      tpu.vector_store %arg8[%c0_11, %c0_12], %12 {strides = array<i32>} : memref<128x16xf32, #tpu.memory_space<vmem>>, vector<128x16xf32>,
    } else {
    }
    %c0 = arith.constant 0 : index
    %c0_1 = arith.constant 0 : index
    %3 = vector.load %arg8[%c0, %c0_1] : memref<128x16xf32, #tpu.memory_space<vmem>>, vector<128x16xf32>
    %c0_2 = arith.constant 0 : index
    %c0_3 = arith.constant 0 : index
    %4 = vector.load %arg3[%c0_2, %c0_3] : memref<128x4xbf16, #tpu.memory_space<vmem>>, vector<128x4xbf16>
    %c0_4 = arith.constant 0 : index
    %c0_5 = arith.constant 0 : index
    %5 = vector.load %arg4[%c0_4, %c0_5] : memref<4x16xbf16, #tpu.memory_space<vmem>>, vector<4x16xbf16>
    %cst = arith.constant dense<0.000000e+00> : vector<128x16xf32>
    %6 = tpu.matmul %4, %5, %cst {dimension_numbers = #tpu.dot_dimension_numbers<[1], [0], [0], [1], [0, 0, 1, 1], [], []>} : vector<128x4xbf16>, vector<4x16xbf16>, vector<128x16xf32> -> vector<128x16xf32>
    %7 = arith.addf %3, %6 : vector<128x16xf32>
    %c0_6 = arith.constant 0 : index
    %c0_7 = arith.constant 0 : index
    %8 = vector.load %arg8[%c0_6, %c0_7] : memref<128x16xf32, #tpu.memory_space<vmem>>, vector<128x16xf32>
    tpu.vector_store %arg8[%c0_6, %c0_7], %7 {strides = array<i32>} : memref<128x16xf32, #tpu.memory_space<vmem>>, vector<128x16xf32>,
    %c0_i32_8 = arith.constant 0 : i32
    %9 = arith.cmpi eq, %arg2, %c0_i32_8 : i32
    %10 = arith.extui %9 : i1 to i32
    %c0_i32_9 = arith.constant 0 : i32
    %11 = arith.cmpi ne, %10, %c0_i32_9 : i32
    scf.if %11 {
      %c0_10 = arith.constant 0 : index
      %c0_11 = arith.constant 0 : index
      %12 = vector.load %arg8[%c0_10, %c0_11] : memref<128x16xf32, #tpu.memory_space<vmem>>, vector<128x16xf32>
      %c0_12 = arith.constant 0 : index
      %c0_13 = arith.constant 0 : index
      %13 = vector.load %arg5[%c0_12, %c0_13] : memref<1x16xf32, #tpu.memory_space<vmem>>, vector<1x16xf32>
      %14 = vector.broadcast %13 : vector<1x16xf32> to vector<128x16xf32>
      %15 = arith.addf %12, %14 : vector<128x16xf32>
      %c0_14 = arith.constant 0 : index
      %c0_15 = arith.constant 0 : index
      %16 = vector.load %arg6[%c0_14, %c0_15] : memref<128x16xbf16, #tpu.memory_space<vmem>>, vector<128x16xbf16>
      %17 = arith.extf %16 : vector<128x16xbf16> to vector<128x16xf32>
      %18 = arith.addf %15, %17 : vector<128x16xf32>
      %cst_16 = arith.constant 0.000000e+00 : f32
      %19 = vector.broadcast %cst_16 : f32 to vector<128x16xf32>
      %20 = arith.maximumf %18, %19 : vector<128x16xf32>
      %21 = arith.truncf %20 : vector<128x16xf32> to vector<128x16xbf16>
      %c0_17 = arith.constant 0 : index
      %c0_18 = arith.constant 0 : index
      %22 = vector.load %arg7[%c0_17, %c0_18] : memref<128x16xbf16, #tpu.memory_space<vmem>>, vector<128x16xbf16>
      tpu.vector_store %arg7[%c0_17, %c0_18], %21 {strides = array<i32>} : memref<128x16xbf16, #tpu.memory_space<vmem>>, vector<128x16xbf16>,
    } else {
    }
    return
  }
  func.func @transform_0(%arg0: i32, %arg1: i32, %arg2: i32) -> (i32, i32) {
    %c0_i32 = arith.constant 0 : i32
    return %arg0, %arg2 : i32, i32
  }
  func.func @transform_1(%arg0: i32, %arg1: i32, %arg2: i32) -> (i32, i32) {
    %c0_i32 = arith.constant 0 : i32
    return %arg2, %arg1 : i32, i32
  }
  func.func @transform_2(%arg0: i32, %arg1: i32, %arg2: i32) -> (i32, i32) {
    %c0_i32 = arith.constant 0 : i32
    %c0_i32_0 = arith.constant 0 : i32
    return %c0_i32, %arg1 : i32, i32
  }
  func.func @transform_3(%arg0: i32, %arg1: i32, %arg2: i32) -> (i32, i32) {
    %c0_i32 = arith.constant 0 : i32
    return %arg0, %arg1 : i32, i32
  }
  func.func @transform_4(%arg0: i32, %arg1: i32, %arg2: i32) -> (i32, i32) {
    %c0_i32 = arith.constant 0 : i32
    return %arg0, %arg1 : i32, i32
  }
}

</mosaic_0001>

<llo_original>
// kernel: conv_block_forward.6
$region0: #{conv_block_forward.6}
  #allocation0 [shape = 'u32[]', space=smem, size = 0x4, offset = 0x4, fixed_abs, tag = 'smem constant byte address 0x4 - core index']
  #allocation1 [shape = 'u32[144,128]{1,0:T(1,128)}', space=vmem, size = 0x12000, scoped, tag = 'internal scratch']
  %s0 = inlined_call_operand.vmem [shape: bf16[2,8,2,8,8], index: 0, kind: input, shape index: {}]
  %s1 = inlined_call_operand.vmem [shape: bf16[4,16], index: 1, kind: input, shape index: {}]
  %s2 = inlined_call_operand.vmem [shape: f32[1,16], index: 2, kind: input, shape index: {}]
  %s3 = inlined_call_operand.vmem [shape: bf16[2,8,8,16], index: 3, kind: output, shape index: {}]
  %s4 = sld [smem:[#allocation0]]
  $region86: #{conv_block_forward.6} parent=0
    _
  %s6 = ssub.s32 1, %s4
  %s7 = scalar_select 0, %s6, %s4
  $region1: #{conv_block_forward.6} parent=0
    #allocation2 [shape = 'u8[32768]{0}', space=vmem, size = 0x8000, scoped, tag = 'input window, operand 0']
    loop: start=0, step=1, limit=4
    $region2: #{conv_block_forward.6} parent=1 // loop_pre_header
      _
    $region3: #{conv_block_forward.6} parent=1 // loop_header
      %s9 = sphi 0, %s13
      %p10 = scmp.ge.s32.totalorder %s9, 4
      %s16 = sphi 0, %s28
      %s17 = sphi 0, %s24
      %s18 = sphi 0, %s16
      %s19 = sphi 0, %s17
      %s20 = sphi 0, %s18
      %s21 = sphi 0, %s19
      %s33 = sphi 0, %s35
      %s36 = sphi 0, %s33
      %s37 = sphi 0, %s36
      %s53 = sphi 0, %s37
      %s57 = sphi 0, %s57
      %s59 = sphi 0, %s57
      %s60 = sphi 0, %s59
      %s74 = sphi 0, %s60
      %s78 = sphi 0, %s78
      %s80 = sphi 0, %s78
      %s81 = sphi 0, %s80
      %s95 = sphi 0, %s81
      %s103 = sphi 0, %s105
      %s106 = sphi 0, %s103
      %s107 = sphi 0, %s106
      %s123 = sphi 0, %s107
    $region4: #{conv_block_forward.6} parent=1 // loop_header_branch
      %12 = sbr.rel (%p10) target = $region8
    $region5: #{conv_block_forward.6} parent=1 // loop_body
      %s14 = ssub.s32 %s9, 1
      %s15 = ssub.s32 %s9, 2
      %s22 = sadd.s32 1, %s17
      %p23 = scmp.ge.s32.totalorder %s22, 1
      %s24 = scalar_select %p23, 0, %s22
      %s25 = sadd.s32 1, %s16
      %s26 = scalar_select %p23, %s25, %s16
      %p27 = scmp.ge.s32.totalorder %s26, 2
      %s28 = scalar_select %p27, 0, %s26
      %s29 = ssub.s32 %s16, %s28
      %s30 = ssub.s32 %s17, %s24
      %s31 = sor.u32 %s29, %s30
      %p32 = scmp.eq.s32.totalorder %s31, 0
      %s34 = sadd.s32 %s33, 1
      %s35 = scalar_select %p32, %s33, %s34
      %p38 = pneg %p32
      %p39 = scmp.eq.s32.totalorder %s9, 1
      %p40 = por %p38, %p39
      %p41 = scmp.ne.s32.totalorder %s33, %s36
      %p42 = scmp.eq.s32.totalorder %s9, 0
      %p43 = por %p41, %p42
      %p44 = scmp.ne.s32.totalorder %s33, %s36
      %p45 = scmp.eq.s32.totalorder %s14, 1
      %p46 = por %p44, %p45
      %p47 = scmp.ne.s32.totalorder %s36, %s37
      %p48 = scmp.eq.s32.totalorder %s14, 0
      %p49 = por %p47, %p48
      %p50 = scmp.ne.s32.totalorder %s36, %s37
      %p51 = scmp.eq.s32.totalorder %s15, 1
      %p52 = por %p50, %p51
      %p54 = scmp.ne.s32.totalorder %s37, %s53
      %p55 = scmp.eq.s32.totalorder %s15, 0
      %p56 = por %p54, %p55
      %s58 = sadd.s32 %s57, 1
      %p61 = scmp.eq.s32.totalorder %s9, 1
      %p62 = scmp.ne.s32.totalorder %s57, %s59
      %p63 = scmp.eq.s32.totalorder %s9, 0
      %p64 = por %p62, %p63
      %p65 = scmp.ne.s32.totalorder %s57, %s59
      %p66 = scmp.eq.s32.totalorder %s14, 1
      %p67 = por %p65, %p66
      %p68 = scmp.ne.s32.totalorder %s59, %s60
      %p69 = scmp.eq.s32.totalorder %s14, 0
      %p70 = por %p68, %p69
      %p71 = scmp.ne.s32.totalorder %s59, %s60
      %p72 = scmp.eq.s32.totalorder %s15, 1
      %p73 = por %p71, %p72
      %p75 = scmp.ne.s32.totalorder %s60, %s74
      %p76 = scmp.eq.s32.totalorder %s15, 0
      %p77 = por %p75, %p76
      %s79 = sadd.s32 %s78, 1
      %p82 = scmp.eq.s32.totalorder %s9, 1
      %p83 = scmp.ne.s32.totalorder %s78, %s80
      %p84 = scmp.eq.s32.totalorder %s9, 0
      %p85 = por %p83, %p84
      %p86 = scmp.ne.s32.totalorder %s78, %s80
      %p87 = scmp.eq.s32.totalorder %s14, 1
      %p88 = por %p86, %p87
      %p89 = scmp.ne.s32.totalorder %s80, %s81
      %p90 = scmp.eq.s32.totalorder %s14, 0
      %p91 = por %p89, %p90
      %p92 = scmp.ne.s32.totalorder %s80, %s81
      %p93 = scmp.eq.s32.totalorder %s15, 1
      %p94 = por %p92, %p93
      %p96 = scmp.ne.s32.totalorder %s81, %s95
      %p97 = scmp.eq.s32.totalorder %s15, 0
      %p98 = por %p96, %p97
      %s99 = ssub.s32 %s16, %s28
      %s100 = ssub.s32 %s17, %s24
      %s101 = sor.u32 %s99, %s100
      %p102 = scmp.eq.s32.totalorder %s101, 0
      %s104 = sadd.s32 %s103, 1
      %s105 = scalar_select %p102, %s103, %s104
      %p108 = pneg %p102
      %p109 = scmp.eq.s32.totalorder %s9, 1
      %p110 = por %p108, %p109
      %p111 = scmp.ne.s32.totalorder %s103, %s106
      %p112 = scmp.eq.s32.totalorder %s9, 0
      %p113 = por %p111, %p112
      %p114 = scmp.ne.s32.totalorder %s103, %s106
      %p115 = scmp.eq.s32.totalorder %s14, 1
      %p116 = por %p114, %p115
      %p117 = scmp.ne.s32.totalorder %s106, %s107
      %p118 = scmp.eq.s32.totalorder %s14, 0
      %p119 = por %p117, %p118
      %p120 = scmp.ne.s32.totalorder %s106, %s107
      %p121 = scmp.eq.s32.totalorder %s15, 1
      %p122 = por %p120, %p121
      %p124 = scmp.ne.s32.totalorder %s107, %s123
      %p125 = scmp.eq.s32.totalorder %s15, 0
      %p126 = por %p124, %p125
      %p127 = scmp.le.s32.totalorder 1, %s9
      %p128 = scmp.lt.s32.totalorder %s9, 3
      %p129 = pnand %p127, %p128
      %p130 = pneg %p129
      // Predicated region
      $region9: #{conv_block_forward.6} parent=5 // pred_check
        _
      $region10: #{conv_block_forward.6} parent=5 // pred_check_branch
        %132 = sbr.rel (%p129) target = $region12
      $region11: #{conv_block_forward.6} parent=5 // pred_region
        %s133 = ssub.s32 %s9, 1
        // Predicated region
        $region13: #{conv_block_forward.6} parent=11 // pred_check
          %p134 = pneg %p70
        $region14: #{conv_block_forward.6} parent=11 // pred_check_branch
          %136 = sbr.rel (%p134) target = $region16
        $region15: #{conv_block_forward.6} parent=11 // pred_region
          _
        $region16: #{conv_block_forward.6} parent=11 // pred_fallthru
          _
        // Predicated region
        $region17: #{conv_block_forward.6} parent=11 // pred_check
          %p137 = pneg %p91
        $region18: #{conv_block_forward.6} parent=11 // pred_check_branch
          %139 = sbr.rel (%p137) target = $region20
        $region19: #{conv_block_forward.6} parent=11 // pred_region
          _
        $region20: #{conv_block_forward.6} parent=11 // pred_fallthru
          _
      $region12: #{conv_block_forward.6} parent=5 // pred_fallthru
        _
      %p140 = scmp.lt.s32.totalorder %s9, 2
      // Predicated region
      $region21: #{conv_block_forward.6} parent=5 // pred_check
        %p141 = pneg %p140
      $region22: #{conv_block_forward.6} parent=5 // pred_check_branch
        %143 = sbr.rel (%p141) target = $region24
      $region23: #{conv_block_forward.6} parent=5 // pred_region
        // Predicated region
        $region25: #{conv_block_forward.6} parent=23 // pred_check
          %p144 = pneg %p43
        $region26: #{conv_block_forward.6} parent=23 // pred_check_branch
          %146 = sbr.rel (%p144) target = $region28
        $region27: #{conv_block_forward.6} parent=23 // pred_region
          %s147 = sand.u32 %s33, 1
          %s148 = sand.u32 %s33, 1
          %s149 = smul.addr %s148, 32
          %s150 = scalar_lea.vmem [#allocation2], %s149
          %s151 = smul.u32 8, %s17
          %s152 = smul.addr %s151, 2
          %s153 = smul.addr %s16, 16
          %s154 = sadd.s32 %s152, %s153
          %s155 = smul.addr %s154, 4
          %s156 = scalar_lea.vmem %s0, %s155
          // Predicated region
          $region29: #{conv_block_forward.6} parent=27 // pred_check
            _
          $region30: #{conv_block_forward.6} parent=27 // pred_check_branch
            %158 = sbr.rel (0) target = $region32
          $region31: #{conv_block_forward.6} parent=27 // pred_region
            // Predicated region
            $region33: #{conv_block_forward.6} parent=31 // pred_check
              _
            $region34: #{conv_block_forward.6} parent=31 // pred_check_branch
              %160 = sbr.rel target = $region36
            $region35: #{conv_block_forward.6} parent=31 // pred_region
              // Predicated region
              $region48: #{conv_block_forward.6} parent=35 // pred_check
                _
              $region49: #{conv_block_forward.6} parent=35 // pred_check_branch
                %189 = sbr.rel (0) target = $region51
              $region50: #{conv_block_forward.6} parent=35 // pred_region
                loop: start=0, step=1, limit=1
                $region52: #{conv_block_forward.6} parent=50 // loop_pre_header
                  _
                $region53: #{conv_block_forward.6} parent=50 // loop_header
                  %s191 = sphi 0, %s195
                  %p192 = scmp.ge.s32.totalorder %s191, 1
                  %s196 = sphi %s156, %s156
                  %s197 = sphi %s150, %s150
                $region54: #{conv_block_forward.6} parent=50 // loop_header_branch
                  %194 = sbr.rel (%p192) target = $region58
                $region55: #{conv_block_forward.6} parent=50 // loop_body
                  _
                $region56: #{conv_block_forward.6} parent=50 // loop_footer
                  %s195 = sadd.s32 1, %s191
                $region57: #{conv_block_forward.6} parent=50 // loop_footer_branch
                  %190 = sbr.rel target = $region53
                $region58: #{conv_block_forward.6} parent=50 // loop_exit
                  _
                loop: start=0, step=1, limit=1
                $region59: #{conv_block_forward.6} parent=50 // loop_pre_header
                  _
                $region60: #{conv_block_forward.6} parent=50 // loop_header
                  %s200 = sphi 0, %s204
                  %p201 = scmp.ge.s32.totalorder %s200, 1
                  %s205 = sphi %s156, %s156
                  %s206 = sphi %s150, %s150
                $region61: #{conv_block_forward.6} parent=50 // loop_header_branch
                  %203 = sbr.rel (%p201) target = $region65
                $region62: #{conv_block_forward.6} parent=50 // loop_body
                  %v207 = vld [vmem:[%s205] sm:$0xf]
                  %208 = vst [vmem:[%s206] sm:$0xf] %v207
                  %v209 = vld [vmem:[%s205 + $0x8] sm:$0xf]
                  %210 = vst [vmem:[%s206 + $0x4] sm:$0xf] %v209
                  %v211 = vld [vmem:[%s205 + $0x10] sm:$0xf]
                  %212 = vst [vmem:[%s206 + $0x8] sm:$0xf] %v211
                  %v213 = vld [vmem:[%s205 + $0x18] sm:$0xf]
                  %214 = vst [vmem:[%s206 + $0xc] sm:$0xf] %v213
                  %v215 = vld [vmem:[%s205 + $0x20] sm:$0xf]
                  %216 = vst [vmem:[%s206 + $0x10] sm:$0xf] %v215
                  %v217 = vld [vmem:[%s205 + $0x28] sm:$0xf]
                  %218 = vst [vmem:[%s206 + $0x14] sm:$0xf] %v217
                  %v219 = vld [vmem:[%s205 + $0x30] sm:$0xf]
                  %220 = vst [vmem:[%s206 + $0x18] sm:$0xf] %v219
                  %v221 = vld [vmem:[%s205 + $0x38] sm:$0xf]
                  %222 = vst [vmem:[%s206 + $0x1c] sm:$0xf] %v221
                $region63: #{conv_block_forward.6} parent=50 // loop_footer
                  %s204 = sadd.s32 1, %s200
                $region64: #{conv_block_forward.6} parent=50 // loop_footer_branch
                  %199 = sbr.rel target = $region60
                $region65: #{conv_block_forward.6} parent=50 // loop_exit
                  _
              $region51: #{conv_block_forward.6} parent=35 // pred_fallthru
                _
            $region36: #{conv_block_forward.6} parent=31 // pred_fallthru
              _
            // Predicated region
            $region37: #{conv_block_forward.6} parent=31 // pred_check
              _
            $region38: #{conv_block_forward.6} parent=31 // pred_check_branch
              %162 = sbr.rel (0) target = $region40
            $region39: #{conv_block_forward.6} parent=31 // pred_region
              loop: start=0, step=1, limit=1
              $region41: #{conv_block_forward.6} parent=39 // loop_pre_header
                _
              $region42: #{conv_block_forward.6} parent=39 // loop_header
                %s165 = sphi 0, %s169
                %p166 = scmp.ge.s32.totalorder %s165, 1
                %s170 = sphi %s156, %s156
                %s171 = sphi %s150, %s150
              $region43: #{conv_block_forward.6} parent=39 // loop_header_branch
                %168 = sbr.rel (%p166) target = $region47
              $region44: #{conv_block_forward.6} parent=39 // loop_body
                %v172 = vld [vmem:[%s170] sm:$0xf]
                %173 = vst [vmem:[%s171] sm:$0xf] %v172
                %v174 = vld [vmem:[%s170 + $0x8] sm:$0xf]
                %175 = vst [vmem:[%s171 + $0x4] sm:$0xf] %v174
                %v176 = vld [vmem:[%s170 + $0x10] sm:$0xf]
                %177 = vst [vmem:[%s171 + $0x8] sm:$0xf] %v176
                %v178 = vld [vmem:[%s170 + $0x18] sm:$0xf]
                %179 = vst [vmem:[%s171 + $0xc] sm:$0xf] %v178
                %v180 = vld [vmem:[%s170 + $0x20] sm:$0xf]
                %181 = vst [vmem:[%s171 + $0x10] sm:$0xf] %v180
                %v182 = vld [vmem:[%s170 + $0x28] sm:$0xf]
                %183 = vst [vmem:[%s171 + $0x14] sm:$0xf] %v182
                %v184 = vld [vmem:[%s170 + $0x30] sm:$0xf]
                %185 = vst [vmem:[%s171 + $0x18] sm:$0xf] %v184
                %v186 = vld [vmem:[%s170 + $0x38] sm:$0xf]
                %187 = vst [vmem:[%s171 + $0x1c] sm:$0xf] %v186
              $region45: #{conv_block_forward.6} parent=39 // loop_footer
                %s169 = sadd.s32 1, %s165
              $region46: #{conv_block_forward.6} parent=39 // loop_footer_branch
                %164 = sbr.rel target = $region42
              $region47: #{conv_block_forward.6} parent=39 // loop_exit
                _
            $region40: #{conv_block_forward.6} parent=31 // pred_fallthru
              _
          $region32: #{conv_block_forward.6} parent=27 // pred_fallthru
            _
          %223 = vnop
        $region28: #{conv_block_forward.6} parent=23 // pred_fallthru
          _
      $region24: #{conv_block_forward.6} parent=5 // pred_fallthru
        _
      %p224 = scmp.le.s32.totalorder 1, %s9
      %p225 = scmp.lt.s32.totalorder %s9, 3
      %p226 = pnand %p224, %p225
      %p227 = pneg %p226
      // Predicated region
      $region66: #{conv_block_forward.6} parent=5 // pred_check
        _
      $region67: #{conv_block_forward.6} parent=5 // pred_check_branch
        %229 = sbr.rel (%p226) target = $region69
      $region68: #{conv_block_forward.6} parent=5 // pred_region
        %s230 = ssub.s32 %s9, 1
        %s231 = sand.u32 %s36, 1
        %s232 = sand.u32 %s36, 1
        %s233 = smul.addr %s232, 32
        %s234 = scalar_lea.vmem [#allocation2], %s233
        // Predicated region
        $region70: #{conv_block_forward.6} parent=68 // pred_check
          %p235 = pneg %p49
        $region71: #{conv_block_forward.6} parent=68 // pred_check_branch
          %237 = sbr.rel (%p235) target = $region73
        $region72: #{conv_block_forward.6} parent=68 // pred_region
          _
        $region73: #{conv_block_forward.6} parent=68 // pred_fallthru
          _
        %s238 = sand.u32 %s36, 1
        %s239 = sand.u32 %s36, 1
        %s240 = smul.addr %s239, 32
        %s241 = scalar_lea.vmem [#allocation2], %s240
        %p242 = pneg %p49
        %p243 = pneg %p46
        %p244 = pneg %p70
        %p245 = pneg %p67
        %p246 = pneg %p91
        %p247 = pneg %p88
        %p248 = pneg %p119
        %p249 = pneg %p116
        %s250 = smul.u32 8, %s19
        %p251 = scmp.lt.s32.totalorder %s18, 1
        %s252 = scalar_select %p251, %s18, 1
        %p253 = scmp.lt.s32.totalorder %s250, 7
        %s254 = scalar_select %p253, %s250, 7
        %s255 = smul.addr %s252, 8
        %s256 = sadd.s32 %s254, %s255
        %s257 = smul.addr %s256, 4
        %s258 = scalar_lea.vmem %s3, %s257
        %s259 = smul.u32 8, %s19
        %s260 = smul.u32 8, %s19
        %p261 = scmp.lt.s32.totalorder %s18, 1
        %s262 = scalar_select %p261, %s18, 1
        %p263 = scmp.lt.s32.totalorder %s260, 7
        %s264 = scalar_select %p263, %s260, 7
        %s265 = smul.addr %s262, 8
        %s266 = sadd.s32 %s264, %s265
        %s267 = smul.addr %s266, 4
        %s268 = scalar_lea.vmem %s3, %s267
        %s269 = smul.u32 8, %s19
        %v271 = vld [vmem:[%s234] sm:$0xf]
        %v272 = vld [vmem:[%s234 + $0x4] sm:$0xf]
        %v273 = vld [vmem:[%s234 + $0x8] sm:$0xf]
        %v274 = vld [vmem:[%s234 + $0xc] sm:$0xf]
        %v275 = vld [vmem:[%s234 + $0x10] sm:$0xf]
        %v276 = vld [vmem:[%s234 + $0x14] sm:$0xf]
        %v277 = vld [vmem:[%s234 + $0x18] sm:$0xf]
        %v278 = vld [vmem:[%s234 + $0x1c] sm:$0xf]
        %v279 = vld [vmem:[%s1] sm:$0x3]
        %v280 = vld [vmem:[%s2] sm:$0x1]
        %v282 = vlaneseq
        %v283 = vshrl.u32 %v282, 7
        %v284 = vsub.s32 0, %v283
        %v285 = vrot.slane %v280, %v284
        %v295 = vunpack.c.l.b16 %v271
        %v296 = vunpack.c.l.b16 %v272
        %v297 = vunpack.c.l.b16 %v273
        %v298 = vunpack.c.l.b16 %v274
        %v299 = vunpack.c.l.b16 %v275
        %v300 = vunpack.c.l.b16 %v276
        %v301 = vunpack.c.l.b16 %v277
        %v302 = vunpack.c.l.b16 %v278
        %v303 = vpack.c.b16 %v296, %v295
        %v304 = vpack.c.b16 %v298, %v297
        %v305 = vpack.c.b16 %v300, %v299
        %v306 = vpack.c.b16 %v302, %v301
        %vm307 = vcmask 31744
        %v309 = vsel %vm307, %v303, 0
        %v312 = vsel %vm307, %v304, 0
        %v315 = vsel %vm307, %v305, 0
        %v318 = vsel %vm307, %v306, 0
        %vm320 = vcmask 1041408
        %v322 = vsel %vm320, %v279, 0
        %324 = vmatprep.subr.bf16.mxu0 0
        %325 = vmatpush1.bf16.msra.mxu0 %v322
        %326 = vmatprep.subr.bf16.mxu0 0
        %327 = vmatpush1.bf16.msra.mxu0 0
        %328 = vmatprep.subr.bf16.mxu0 0
        %329 = vmatpush1.bf16.msra.mxu0 0
        %330 = vmatprep.subr.bf16.mxu0 0
        %331 = vmatpush1.bf16.msra.mxu0 0
        %332 = vmatprep.subr.bf16.mxu0 0
        %333 = vmatpush1.bf16.msra.mxu0 0
        %334 = vmatprep.subr.bf16.mxu0 0
        %335 = vmatpush1.bf16.msra.mxu0 0
        %336 = vmatprep.subr.bf16.mxu0 0
        %337 = vmatpush1.bf16.msra.mxu0 0
        %338 = vmatprep.subr.bf16.mxu0 0
        %339 = vmatpush1.bf16.msra.mxu0 0
        %340 = vmatprep.subr.bf16.mxu0 0
        %341 = vmatpush1.bf16.msra.mxu0 0
        %342 = vmatprep.subr.bf16.mxu0 0
        %343 = vmatpush1.bf16.msra.mxu0 0
        %344 = vmatprep.subr.bf16.mxu0 0
        %345 = vmatpush1.bf16.msra.mxu0 0
        %346 = vmatprep.subr.bf16.mxu0 0
        %347 = vmatpush1.bf16.msra.mxu0 0
        %348 = vmatprep.subr.bf16.mxu0 0
        %349 = vmatpush1.bf16.msra.mxu0 0
        %350 = vmatprep.subr.bf16.mxu0 0
        %351 = vmatpush1.bf16.msra.mxu0 0
        %352 = vmatprep.subr.bf16.mxu0 0
        %353 = vmatpush1.bf16.msra.mxu0 0
        %354 = vmatprep.subr.bf16.mxu0 0
        %355 = vmatpush1.bf16.msra.mxu0 0
        %356 = vmatprep.mubr.bf16.mxu0 0
        %357 = vmatmul.mubr.bf16.gmra.mrb[0].mxu0 %v309
        %v358 = vpop.f32.mrb[0].mxu0
        %v359 = vadd.f32 %v285, %v358
        %v360 = vpop.f32.mrb[0].mxu0
        %v361 = vpop.f32.mrb[0].mxu0
        %v362 = vadd.f32 %v285, %v361
        %v363 = vpop.f32.mrb[0].mxu0
        %364 = vmatprep.mubr.bf16.mxu0 0
        %365 = vmatmul.mubr.bf16.gmra.mrb[0].mxu0 %v312
        %v366 = vpop.f32.mrb[0].mxu0
        %v367 = vadd.f32 %v285, %v366
        %v368 = vpop.f32.mrb[0].mxu0
        %v369 = vpop.f32.mrb[0].mxu0
        %v370 = vadd.f32 %v285, %v369
        %v371 = vpop.f32.mrb[0].mxu0
        %372 = vmatprep.mubr.bf16.mxu0 0
        %373 = vmatmul.mubr.bf16.gmra.mrb[0].mxu0 %v315
        %v374 = vpop.f32.mrb[0].mxu0
        %v375 = vadd.f32 %v285, %v374
        %v376 = vpop.f32.mrb[0].mxu0
        %v377 = vpop.f32.mrb[0].mxu0
        %v378 = vadd.f32 %v285, %v377
        %v379 = vpop.f32.mrb[0].mxu0
        %380 = vmatprep.mubr.bf16.mxu0 0
        %381 = vmatmul.mubr.bf16.gmra.mrb[0].mxu0 %v318
        %v382 = vpop.f32.mrb[0].mxu0
        %v383 = vadd.f32 %v285, %v382
        %v384 = vpop.f32.mrb[0].mxu0
        %v385 = vpop.f32.mrb[0].mxu0
        %v386 = vadd.f32 %v285, %v385
        %v387 = vpop.f32.mrb[0].mxu0
        %388 = vdwg.mxu0
        %v389 = vpack.c.bf16 %v359, %v359
        %v390 = vpack.c.bf16 %v362, %v362
        %v391 = vpack.c.bf16 %v367, %v367
        %v392 = vpack.c.bf16 %v370, %v370
        %v393 = vpack.c.bf16 %v375, %v375
        %v394 = vpack.c.bf16 %v378, %v378
        %v395 = vpack.c.bf16 %v383, %v383
        %v396 = vpack.c.bf16 %v386, %v386
        %vm397 = vcmask 125952
        %398 = vst.msk [vmem:[%s268] sm:$0xf] %vm397, %v389
        %399 = vst.msk [vmem:[%s268 + $0x4] sm:$0xf] %vm397, %v390
        %400 = vst.msk [vmem:[%s268 + $0x8] sm:$0xf] %vm397, %v391
        %401 = vst.msk [vmem:[%s268 + $0xc] sm:$0xf] %vm397, %v392
        %402 = vst.msk [vmem:[%s268 + $0x10] sm:$0xf] %vm397, %v393
        %403 = vst.msk [vmem:[%s268 + $0x14] sm:$0xf] %vm397, %v394
        %404 = vst.msk [vmem:[%s268 + $0x18] sm:$0xf] %vm397, %v395
        %405 = vst.msk [vmem:[%s268 + $0x1c] sm:$0xf] %vm397, %v396
        %s406 = smul.u32 8, %s19
        %p407 = scmp.lt.s32.totalorder %s18, 1
        %s408 = scalar_select %p407, %s18, 1
        %p409 = scmp.lt.s32.totalorder %s406, 7
        %s410 = scalar_select %p409, %s406, 7
        %s411 = smul.addr %s408, 8
        %s412 = sadd.s32 %s410, %s411
        %s413 = smul.addr %s412, 4
        %s414 = scalar_lea.vmem %s3, %s413
        // Predicated region
        $region74: #{conv_block_forward.6} parent=68 // pred_check
          %p415 = pneg %p116
        $region75: #{conv_block_forward.6} parent=68 // pred_check_branch
          %417 = sbr.rel (%p415) target = $region77
        $region76: #{conv_block_forward.6} parent=68 // pred_region
          %s418 = smul.u32 8, %s19
        $region77: #{conv_block_forward.6} parent=68 // pred_fallthru
          _
      $region69: #{conv_block_forward.6} parent=5 // pred_fallthru
        _
      %p419 = scmp.le.s32.totalorder 2, %s9
      // Predicated region
      $region78: #{conv_block_forward.6} parent=5 // pred_check
        %p420 = pneg %p419
      $region79: #{conv_block_forward.6} parent=5 // pred_check_branch
        %422 = sbr.rel (%p420) target = $region81
      $region80: #{conv_block_forward.6} parent=5 // pred_region
        %s423 = ssub.s32 %s9, 2
        // Predicated region
        $region82: #{conv_block_forward.6} parent=80 // pred_check
          %p424 = pneg %p122
        $region83: #{conv_block_forward.6} parent=80 // pred_check_branch
          %426 = sbr.rel (%p424) target = $region85
        $region84: #{conv_block_forward.6} parent=80 // pred_region
          %s427 = smul.u32 8, %s21
          %p428 = scmp.lt.s32.totalorder %s20, 1
          %s429 = scalar_select %p428, %s20, 1
          %p430 = scmp.lt.s32.totalorder %s427, 7
          %s431 = scalar_select %p430, %s427, 7
          %s432 = smul.addr %s429, 8
          %s433 = sadd.s32 %s431, %s432
          %s434 = smul.addr %s433, 4
          %s435 = scalar_lea.vmem %s3, %s434
        $region85: #{conv_block_forward.6} parent=80 // pred_fallthru
          _
      $region81: #{conv_block_forward.6} parent=5 // pred_fallthru
        _
    $region6: #{conv_block_forward.6} parent=1 // loop_footer
      %s13 = sadd.s32 1, %s9
    $region7: #{conv_block_forward.6} parent=1 // loop_footer_branch
      %8 = sbr.rel target = $region3
    $region8: #{conv_block_forward.6} parent=1 // loop_exit
      _

// kernel: conv_block_forward.4
$region0: #{conv_block_forward.4}
  #allocation0 [shape = 'u32[]', space=smem, size = 0x4, offset = 0x4, fixed_abs, tag = 'smem constant byte address 0x4 - core index']
  #allocation1 [shape = 'u32[144,128]{1,0:T(1,128)}', space=vmem, size = 0x12000, scoped, tag = 'internal scratch']
  #allocation2 [shape = 'f32[256,4]{1,0:T(8,128)}', space=vmem, size = 0x20000, scoped, tag = 'scratch operand']
  %s0 = inlined_call_operand.vmem [shape: bf16[512,4], index: 0, kind: input, shape index: {}]
  %s1 = inlined_call_operand.vmem [shape: bf16[4,4], index: 1, kind: input, shape index: {}]
  %s2 = inlined_call_operand.vmem [shape: f32[1,4], index: 2, kind: input, shape index: {}]
  %s3 = inlined_call_operand.vmem [shape: bf16[512,4], index: 3, kind: output, shape index: {}]
  %s4 = sld [smem:[#allocation0]]
  $region53: #{conv_block_forward.4} parent=0
    _
  %s6 = ssub.s32 1, %s4
  %s7 = scalar_select 0, %s6, %s4
  loop: start=0, step=1, limit=4
  $region2: #{conv_block_forward.4} parent=0 // loop_pre_header
    _
  $region3: #{conv_block_forward.4} parent=0 // loop_header
    %s9 = sphi 0, %s13
    %p10 = scmp.ge.s32.totalorder %s9, 4
    %s16 = sphi 0, %s35
    %s17 = sphi 0, %s31
    %s18 = sphi 0, %s27
    %s19 = sphi 0, %s16
    %s20 = sphi 0, %s17
    %s21 = sphi 0, %s18
    %s22 = sphi 0, %s19
    %s23 = sphi 0, %s20
    %s24 = sphi 0, %s21
    %s40 = sphi 0, %s42
    %s43 = sphi 0, %s40
    %s44 = sphi 0, %s43
    %s60 = sphi 0, %s44
    %s68 = sphi 0, %s70
    %s71 = sphi 0, %s68
    %s72 = sphi 0, %s71
    %s88 = sphi 0, %s72
    %s94 = sphi 0, %s96
    %s97 = sphi 0, %s94
    %s98 = sphi 0, %s97
    %s114 = sphi 0, %s98
    %s122 = sphi 0, %s124
    %s125 = sphi 0, %s122
    %s126 = sphi 0, %s125
    %s142 = sphi 0, %s126
  $region4: #{conv_block_forward.4} parent=0 // loop_header_branch
    %12 = sbr.rel (%p10) target = $region8
  $region5: #{conv_block_forward.4} parent=0 // loop_body
    %s14 = ssub.s32 %s9, 1
    %s15 = ssub.s32 %s9, 2
    %s25 = sadd.s32 1, %s18
    %p26 = scmp.ge.s32.totalorder %s25, 1
    %s27 = scalar_select %p26, 0, %s25
    %s28 = sadd.s32 1, %s17
    %s29 = scalar_select %p26, %s28, %s17
    %p30 = scmp.ge.s32.totalorder %s29, 1
    %s31 = scalar_select %p30, 0, %s29
    %s32 = sadd.s32 1, %s16
    %s33 = scalar_select %p30, %s32, %s16
    %p34 = scmp.ge.s32.totalorder %s33, 2
    %s35 = scalar_select %p34, 0, %s33
    %s36 = ssub.s32 %s16, %s35
    %s37 = ssub.s32 %s18, %s27
    %s38 = sor.u32 %s36, %s37
    %p39 = scmp.eq.s32.totalorder %s38, 0
    %s41 = sadd.s32 %s40, 1
    %s42 = scalar_select %p39, %s40, %s41
    %p45 = pneg %p39
    %p46 = scmp.eq.s32.totalorder %s9, 1
    %p47 = por %p45, %p46
    %p48 = scmp.ne.s32.totalorder %s40, %s43
    %p49 = scmp.eq.s32.totalorder %s9, 0
    %p50 = por %p48, %p49
    %p51 = scmp.ne.s32.totalorder %s40, %s43
    %p52 = scmp.eq.s32.totalorder %s14, 1
    %p53 = por %p51, %p52
    %p54 = scmp.ne.s32.totalorder %s43, %s44
    %p55 = scmp.eq.s32.totalorder %s14, 0
    %p56 = por %p54, %p55
    %p57 = scmp.ne.s32.totalorder %s43, %s44
    %p58 = scmp.eq.s32.totalorder %s15, 1
    %p59 = por %p57, %p58
    %p61 = scmp.ne.s32.totalorder %s44, %s60
    %p62 = scmp.eq.s32.totalorder %s15, 0
    %p63 = por %p61, %p62
    %s64 = ssub.s32 %s18, %s27
    %s65 = ssub.s32 %s17, %s31
    %s66 = sor.u32 %s64, %s65
    %p67 = scmp.eq.s32.totalorder %s66, 0
    %s69 = sadd.s32 %s68, 1
    %s70 = scalar_select %p67, %s68, %s69
    %p73 = pneg %p67
    %p74 = scmp.eq.s32.totalorder %s9, 1
    %p75 = por %p73, %p74
    %p76 = scmp.ne.s32.totalorder %s68, %s71
    %p77 = scmp.eq.s32.totalorder %s9, 0
    %p78 = por %p76, %p77
    %p79 = scmp.ne.s32.totalorder %s68, %s71
    %p80 = scmp.eq.s32.totalorder %s14, 1
    %p81 = por %p79, %p80
    %p82 = scmp.ne.s32.totalorder %s71, %s72
    %p83 = scmp.eq.s32.totalorder %s14, 0
    %p84 = por %p82, %p83
    %p85 = scmp.ne.s32.totalorder %s71, %s72
    %p86 = scmp.eq.s32.totalorder %s15, 1
    %p87 = por %p85, %p86
    %p89 = scmp.ne.s32.totalorder %s72, %s88
    %p90 = scmp.eq.s32.totalorder %s15, 0
    %p91 = por %p89, %p90
    %s92 = ssub.s32 %s17, %s31
    %p93 = scmp.eq.s32.totalorder %s92, 0
    %s95 = sadd.s32 %s94, 1
    %s96 = scalar_select %p93, %s94, %s95
    %p99 = pneg %p93
    %p100 = scmp.eq.s32.totalorder %s9, 1
    %p101 = por %p99, %p100
    %p102 = scmp.ne.s32.totalorder %s94, %s97
    %p103 = scmp.eq.s32.totalorder %s9, 0
    %p104 = por %p102, %p103
    %p105 = scmp.ne.s32.totalorder %s94, %s97
    %p106 = scmp.eq.s32.totalorder %s14, 1
    %p107 = por %p105, %p106
    %p108 = scmp.ne.s32.totalorder %s97, %s98
    %p109 = scmp.eq.s32.totalorder %s14, 0
    %p110 = por %p108, %p109
    %p111 = scmp.ne.s32.totalorder %s97, %s98
    %p112 = scmp.eq.s32.totalorder %s15, 1
    %p113 = por %p111, %p112
    %p115 = scmp.ne.s32.totalorder %s98, %s114
    %p116 = scmp.eq.s32.totalorder %s15, 0
    %p117 = por %p115, %p116
    %s118 = ssub.s32 %s16, %s35
    %s119 = ssub.s32 %s17, %s31
    %s120 = sor.u32 %s118, %s119
    %p121 = scmp.eq.s32.totalorder %s120, 0
    %s123 = sadd.s32 %s122, 1
    %s124 = scalar_select %p121, %s122, %s123
    %p127 = pneg %p121
    %p128 = scmp.eq.s32.totalorder %s9, 1
    %p129 = por %p127, %p128
    %p130 = scmp.ne.s32.totalorder %s122, %s125
    %p131 = scmp.eq.s32.totalorder %s9, 0
    %p132 = por %p130, %p131
    %p133 = scmp.ne.s32.totalorder %s122, %s125
    %p134 = scmp.eq.s32.totalorder %s14, 1
    %p135 = por %p133, %p134
    %p136 = scmp.ne.s32.totalorder %s125, %s126
    %p137 = scmp.eq.s32.totalorder %s14, 0
    %p138 = por %p136, %p137
    %p139 = scmp.ne.s32.totalorder %s125, %s126
    %p140 = scmp.eq.s32.totalorder %s15, 1
    %p141 = por %p139, %p140
    %p143 = scmp.ne.s32.totalorder %s126, %s142
    %p144 = scmp.eq.s32.totalorder %s15, 0
    %p145 = por %p143, %p144
    %p146 = scmp.le.s32.totalorder 1, %s9
    %p147 = scmp.lt.s32.totalorder %s9, 3
    %p148 = pnand %p146, %p147
    %p149 = pneg %p148
    // Predicated region
    $region9: #{conv_block_forward.4} parent=5 // pred_check
      _
    $region10: #{conv_block_forward.4} parent=5 // pred_check_branch
      %151 = sbr.rel (%p148) target = $region12
    $region11: #{conv_block_forward.4} parent=5 // pred_region
      %s152 = ssub.s32 %s9, 1
      // Predicated region
      $region13: #{conv_block_forward.4} parent=11 // pred_check
        %p153 = pneg %p84
      $region14: #{conv_block_forward.4} parent=11 // pred_check_branch
        %155 = sbr.rel (%p153) target = $region16
      $region15: #{conv_block_forward.4} parent=11 // pred_region
        %p156 = scmp.lt.s32.totalorder %s21, 0
        %s157 = scalar_select %p156, %s21, 0
        %p158 = scmp.lt.s32.totalorder %s20, 0
        %s159 = scalar_select %p158, %s20, 0
        %s160 = sadd.s32 %s159, %s157
        %s161 = smul.addr %s160, 2
        %s162 = scalar_lea.vmem %s1, %s161
      $region16: #{conv_block_forward.4} parent=11 // pred_fallthru
        _
      // Predicated region
      $region17: #{conv_block_forward.4} parent=11 // pred_check
        %p163 = pneg %p110
      $region18: #{conv_block_forward.4} parent=11 // pred_check_branch
        %165 = sbr.rel (%p163) target = $region20
      $region19: #{conv_block_forward.4} parent=11 // pred_region
        %p166 = scmp.lt.s32.totalorder %s20, 0
        %s167 = scalar_select %p166, %s20, 0
        %s168 = scalar_lea.vmem %s2, %s167
      $region20: #{conv_block_forward.4} parent=11 // pred_fallthru
        _
    $region12: #{conv_block_forward.4} parent=5 // pred_fallthru
      _
    %p169 = scmp.lt.s32.totalorder %s9, 2
    // Predicated region
    $region21: #{conv_block_forward.4} parent=5 // pred_check
      %p170 = pneg %p169
    $region22: #{conv_block_forward.4} parent=5 // pred_check_branch
      %172 = sbr.rel (%p170) target = $region24
    $region23: #{conv_block_forward.4} parent=5 // pred_region
      // Predicated region
      $region25: #{conv_block_forward.4} parent=23 // pred_check
        %p173 = pneg %p50
      $region26: #{conv_block_forward.4} parent=23 // pred_check_branch
        %175 = sbr.rel (%p173) target = $region28
      $region27: #{conv_block_forward.4} parent=23 // pred_region
        %s176 = smul.u32 32, %s16
        %p177 = scmp.lt.s32.totalorder %s176, 63
        %s178 = scalar_select %p177, %s176, 63
        %p179 = scmp.lt.s32.totalorder %s18, 0
        %s180 = scalar_select %p179, %s18, 0
        %s181 = sadd.s32 %s180, %s178
        %s182 = smul.addr %s181, 4
        %s183 = scalar_lea.vmem %s0, %s182
        %s184 = smul.u32 32, %s16
      $region28: #{conv_block_forward.4} parent=23 // pred_fallthru
        _
    $region24: #{conv_block_forward.4} parent=5 // pred_fallthru
      _
    %p185 = scmp.le.s32.totalorder 1, %s9
    %p186 = scmp.lt.s32.totalorder %s9, 3
    %p187 = pnand %p185, %p186
    %p188 = pneg %p187
    // Predicated region
    $region29: #{conv_block_forward.4} parent=5 // pred_check
      _
    $region30: #{conv_block_forward.4} parent=5 // pred_check_branch
      %190 = sbr.rel (%p187) target = $region32
    $region31: #{conv_block_forward.4} parent=5 // pred_region
      %s191 = ssub.s32 %s9, 1
      %s192 = smul.u32 32, %s19
      %p193 = scmp.lt.s32.totalorder %s192, 63
      %s194 = scalar_select %p193, %s192, 63
      %p195 = scmp.lt.s32.totalorder %s21, 0
      %s196 = scalar_select %p195, %s21, 0
      %s197 = sadd.s32 %s196, %s194
      %s198 = smul.addr %s197, 4
      %s199 = scalar_lea.vmem %s0, %s198
      %p200 = pneg %p56
      %p201 = pneg %p53
      %p202 = scmp.lt.s32.totalorder %s21, 0
      %s203 = scalar_select %p202, %s21, 0
      %p204 = scmp.lt.s32.totalorder %s20, 0
      %s205 = scalar_select %p204, %s20, 0
      %s206 = sadd.s32 %s205, %s203
      %s207 = smul.addr %s206, 2
      %s208 = scalar_lea.vmem %s1, %s207
      %p209 = pneg %p84
      %p210 = pneg %p81
      %p211 = scmp.lt.s32.totalorder %s20, 0
      %s212 = scalar_select %p211, %s20, 0
      %s213 = scalar_lea.vmem %s2, %s212
      %p214 = pneg %p110
      %p215 = pneg %p107
      %p216 = pneg %p138
      %p217 = pneg %p135
      %s218 = smul.u32 32, %s19
      %p219 = scmp.lt.s32.totalorder %s218, 63
      %s220 = scalar_select %p219, %s218, 63
      %p221 = scmp.lt.s32.totalorder %s20, 0
      %s222 = scalar_select %p221, %s20, 0
      %s223 = sadd.s32 %s222, %s220
      %s224 = smul.addr %s223, 4
      %s225 = scalar_lea.vmem %s3, %s224
      %s226 = smul.u32 32, %s19
      %p227 = scmp.lt.s32.totalorder %s226, 63
      %s228 = scalar_select %p227, %s226, 63
      %p229 = scmp.lt.s32.totalorder %s21, 0
      %s230 = scalar_select %p229, %s21, 0
      %s231 = sadd.s32 %s230, %s228
      %s232 = smul.addr %s231, 4
      %s233 = scalar_lea.vmem %s0, %s232
      %s234 = smul.u32 32, %s19
      %p235 = scmp.lt.s32.totalorder %s21, 0
      %s236 = scalar_select %p235, %s21, 0
      %p237 = scmp.lt.s32.totalorder %s20, 0
      %s238 = scalar_select %p237, %s20, 0
      %s239 = sadd.s32 %s238, %s236
      %s240 = smul.addr %s239, 2
      %s241 = scalar_lea.vmem %s1, %s240
      %p242 = scmp.lt.s32.totalorder %s20, 0
      %s243 = scalar_select %p242, %s20, 0
      %s244 = scalar_lea.vmem %s2, %s243
      %s245 = smul.u32 32, %s19
      %p246 = scmp.lt.s32.totalorder %s245, 63
      %s247 = scalar_select %p246, %s245, 63
      %p248 = scmp.lt.s32.totalorder %s20, 0
      %s249 = scalar_select %p248, %s20, 0
      %s250 = sadd.s32 %s249, %s247
      %s251 = smul.addr %s250, 4
      %s252 = scalar_lea.vmem %s3, %s251
      %s253 = smul.u32 32, %s19
      %p255 = scmp.eq.s32.totalorder %s21, 0
      // Predicated region
      $region33: #{conv_block_forward.4} parent=31 // pred_check
        %p256 = pneg %p255
      $region34: #{conv_block_forward.4} parent=31 // pred_check_branch
        %258 = sbr.rel (%p256) target = $region36
      $region35: #{conv_block_forward.4} parent=31 // pred_region
        %vm259 = vcmask 31744
        %260 = vst.msk [vmem:[#allocation2] sm:$0xff] %vm259, 0.0
        %261 = vst.msk [vmem:[#allocation2 + $0x8] sm:$0xff] %vm259, 0.0
        %262 = vst.msk [vmem:[#allocation2 + $0x10] sm:$0xff] %vm259, 0.0
        %263 = vst.msk [vmem:[#allocation2 + $0x18] sm:$0xff] %vm259, 0.0
        %264 = vst.msk [vmem:[#allocation2 + $0x20] sm:$0xff] %vm259, 0.0
        %265 = vst.msk [vmem:[#allocation2 + $0x28] sm:$0xff] %vm259, 0.0
        %266 = vst.msk [vmem:[#allocation2 + $0x30] sm:$0xff] %vm259, 0.0
        %267 = vst.msk [vmem:[#allocation2 + $0x38] sm:$0xff] %vm259, 0.0
        %268 = vst.msk [vmem:[#allocation2 + $0x40] sm:$0xff] %vm259, 0.0
        %269 = vst.msk [vmem:[#allocation2 + $0x48] sm:$0xff] %vm259, 0.0
        %270 = vst.msk [vmem:[#allocation2 + $0x50] sm:$0xff] %vm259, 0.0
        %271 = vst.msk [vmem:[#allocation2 + $0x58] sm:$0xff] %vm259, 0.0
        %272 = vst.msk [vmem:[#allocation2 + $0x60] sm:$0xff] %vm259, 0.0
        %273 = vst.msk [vmem:[#allocation2 + $0x68] sm:$0xff] %vm259, 0.0
        %274 = vst.msk [vmem:[#allocation2 + $0x70] sm:$0xff] %vm259, 0.0
        %275 = vst.msk [vmem:[#allocation2 + $0x78] sm:$0xff] %vm259, 0.0
        %276 = vst.msk [vmem:[#allocation2 + $0x80] sm:$0xff] %vm259, 0.0
        %277 = vst.msk [vmem:[#allocation2 + $0x88] sm:$0xff] %vm259, 0.0
        %278 = vst.msk [vmem:[#allocation2 + $0x90] sm:$0xff] %vm259, 0.0
        %279 = vst.msk [vmem:[#allocation2 + $0x98] sm:$0xff] %vm259, 0.0
        %280 = vst.msk [vmem:[#allocation2 + $0xa0] sm:$0xff] %vm259, 0.0
        %281 = vst.msk [vmem:[#allocation2 + $0xa8] sm:$0xff] %vm259, 0.0
        %282 = vst.msk [vmem:[#allocation2 + $0xb0] sm:$0xff] %vm259, 0.0
        %283 = vst.msk [vmem:[#allocation2 + $0xb8] sm:$0xff] %vm259, 0.0
        %284 = vst.msk [vmem:[#allocation2 + $0xc0] sm:$0xff] %vm259, 0.0
        %285 = vst.msk [vmem:[#allocation2 + $0xc8] sm:$0xff] %vm259, 0.0
        %286 = vst.msk [vmem:[#allocation2 + $0xd0] sm:$0xff] %vm259, 0.0
        %287 = vst.msk [vmem:[#allocation2 + $0xd8] sm:$0xff] %vm259, 0.0
        %288 = vst.msk [vmem:[#allocation2 + $0xe0] sm:$0xff] %vm259, 0.0
        %289 = vst.msk [vmem:[#allocation2 + $0xe8] sm:$0xff] %vm259, 0.0
        %290 = vst.msk [vmem:[#allocation2 + $0xf0] sm:$0xff] %vm259, 0.0
        %291 = vst.msk [vmem:[#allocation2 + $0xf8] sm:$0xff] %vm259, 0.0
      $region36: #{conv_block_forward.4} parent=31 // pred_fallthru
        _
      %v292 = vld [vmem:[#allocation2] sm:$0xff]
      %v293 = vld [vmem:[#allocation2 + $0x8] sm:$0xff]
      %v294 = vld [vmem:[#allocation2 + $0x10] sm:$0xff]
      %v295 = vld [vmem:[#allocation2 + $0x18] sm:$0xff]
      %v296 = vld [vmem:[#allocation2 + $0x20] sm:$0xff]
      %v297 = vld [vmem:[#allocation2 + $0x28] sm:$0xff]
      %v298 = vld [vmem:[#allocation2 + $0x30] sm:$0xff]
      %v299 = vld [vmem:[#allocation2 + $0x38] sm:$0xff]
      %v300 = vld [vmem:[#allocation2 + $0x40] sm:$0xff]
      %v301 = vld [vmem:[#allocation2 + $0x48] sm:$0xff]
      %v302 = vld [vmem:[#allocation2 + $0x50] sm:$0xff]
      %v303 = vld [vmem:[#allocation2 + $0x58] sm:$0xff]
      %v304 = vld [vmem:[#allocation2 + $0x60] sm:$0xff]
      %v305 = vld [vmem:[#allocation2 + $0x68] sm:$0xff]
      %v306 = vld [vmem:[#allocation2 + $0x70] sm:$0xff]
      %v307 = vld [vmem:[#allocation2 + $0x78] sm:$0xff]
      %v308 = vld [vmem:[#allocation2 + $0x80] sm:$0xff]
      %v309 = vld [vmem:[#allocation2 + $0x88] sm:$0xff]
      %v310 = vld [vmem:[#allocation2 + $0x90] sm:$0xff]
      %v311 = vld [vmem:[#allocation2 + $0x98] sm:$0xff]
      %v312 = vld [vmem:[#allocation2 + $0xa0] sm:$0xff]
      %v313 = vld [vmem:[#allocation2 + $0xa8] sm:$0xff]
      %v314 = vld [vmem:[#allocation2 + $0xb0] sm:$0xff]
      %v315 = vld [vmem:[#allocation2 + $0xb8] sm:$0xff]
      %v316 = vld [vmem:[#allocation2 + $0xc0] sm:$0xff]
      %v317 = vld [vmem:[#allocation2 + $0xc8] sm:$0xff]
      %v318 = vld [vmem:[#allocation2 + $0xd0] sm:$0xff]
      %v319 = vld [vmem:[#allocation2 + $0xd8] sm:$0xff]
      %v320 = vld [vmem:[#allocation2 + $0xe0] sm:$0xff]
      %v321 = vld [vmem:[#allocation2 + $0xe8] sm:$0xff]
      %v322 = vld [vmem:[#allocation2 + $0xf0] sm:$0xff]
      %v323 = vld [vmem:[#allocation2 + $0xf8] sm:$0xff]
      %v324 = vld [vmem:[%s233] sm:$0xf]
      %v325 = vld [vmem:[%s233 + $0x4] sm:$0xf]
      %v326 = vld [vmem:[%s233 + $0x8] sm:$0xf]
      %v327 = vld [vmem:[%s233 + $0xc] sm:$0xf]
      %v328 = vld [vmem:[%s233 + $0x10] sm:$0xf]
      %v329 = vld [vmem:[%s233 + $0x14] sm:$0xf]
      %v330 = vld [vmem:[%s233 + $0x18] sm:$0xf]
      %v331 = vld [vmem:[%s233 + $0x1c] sm:$0xf]
      %v332 = vld [vmem:[%s233 + $0x20] sm:$0xf]
      %v333 = vld [vmem:[%s233 + $0x24] sm:$0xf]
      %v334 = vld [vmem:[%s233 + $0x28] sm:$0xf]
      %v335 = vld [vmem:[%s233 + $0x2c] sm:$0xf]
      %v336 = vld [vmem:[%s233 + $0x30] sm:$0xf]
      %v337 = vld [vmem:[%s233 + $0x34] sm:$0xf]
      %v338 = vld [vmem:[%s233 + $0x38] sm:$0xf]
      %v339 = vld [vmem:[%s233 + $0x3c] sm:$0xf]
      %v340 = vld [vmem:[%s233 + $0x40] sm:$0xf]
      %v341 = vld [vmem:[%s233 + $0x44] sm:$0xf]
      %v342 = vld [vmem:[%s233 + $0x48] sm:$0xf]
      %v343 = vld [vmem:[%s233 + $0x4c] sm:$0xf]
      %v344 = vld [vmem:[%s233 + $0x50] sm:$0xf]
      %v345 = vld [vmem:[%s233 + $0x54] sm:$0xf]
      %v346 = vld [vmem:[%s233 + $0x58] sm:$0xf]
      %v347 = vld [vmem:[%s233 + $0x5c] sm:$0xf]
      %v348 = vld [vmem:[%s233 + $0x60] sm:$0xf]
      %v349 = vld [vmem:[%s233 + $0x64] sm:$0xf]
      %v350 = vld [vmem:[%s233 + $0x68] sm:$0xf]
      %v351 = vld [vmem:[%s233 + $0x6c] sm:$0xf]
      %v352 = vld [vmem:[%s233 + $0x70] sm:$0xf]
      %v353 = vld [vmem:[%s233 + $0x74] sm:$0xf]
      %v354 = vld [vmem:[%s233 + $0x78] sm:$0xf]
      %v355 = vld [vmem:[%s233 + $0x7c] sm:$0xf]
      %v356 = vld [vmem:[%s241] sm:$0x3]
      %v389 = vunpack.c.l.b16 %v324
      %v390 = vunpack.c.l.b16 %v325
      %v391 = vunpack.c.l.b16 %v326
      %v392 = vunpack.c.l.b16 %v327
      %v393 = vunpack.c.l.b16 %v328
      %v394 = vunpack.c.l.b16 %v329
      %v395 = vunpack.c.l.b16 %v330
      %v396 = vunpack.c.l.b16 %v331
      %v397 = vunpack.c.l.b16 %v332
      %v398 = vunpack.c.l.b16 %v333
      %v399 = vunpack.c.l.b16 %v334
      %v400 = vunpack.c.l.b16 %v335
      %v401 = vunpack.c.l.b16 %v336
      %v402 = vunpack.c.l.b16 %v337
      %v403 = vunpack.c.l.b16 %v338
      %v404 = vunpack.c.l.b16 %v339
      %v405 = vunpack.c.l.b16 %v340
      %v406 = vunpack.c.l.b16 %v341
      %v407 = vunpack.c.l.b16 %v342
      %v408 = vunpack.c.l.b16 %v343
      %v409 = vunpack.c.l.b16 %v344
      %v410 = vunpack.c.l.b16 %v345
      %v411 = vunpack.c.l.b16 %v346
      %v412 = vunpack.c.l.b16 %v347
      %v413 = vunpack.c.l.b16 %v348
      %v414 = vunpack.c.l.b16 %v349
      %v415 = vunpack.c.l.b16 %v350
      %v416 = vunpack.c.l.b16 %v351
      %v417 = vunpack.c.l.b16 %v352
      %v418 = vunpack.c.l.b16 %v353
      %v419 = vunpack.c.l.b16 %v354
      %v420 = vunpack.c.l.b16 %v355
      %v421 = vpack.c.b16 %v390, %v389
      %v422 = vpack.c.b16 %v392, %v391
      %v423 = vpack.c.b16 %v394, %v393
      %v424 = vpack.c.b16 %v396, %v395
      %v425 = vpack.c.b16 %v398, %v397
      %v426 = vpack.c.b16 %v400, %v399
      %v427 = vpack.c.b16 %v402, %v401
      %v428 = vpack.c.b16 %v404, %v403
      %v429 = vpack.c.b16 %v406, %v405
      %v430 = vpack.c.b16 %v408, %v407
      %v431 = vpack.c.b16 %v410, %v409
      %v432 = vpack.c.b16 %v412, %v411
      %v433 = vpack.c.b16 %v414, %v413
      %v434 = vpack.c.b16 %v416, %v415
      %v435 = vpack.c.b16 %v418, %v417
      %v436 = vpack.c.b16 %v420, %v419
      %vm437 = vcmask 31744
      %v439 = vsel %vm437, %v421, 0
      %v442 = vsel %vm437, %v422, 0
      %v445 = vsel %vm437, %v423, 0
      %v448 = vsel %vm437, %v424, 0
      %v451 = vsel %vm437, %v425, 0
      %v454 = vsel %vm437, %v426, 0
      %v457 = vsel %vm437, %v427, 0
      %v460 = vsel %vm437, %v428, 0
      %v463 = vsel %vm437, %v429, 0
      %v466 = vsel %vm437, %v430, 0
      %v469 = vsel %vm437, %v431, 0
      %v472 = vsel %vm437, %v432, 0
      %v475 = vsel %vm437, %v433, 0
      %v478 = vsel %vm437, %v434, 0
      %v481 = vsel %vm437, %v435, 0
      %v484 = vsel %vm437, %v436, 0
      %vm486 = vcmask 1041408
      %v488 = vsel %vm486, %v356, 0
      %490 = vmatprep.subr.bf16.mxu0 0
      %491 = vmatpush1.bf16.msra.mxu0 %v488
      %492 = vmatprep.subr.bf16.mxu0 0
      %493 = vmatpush1.bf16.msra.mxu0 0
      %494 = vmatprep.subr.bf16.mxu0 0
      %495 = vmatpush1.bf16.msra.mxu0 0
      %496 = vmatprep.subr.bf16.mxu0 0
      %497 = vmatpush1.bf16.msra.mxu0 0
      %498 = vmatprep.subr.bf16.mxu0 0
      %499 = vmatpush1.bf16.msra.mxu0 0
      %500 = vmatprep.subr.bf16.mxu0 0
      %501 = vmatpush1.bf16.msra.mxu0 0
      %502 = vmatprep.subr.bf16.mxu0 0
      %503 = vmatpush1.bf16.msra.mxu0 0
      %504 = vmatprep.subr.bf16.mxu0 0
      %505 = vmatpush1.bf16.msra.mxu0 0
      %506 = vmatprep.subr.bf16.mxu0 0
      %507 = vmatpush1.bf16.msra.mxu0 0
      %508 = vmatprep.subr.bf16.mxu0 0
      %509 = vmatpush1.bf16.msra.mxu0 0
      %510 = vmatprep.subr.bf16.mxu0 0
      %511 = vmatpush1.bf16.msra.mxu0 0
      %512 = vmatprep.subr.bf16.mxu0 0
      %513 = vmatpush1.bf16.msra.mxu0 0
      %514 = vmatprep.subr.bf16.mxu0 0
      %515 = vmatpush1.bf16.msra.mxu0 0
      %516 = vmatprep.subr.bf16.mxu0 0
      %517 = vmatpush1.bf16.msra.mxu0 0
      %518 = vmatprep.subr.bf16.mxu0 0
      %519 = vmatpush1.bf16.msra.mxu0 0
      %520 = vmatprep.subr.bf16.mxu0 0
      %521 = vmatpush1.bf16.msra.mxu0 0
      %522 = vmatprep.mubr.bf16.mxu0 0
      %523 = vmatmul.mubr.bf16.gmra.mrb[0].mxu0 %v439
      %v524 = vpop.f32.mrb[0].mxu0
      %v525 = vadd.f32 0.0, %v524
      %v526 = vpop.f32.mrb[0].mxu0
      %v527 = vpop.f32.mrb[0].mxu0
      %v528 = vadd.f32 0.0, %v527
      %v529 = vpop.f32.mrb[0].mxu0
      %530 = vmatprep.mubr.bf16.mxu0 0
      %531 = vmatmul.mubr.bf16.gmra.mrb[0].mxu0 %v442
      %v532 = vpop.f32.mrb[0].mxu0
      %v533 = vadd.f32 0.0, %v532
      %v534 = vpop.f32.mrb[0].mxu0
      %v535 = vpop.f32.mrb[0].mxu0
      %v536 = vadd.f32 0.0, %v535
      %v537 = vpop.f32.mrb[0].mxu0
      %538 = vmatprep.mubr.bf16.mxu0 0
      %539 = vmatmul.mubr.bf16.gmra.mrb[0].mxu0 %v445
      %v540 = vpop.f32.mrb[0].mxu0
      %v541 = vadd.f32 0.0, %v540
      %v542 = vpop.f32.mrb[0].mxu0
      %v543 = vpop.f32.mrb[0].mxu0
      %v544 = vadd.f32 0.0, %v543
      %v545 = vpop.f32.mrb[0].mxu0
      %546 = vmatprep.mubr.bf16.mxu0 0
      %547 = vmatmul.mubr.bf16.gmra.mrb[0].mxu0 %v448
      %v548 = vpop.f32.mrb[0].mxu0
      %v549 = vadd.f32 0.0, %v548
      %v550 = vpop.f32.mrb[0].mxu0
      %v551 = vpop.f32.mrb[0].mxu0
      %v552 = vadd.f32 0.0, %v551
      %v553 = vpop.f32.mrb[0].mxu0
      %554 = vmatprep.mubr.bf16.mxu0 0
      %555 = vmatmul.mubr.bf16.gmra.mrb[0].mxu0 %v451
      %v556 = vpop.f32.mrb[0].mxu0
      %v557 = vadd.f32 0.0, %v556
      %v558 = vpop.f32.mrb[0].mxu0
      %v559 = vpop.f32.mrb[0].mxu0
      %v560 = vadd.f32 0.0, %v559
      %v561 = vpop.f32.mrb[0].mxu0
      %562 = vmatprep.mubr.bf16.mxu0 0
      %563 = vmatmul.mubr.bf16.gmra.mrb[0].mxu0 %v454
      %v564 = vpop.f32.mrb[0].mxu0
      %v565 = vadd.f32 0.0, %v564
      %v566 = vpop.f32.mrb[0].mxu0
      %v567 = vpop.f32.mrb[0].mxu0
      %v568 = vadd.f32 0.0, %v567
      %v569 = vpop.f32.mrb[0].mxu0
      %570 = vmatprep.mubr.bf16.mxu0 0
      %571 = vmatmul.mubr.bf16.gmra.mrb[0].mxu0 %v457
      %v572 = vpop.f32.mrb[0].mxu0
      %v573 = vadd.f32 0.0, %v572
      %v574 = vpop.f32.mrb[0].mxu0
      %v575 = vpop.f32.mrb[0].mxu0
      %v576 = vadd.f32 0.0, %v575
      %v577 = vpop.f32.mrb[0].mxu0
      %578 = vmatprep.mubr.bf16.mxu0 0
      %579 = vmatmul.mubr.bf16.gmra.mrb[0].mxu0 %v460
      %v580 = vpop.f32.mrb[0].mxu0
      %v581 = vadd.f32 0.0, %v580
      %v582 = vpop.f32.mrb[0].mxu0
      %v583 = vpop.f32.mrb[0].mxu0
      %v584 = vadd.f32 0.0, %v583
      %v585 = vpop.f32.mrb[0].mxu0
      %586 = vmatprep.mubr.bf16.mxu0 0
      %587 = vmatmul.mubr.bf16.gmra.mrb[0].mxu0 %v463
      %v588 = vpop.f32.mrb[0].mxu0
      %v589 = vadd.f32 0.0, %v588
      %v590 = vpop.f32.mrb[0].mxu0
      %v591 = vpop.f32.mrb[0].mxu0
      %v592 = vadd.f32 0.0, %v591
      %v593 = vpop.f32.mrb[0].mxu0
      %594 = vmatprep.mubr.bf16.mxu0 0
      %595 = vmatmul.mubr.bf16.gmra.mrb[0].mxu0 %v466
      %v596 = vpop.f32.mrb[0].mxu0
      %v597 = vadd.f32 0.0, %v596
      %v598 = vpop.f32.mrb[0].mxu0
      %v599 = vpop.f32.mrb[0].mxu0
      %v600 = vadd.f32 0.0, %v599
      %v601 = vpop.f32.mrb[0].mxu0
      %602 = vmatprep.mubr.bf16.mxu0 0
      %603 = vmatmul.mubr.bf16.gmra.mrb[0].mxu0 %v469
      %v604 = vpop.f32.mrb[0].mxu0
      %v605 = vadd.f32 0.0, %v604
      %v606 = vpop.f32.mrb[0].mxu0
      %v607 = vpop.f32.mrb[0].mxu0
      %v608 = vadd.f32 0.0, %v607
      %v609 = vpop.f32.mrb[0].mxu0
      %610 = vmatprep.mubr.bf16.mxu0 0
      %611 = vmatmul.mubr.bf16.gmra.mrb[0].mxu0 %v472
      %v612 = vpop.f32.mrb[0].mxu0
      %v613 = vadd.f32 0.0, %v612
      %v614 = vpop.f32.mrb[0].mxu0
      %v615 = vpop.f32.mrb[0].mxu0
      %v616 = vadd.f32 0.0, %v615
      %v617 = vpop.f32.mrb[0].mxu0
      %618 = vmatprep.mubr.bf16.mxu0 0
      %619 = vmatmul.mubr.bf16.gmra.mrb[0].mxu0 %v475
      %v620 = vpop.f32.mrb[0].mxu0
      %v621 = vadd.f32 0.0, %v620
      %v622 = vpop.f32.mrb[0].mxu0
      %v623 = vpop.f32.mrb[0].mxu0
      %v624 = vadd.f32 0.0, %v623
      %v625 = vpop.f32.mrb[0].mxu0
      %626 = vmatprep.mubr.bf16.mxu0 0
      %627 = vmatmul.mubr.bf16.gmra.mrb[0].mxu0 %v478
      %v628 = vpop.f32.mrb[0].mxu0
      %v629 = vadd.f32 0.0, %v628
      %v630 = vpop.f32.mrb[0].mxu0
      %v631 = vpop.f32.mrb[0].mxu0
      %v632 = vadd.f32 0.0, %v631
      %v633 = vpop.f32.mrb[0].mxu0
      %634 = vmatprep.mubr.bf16.mxu0 0
      %635 = vmatmul.mubr.bf16.gmra.mrb[0].mxu0 %v481
      %v636 = vpop.f32.mrb[0].mxu0
      %v637 = vadd.f32 0.0, %v636
      %v638 = vpop.f32.mrb[0].mxu0
      %v639 = vpop.f32.mrb[0].mxu0
      %v640 = vadd.f32 0.0, %v639
      %v641 = vpop.f32.mrb[0].mxu0
      %642 = vmatprep.mubr.bf16.mxu0 0
      %643 = vmatmul.mubr.bf16.gmra.mrb[0].mxu0 %v484
      %v644 = vpop.f32.mrb[0].mxu0
      %v645 = vadd.f32 0.0, %v644
      %v646 = vpop.f32.mrb[0].mxu0
      %v647 = vpop.f32.mrb[0].mxu0
      %v648 = vadd.f32 0.0, %v647
      %v649 = vpop.f32.mrb[0].mxu0
      %650 = vdwg.mxu0
      %v651 = vadd.f32 %v292, %v525
      %v652 = vadd.f32 %v293, %v528
      %v653 = vadd.f32 %v294, %v533
      %v654 = vadd.f32 %v295, %v536
      %v655 = vadd.f32 %v296, %v541
      %v656 = vadd.f32 %v297, %v544
      %v657 = vadd.f32 %v298, %v549
      %v658 = vadd.f32 %v299, %v552
      %v659 = vadd.f32 %v300, %v557
      %v660 = vadd.f32 %v301, %v560
      %v661 = vadd.f32 %v302, %v565
      %v662 = vadd.f32 %v303, %v568
      %v663 = vadd.f32 %v304, %v573
      %v664 = vadd.f32 %v305, %v576
      %v665 = vadd.f32 %v306, %v581
      %v666 = vadd.f32 %v307, %v584
      %v667 = vadd.f32 %v308, %v589
      %v668 = vadd.f32 %v309, %v592
      %v669 = vadd.f32 %v310, %v597
      %v670 = vadd.f32 %v311, %v600
      %v671 = vadd.f32 %v312, %v605
      %v672 = vadd.f32 %v313, %v608
      %v673 = vadd.f32 %v314, %v613
      %v674 = vadd.f32 %v315, %v616
      %v675 = vadd.f32 %v316, %v621
      %v676 = vadd.f32 %v317, %v624
      %v677 = vadd.f32 %v318, %v629
      %v678 = vadd.f32 %v319, %v632
      %v679 = vadd.f32 %v320, %v637
      %v680 = vadd.f32 %v321, %v640
      %v681 = vadd.f32 %v322, %v645
      %v682 = vadd.f32 %v323, %v648
      %683 = vst.msk [vmem:[#allocation2] sm:$0xff] %vm437, %v651
      %684 = vst.msk [vmem:[#allocation2 + $0x8] sm:$0xff] %vm437, %v652
      %685 = vst.msk [vmem:[#allocation2 + $0x10] sm:$0xff] %vm437, %v653
      %686 = vst.msk [vmem:[#allocation2 + $0x18] sm:$0xff] %vm437, %v654
      %687 = vst.msk [vmem:[#allocation2 + $0x20] sm:$0xff] %vm437, %v655
      %688 = vst.msk [vmem:[#allocation2 + $0x28] sm:$0xff] %vm437, %v656
      %689 = vst.msk [vmem:[#allocation2 + $0x30] sm:$0xff] %vm437, %v657
      %690 = vst.msk [vmem:[#allocation2 + $0x38] sm:$0xff] %vm437, %v658
      %691 = vst.msk [vmem:[#allocation2 + $0x40] sm:$0xff] %vm437, %v659
      %692 = vst.msk [vmem:[#allocation2 + $0x48] sm:$0xff] %vm437, %v660
      %693 = vst.msk [vmem:[#allocation2 + $0x50] sm:$0xff] %vm437, %v661
      %694 = vst.msk [vmem:[#allocation2 + $0x58] sm:$0xff] %vm437, %v662
      %695 = vst.msk [vmem:[#allocation2 + $0x60] sm:$0xff] %vm437, %v663
      %696 = vst.msk [vmem:[#allocation2 + $0x68] sm:$0xff] %vm437, %v664
      %697 = vst.msk [vmem:[#allocation2 + $0x70] sm:$0xff] %vm437, %v665
      %698 = vst.msk [vmem:[#allocation2 + $0x78] sm:$0xff] %vm437, %v666
      %699 = vst.msk [vmem:[#allocation2 + $0x80] sm:$0xff] %vm437, %v667
      %700 = vst.msk [vmem:[#allocation2 + $0x88] sm:$0xff] %vm437, %v668
      %701 = vst.msk [vmem:[#allocation2 + $0x90] sm:$0xff] %vm437, %v669
      %702 = vst.msk [vmem:[#allocation2 + $0x98] sm:$0xff] %vm437, %v670
      %703 = vst.msk [vmem:[#allocation2 + $0xa0] sm:$0xff] %vm437, %v671
      %704 = vst.msk [vmem:[#allocation2 + $0xa8] sm:$0xff] %vm437, %v672
      %705 = vst.msk [vmem:[#allocation2 + $0xb0] sm:$0xff] %vm437, %v673
      %706 = vst.msk [vmem:[#allocation2 + $0xb8] sm:$0xff] %vm437, %v674
      %707 = vst.msk [vmem:[#allocation2 + $0xc0] sm:$0xff] %vm437, %v675
      %708 = vst.msk [vmem:[#allocation2 + $0xc8] sm:$0xff] %vm437, %v676
      %709 = vst.msk [vmem:[#allocation2 + $0xd0] sm:$0xff] %vm437, %v677
      %710 = vst.msk [vmem:[#allocation2 + $0xd8] sm:$0xff] %vm437, %v678
      %711 = vst.msk [vmem:[#allocation2 + $0xe0] sm:$0xff] %vm437, %v679
      %712 = vst.msk [vmem:[#allocation2 + $0xe8] sm:$0xff] %vm437, %v680
      %713 = vst.msk [vmem:[#allocation2 + $0xf0] sm:$0xff] %vm437, %v681
      %714 = vst.msk [vmem:[#allocation2 + $0xf8] sm:$0xff] %vm437, %v682
      // Predicated region
      $region37: #{conv_block_forward.4} parent=31 // pred_check
        %p715 = pneg %p255
      $region38: #{conv_block_forward.4} parent=31 // pred_check_branch
        %717 = sbr.rel (%p715) target = $region40
      $region39: #{conv_block_forward.4} parent=31 // pred_region
        %v718 = vld [vmem:[#allocation2] sm:$0xff]
        %v719 = vld [vmem:[#allocation2 + $0x8] sm:$0xff]
        %v720 = vld [vmem:[#allocation2 + $0x10] sm:$0xff]
        %v721 = vld [vmem:[#allocation2 + $0x18] sm:$0xff]
        %v722 = vld [vmem:[#allocation2 + $0x20] sm:$0xff]
        %v723 = vld [vmem:[#allocation2 + $0x28] sm:$0xff]
        %v724 = vld [vmem:[#allocation2 + $0x30] sm:$0xff]
        %v725 = vld [vmem:[#allocation2 + $0x38] sm:$0xff]
        %v726 = vld [vmem:[#allocation2 + $0x40] sm:$0xff]
        %v727 = vld [vmem:[#allocation2 + $0x48] sm:$0xff]
        %v728 = vld [vmem:[#allocation2 + $0x50] sm:$0xff]
        %v729 = vld [vmem:[#allocation2 + $0x58] sm:$0xff]
        %v730 = vld [vmem:[#allocation2 + $0x60] sm:$0xff]
        %v731 = vld [vmem:[#allocation2 + $0x68] sm:$0xff]
        %v732 = vld [vmem:[#allocation2 + $0x70] sm:$0xff]
        %v733 = vld [vmem:[#allocation2 + $0x78] sm:$0xff]
        %v734 = vld [vmem:[#allocation2 + $0x80] sm:$0xff]
        %v735 = vld [vmem:[#allocation2 + $0x88] sm:$0xff]
        %v736 = vld [vmem:[#allocation2 + $0x90] sm:$0xff]
        %v737 = vld [vmem:[#allocation2 + $0x98] sm:$0xff]
        %v738 = vld [vmem:[#allocation2 + $0xa0] sm:$0xff]
        %v739 = vld [vmem:[#allocation2 + $0xa8] sm:$0xff]
        %v740 = vld [vmem:[#allocation2 + $0xb0] sm:$0xff]
        %v741 = vld [vmem:[#allocation2 + $0xb8] sm:$0xff]
        %v742 = vld [vmem:[#allocation2 + $0xc0] sm:$0xff]
        %v743 = vld [vmem:[#allocation2 + $0xc8] sm:$0xff]
        %v744 = vld [vmem:[#allocation2 + $0xd0] sm:$0xff]
        %v745 = vld [vmem:[#allocation2 + $0xd8] sm:$0xff]
        %v746 = vld [vmem:[#allocation2 + $0xe0] sm:$0xff]
        %v747 = vld [vmem:[#allocation2 + $0xe8] sm:$0xff]
        %v748 = vld [vmem:[#allocation2 + $0xf0] sm:$0xff]
        %v749 = vld [vmem:[#allocation2 + $0xf8] sm:$0xff]
        %v750 = vld [vmem:[%s244] sm:$0x1]
        %v752 = vlaneseq
        %v753 = vshrl.u32 %v752, 7
        %v754 = vsub.s32 0, %v753
        %v755 = vrot.slane %v750, %v754
        %v757 = vadd.f32 %v718, %v755
        %v758 = vadd.f32 %v719, %v755
        %v759 = vadd.f32 %v720, %v755
        %v760 = vadd.f32 %v721, %v755
        %v761 = vadd.f32 %v722, %v755
        %v762 = vadd.f32 %v723, %v755
        %v763 = vadd.f32 %v724, %v755
        %v764 = vadd.f32 %v725, %v755
        %v765 = vadd.f32 %v726, %v755
        %v766 = vadd.f32 %v727, %v755
        %v767 = vadd.f32 %v728, %v755
        %v768 = vadd.f32 %v729, %v755
        %v769 = vadd.f32 %v730, %v755
        %v770 = vadd.f32 %v731, %v755
        %v771 = vadd.f32 %v732, %v755
        %v772 = vadd.f32 %v733, %v755
        %v773 = vadd.f32 %v734, %v755
        %v774 = vadd.f32 %v735, %v755
        %v775 = vadd.f32 %v736, %v755
        %v776 = vadd.f32 %v737, %v755
        %v777 = vadd.f32 %v738, %v755
        %v778 = vadd.f32 %v739, %v755
        %v779 = vadd.f32 %v740, %v755
        %v780 = vadd.f32 %v741, %v755
        %v781 = vadd.f32 %v742, %v755
        %v782 = vadd.f32 %v743, %v755
        %v783 = vadd.f32 %v744, %v755
        %v784 = vadd.f32 %v745, %v755
        %v785 = vadd.f32 %v746, %v755
        %v786 = vadd.f32 %v747, %v755
        %v787 = vadd.f32 %v748, %v755
        %v788 = vadd.f32 %v749, %v755
        %v789 = vmax.f32 %v757, 0.0
        %v790 = vmax.f32 %v758, 0.0
        %v791 = vmax.f32 %v759, 0.0
        %v792 = vmax.f32 %v760, 0.0
        %v793 = vmax.f32 %v761, 0.0
        %v794 = vmax.f32 %v762, 0.0
        %v795 = vmax.f32 %v763, 0.0
        %v796 = vmax.f32 %v764, 0.0
        %v797 = vmax.f32 %v765, 0.0
        %v798 = vmax.f32 %v766, 0.0
        %v799 = vmax.f32 %v767, 0.0
        %v800 = vmax.f32 %v768, 0.0
        %v801 = vmax.f32 %v769, 0.0
        %v802 = vmax.f32 %v770, 0.0
        %v803 = vmax.f32 %v771, 0.0
        %v804 = vmax.f32 %v772, 0.0
        %v805 = vmax.f32 %v773, 0.0
        %v806 = vmax.f32 %v774, 0.0
        %v807 = vmax.f32 %v775, 0.0
        %v808 = vmax.f32 %v776, 0.0
        %v809 = vmax.f32 %v777, 0.0
        %v810 = vmax.f32 %v778, 0.0
        %v811 = vmax.f32 %v779, 0.0
        %v812 = vmax.f32 %v780, 0.0
        %v813 = vmax.f32 %v781, 0.0
        %v814 = vmax.f32 %v782, 0.0
        %v815 = vmax.f32 %v783, 0.0
        %v816 = vmax.f32 %v784, 0.0
        %v817 = vmax.f32 %v785, 0.0
        %v818 = vmax.f32 %v786, 0.0
        %v819 = vmax.f32 %v787, 0.0
        %v820 = vmax.f32 %v788, 0.0
        %v821 = vpack.c.bf16 %v790, %v789
        %v822 = vpack.c.bf16 %v792, %v791
        %v823 = vpack.c.bf16 %v794, %v793
        %v824 = vpack.c.bf16 %v796, %v795
        %v825 = vpack.c.bf16 %v798, %v797
        %v826 = vpack.c.bf16 %v800, %v799
        %v827 = vpack.c.bf16 %v802, %v801
        %v828 = vpack.c.bf16 %v804, %v803
        %v829 = vpack.c.bf16 %v806, %v805
        %v830 = vpack.c.bf16 %v808, %v807
        %v831 = vpack.c.bf16 %v810, %v809
        %v832 = vpack.c.bf16 %v812, %v811
        %v833 = vpack.c.bf16 %v814, %v813
        %v834 = vpack.c.bf16 %v816, %v815
        %v835 = vpack.c.bf16 %v818, %v817
        %v836 = vpack.c.bf16 %v820, %v819
        %v853 = vunpack.c.l.b16 %v821
        %v854 = vunpack.c.h.b16 %v821
        %v855 = vunpack.c.l.b16 %v822
        %v856 = vunpack.c.h.b16 %v822
        %v857 = vunpack.c.l.b16 %v823
        %v858 = vunpack.c.h.b16 %v823
        %v859 = vunpack.c.l.b16 %v824
        %v860 = vunpack.c.h.b16 %v824
        %v861 = vunpack.c.l.b16 %v825
        %v862 = vunpack.c.h.b16 %v825
        %v863 = vunpack.c.l.b16 %v826
        %v864 = vunpack.c.h.b16 %v826
        %v865 = vunpack.c.l.b16 %v827
        %v866 = vunpack.c.h.b16 %v827
        %v867 = vunpack.c.l.b16 %v828
        %v868 = vunpack.c.h.b16 %v828
        %v869 = vunpack.c.l.b16 %v829
        %v870 = vunpack.c.h.b16 %v829
        %v871 = vunpack.c.l.b16 %v830
        %v872 = vunpack.c.h.b16 %v830
        %v873 = vunpack.c.l.b16 %v831
        %v874 = vunpack.c.h.b16 %v831
        %v875 = vunpack.c.l.b16 %v832
        %v876 = vunpack.c.h.b16 %v832
        %v877 = vunpack.c.l.b16 %v833
        %v878 = vunpack.c.h.b16 %v833
        %v879 = vunpack.c.l.b16 %v834
        %v880 = vunpack.c.h.b16 %v834
        %v881 = vunpack.c.l.b16 %v835
        %v882 = vunpack.c.h.b16 %v835
        %v883 = vunpack.c.l.b16 %v836
        %v884 = vunpack.c.h.b16 %v836
        %v885 = vpack.c.b16 %v853, %v853
        %v886 = vpack.c.b16 %v854, %v854
        %v887 = vpack.c.b16 %v855, %v855
        %v888 = vpack.c.b16 %v856, %v856
        %v889 = vpack.c.b16 %v857, %v857
        %v890 = vpack.c.b16 %v858, %v858
        %v891 = vpack.c.b16 %v859, %v859
        %v892 = vpack.c.b16 %v860, %v860
        %v893 = vpack.c.b16 %v861, %v861
        %v894 = vpack.c.b16 %v862, %v862
        %v895 = vpack.c.b16 %v863, %v863
        %v896 = vpack.c.b16 %v864, %v864
        %v897 = vpack.c.b16 %v865, %v865
        %v898 = vpack.c.b16 %v866, %v866
        %v899 = vpack.c.b16 %v867, %v867
        %v900 = vpack.c.b16 %v868, %v868
        %v901 = vpack.c.b16 %v869, %v869
        %v902 = vpack.c.b16 %v870, %v870
        %v903 = vpack.c.b16 %v871, %v871
        %v904 = vpack.c.b16 %v872, %v872
        %v905 = vpack.c.b16 %v873, %v873
        %v906 = vpack.c.b16 %v874, %v874
        %v907 = vpack.c.b16 %v875, %v875
        %v908 = vpack.c.b16 %v876, %v876
        %v909 = vpack.c.b16 %v877, %v877
        %v910 = vpack.c.b16 %v878, %v878
        %v911 = vpack.c.b16 %v879, %v879
        %v912 = vpack.c.b16 %v880, %v880
        %v913 = vpack.c.b16 %v881, %v881
        %v914 = vpack.c.b16 %v882, %v882
        %v915 = vpack.c.b16 %v883, %v883
        %v916 = vpack.c.b16 %v884, %v884
        %vm949 = vcmask 27648
        %950 = vst.msk [vmem:[%s252] sm:$0xf] %vm949, %v885
        %951 = vst.msk [vmem:[%s252 + $0x4] sm:$0xf] %vm949, %v886
        %952 = vst.msk [vmem:[%s252 + $0x8] sm:$0xf] %vm949, %v887
        %953 = vst.msk [vmem:[%s252 + $0xc] sm:$0xf] %vm949, %v888
        %954 = vst.msk [vmem:[%s252 + $0x10] sm:$0xf] %vm949, %v889
        %955 = vst.msk [vmem:[%s252 + $0x14] sm:$0xf] %vm949, %v890
        %956 = vst.msk [vmem:[%s252 + $0x18] sm:$0xf] %vm949, %v891
        %957 = vst.msk [vmem:[%s252 + $0x1c] sm:$0xf] %vm949, %v892
        %958 = vst.msk [vmem:[%s252 + $0x20] sm:$0xf] %vm949, %v893
        %959 = vst.msk [vmem:[%s252 + $0x24] sm:$0xf] %vm949, %v894
        %960 = vst.msk [vmem:[%s252 + $0x28] sm:$0xf] %vm949, %v895
        %961 = vst.msk [vmem:[%s252 + $0x2c] sm:$0xf] %vm949, %v896
        %962 = vst.msk [vmem:[%s252 + $0x30] sm:$0xf] %vm949, %v897
        %963 = vst.msk [vmem:[%s252 + $0x34] sm:$0xf] %vm949, %v898
        %964 = vst.msk [vmem:[%s252 + $0x38] sm:$0xf] %vm949, %v899
        %965 = vst.msk [vmem:[%s252 + $0x3c] sm:$0xf] %vm949, %v900
        %966 = vst.msk [vmem:[%s252 + $0x40] sm:$0xf] %vm949, %v901
        %967 = vst.msk [vmem:[%s252 + $0x44] sm:$0xf] %vm949, %v902
        %968 = vst.msk [vmem:[%s252 + $0x48] sm:$0xf] %vm949, %v903
        %969 = vst.msk [vmem:[%s252 + $0x4c] sm:$0xf] %vm949, %v904
        %970 = vst.msk [vmem:[%s252 + $0x50] sm:$0xf] %vm949, %v905
        %971 = vst.msk [vmem:[%s252 + $0x54] sm:$0xf] %vm949, %v906
        %972 = vst.msk [vmem:[%s252 + $0x58] sm:$0xf] %vm949, %v907
        %973 = vst.msk [vmem:[%s252 + $0x5c] sm:$0xf] %vm949, %v908
        %974 = vst.msk [vmem:[%s252 + $0x60] sm:$0xf] %vm949, %v909
        %975 = vst.msk [vmem:[%s252 + $0x64] sm:$0xf] %vm949, %v910
        %976 = vst.msk [vmem:[%s252 + $0x68] sm:$0xf] %vm949, %v911
        %977 = vst.msk [vmem:[%s252 + $0x6c] sm:$0xf] %vm949, %v912
        %978 = vst.msk [vmem:[%s252 + $0x70] sm:$0xf] %vm949, %v913
        %979 = vst.msk [vmem:[%s252 + $0x74] sm:$0xf] %vm949, %v914
        %980 = vst.msk [vmem:[%s252 + $0x78] sm:$0xf] %vm949, %v915
        %981 = vst.msk [vmem:[%s252 + $0x7c] sm:$0xf] %vm949, %v916
      $region40: #{conv_block_forward.4} parent=31 // pred_fallthru
        _
      %s982 = smul.u32 32, %s19
      %p983 = scmp.lt.s32.totalorder %s982, 63
      %s984 = scalar_select %p983, %s982, 63
      %p985 = scmp.lt.s32.totalorder %s20, 0
      %s986 = scalar_select %p985, %s20, 0
      %s987 = sadd.s32 %s986, %s984
      %s988 = smul.addr %s987, 4
      %s989 = scalar_lea.vmem %s3, %s988
      // Predicated region
      $region41: #{conv_block_forward.4} parent=31 // pred_check
        %p990 = pneg %p135
      $region42: #{conv_block_forward.4} parent=31 // pred_check_branch
        %992 = sbr.rel (%p990) target = $region44
      $region43: #{conv_block_forward.4} parent=31 // pred_region
        %s993 = smul.u32 32, %s19
      $region44: #{conv_block_forward.4} parent=31 // pred_fallthru
        _
    $region32: #{conv_block_forward.4} parent=5 // pred_fallthru
      _
    %p994 = scmp.le.s32.totalorder 2, %s9
    // Predicated region
    $region45: #{conv_block_forward.4} parent=5 // pred_check
      %p995 = pneg %p994
    $region46: #{conv_block_forward.4} parent=5 // pred_check_branch
      %997 = sbr.rel (%p995) target = $region48
    $region47: #{conv_block_forward.4} parent=5 // pred_region
      %s998 = ssub.s32 %s9, 2
      // Predicated region
      $region49: #{conv_block_forward.4} parent=47 // pred_check
        %p999 = pneg %p141
      $region50: #{conv_block_forward.4} parent=47 // pred_check_branch
        %1001 = sbr.rel (%p999) target = $region52
      $region51: #{conv_block_forward.4} parent=47 // pred_region
        %s1002 = smul.u32 32, %s22
        %p1003 = scmp.lt.s32.totalorder %s1002, 63
        %s1004 = scalar_select %p1003, %s1002, 63
        %p1005 = scmp.lt.s32.totalorder %s23, 0
        %s1006 = scalar_select %p1005, %s23, 0
        %s1007 = sadd.s32 %s1006, %s1004
        %s1008 = smul.addr %s1007, 4
        %s1009 = scalar_lea.vmem %s3, %s1008
      $region52: #{conv_block_forward.4} parent=47 // pred_fallthru
        _
    $region48: #{conv_block_forward.4} parent=5 // pred_fallthru
      _
  $region6: #{conv_block_forward.4} parent=0 // loop_footer
    %s13 = sadd.s32 1, %s9
  $region7: #{conv_block_forward.4} parent=0 // loop_footer_branch
    %8 = sbr.rel target = $region3
  $region8: #{conv_block_forward.4} parent=0 // loop_exit
    _

// kernel: conv_block_forward.7
$region0: #{conv_block_forward.7}
  #allocation0 [shape = 'u32[]', space=smem, size = 0x4, offset = 0x4, fixed_abs, tag = 'smem constant byte address 0x4 - core index']
  #allocation1 [shape = 'u32[144,128]{1,0:T(1,128)}', space=vmem, size = 0x12000, scoped, tag = 'internal scratch']
  #allocation2 [shape = 'f32[128,16]{1,0:T(8,128)}', space=vmem, size = 0x10000, scoped, tag = 'scratch operand']
  %s0 = inlined_call_operand.vmem [shape: bf16[128,4], index: 0, kind: input, shape index: {}]
  %s1 = inlined_call_operand.vmem [shape: bf16[4,16], index: 1, kind: input, shape index: {}]
  %s2 = inlined_call_operand.vmem [shape: f32[1,16], index: 2, kind: input, shape index: {}]
  %s3 = inlined_call_operand.vmem [shape: bf16[128,16], index: 3, kind: input, shape index: {}]
  %s4 = inlined_call_operand.vmem [shape: bf16[128,16], index: 4, kind: output, shape index: {}]
  %s5 = sld [smem:[#allocation0]]
  $region34: #{conv_block_forward.7} parent=0
    _
  %s7 = ssub.s32 1, %s5
  %s8 = scalar_select 0, %s7, %s5
  // Predicated region
  $region2: #{conv_block_forward.7} parent=0 // pred_check
    _
  $region3: #{conv_block_forward.7} parent=0 // pred_check_branch
    %10 = sbr.rel (0) target = $region5
  $region4: #{conv_block_forward.7} parent=0 // pred_region
    _
  $region5: #{conv_block_forward.7} parent=0 // pred_fallthru
    _
  // Predicated region
  $region6: #{conv_block_forward.7} parent=0 // pred_check
    _
  $region7: #{conv_block_forward.7} parent=0 // pred_check_branch
    %12 = sbr.rel (0) target = $region9
  $region8: #{conv_block_forward.7} parent=0 // pred_region
    _
  $region9: #{conv_block_forward.7} parent=0 // pred_fallthru
    _
  // Predicated region
  $region10: #{conv_block_forward.7} parent=0 // pred_check
    _
  $region11: #{conv_block_forward.7} parent=0 // pred_check_branch
    %14 = sbr.rel (0) target = $region13
  $region12: #{conv_block_forward.7} parent=0 // pred_region
    _
  $region13: #{conv_block_forward.7} parent=0 // pred_fallthru
    _
  // Predicated region
  $region14: #{conv_block_forward.7} parent=0 // pred_check
    _
  $region15: #{conv_block_forward.7} parent=0 // pred_check_branch
    %16 = sbr.rel (0) target = $region17
  $region16: #{conv_block_forward.7} parent=0 // pred_region
    _
  $region17: #{conv_block_forward.7} parent=0 // pred_fallthru
    _
  %p18 = scmp.eq.s32.totalorder 0, 0
  // Predicated region
  $region18: #{conv_block_forward.7} parent=0 // pred_check
    %p19 = pneg %p18
  $region19: #{conv_block_forward.7} parent=0 // pred_check_branch
    %21 = sbr.rel (%p19) target = $region21
  $region20: #{conv_block_forward.7} parent=0 // pred_region
    %vm22 = vcmask 130048
    %23 = vst.msk [vmem:[#allocation2] sm:$0xff] %vm22, 0.0
    %24 = vst.msk [vmem:[#allocation2 + $0x8] sm:$0xff] %vm22, 0.0
    %25 = vst.msk [vmem:[#allocation2 + $0x10] sm:$0xff] %vm22, 0.0
    %26 = vst.msk [vmem:[#allocation2 + $0x18] sm:$0xff] %vm22, 0.0
    %27 = vst.msk [vmem:[#allocation2 + $0x20] sm:$0xff] %vm22, 0.0
    %28 = vst.msk [vmem:[#allocation2 + $0x28] sm:$0xff] %vm22, 0.0
    %29 = vst.msk [vmem:[#allocation2 + $0x30] sm:$0xff] %vm22, 0.0
    %30 = vst.msk [vmem:[#allocation2 + $0x38] sm:$0xff] %vm22, 0.0
    %31 = vst.msk [vmem:[#allocation2 + $0x40] sm:$0xff] %vm22, 0.0
    %32 = vst.msk [vmem:[#allocation2 + $0x48] sm:$0xff] %vm22, 0.0
    %33 = vst.msk [vmem:[#allocation2 + $0x50] sm:$0xff] %vm22, 0.0
    %34 = vst.msk [vmem:[#allocation2 + $0x58] sm:$0xff] %vm22, 0.0
    %35 = vst.msk [vmem:[#allocation2 + $0x60] sm:$0xff] %vm22, 0.0
    %36 = vst.msk [vmem:[#allocation2 + $0x68] sm:$0xff] %vm22, 0.0
    %37 = vst.msk [vmem:[#allocation2 + $0x70] sm:$0xff] %vm22, 0.0
    %38 = vst.msk [vmem:[#allocation2 + $0x78] sm:$0xff] %vm22, 0.0
  $region21: #{conv_block_forward.7} parent=0 // pred_fallthru
    _
  %v39 = vld [vmem:[#allocation2] sm:$0xff]
  %v40 = vld [vmem:[#allocation2 + $0x8] sm:$0xff]
  %v41 = vld [vmem:[#allocation2 + $0x10] sm:$0xff]
  %v42 = vld [vmem:[#allocation2 + $0x18] sm:$0xff]
  %v43 = vld [vmem:[#allocation2 + $0x20] sm:$0xff]
  %v44 = vld [vmem:[#allocation2 + $0x28] sm:$0xff]
  %v45 = vld [vmem:[#allocation2 + $0x30] sm:$0xff]
  %v46 = vld [vmem:[#allocation2 + $0x38] sm:$0xff]
  %v47 = vld [vmem:[#allocation2 + $0x40] sm:$0xff]
  %v48 = vld [vmem:[#allocation2 + $0x48] sm:$0xff]
  %v49 = vld [vmem:[#allocation2 + $0x50] sm:$0xff]
  %v50 = vld [vmem:[#allocation2 + $0x58] sm:$0xff]
  %v51 = vld [vmem:[#allocation2 + $0x60] sm:$0xff]
  %v52 = vld [vmem:[#allocation2 + $0x68] sm:$0xff]
  %v53 = vld [vmem:[#allocation2 + $0x70] sm:$0xff]
  %v54 = vld [vmem:[#allocation2 + $0x78] sm:$0xff]
  %v55 = vld [vmem:[%s0] sm:$0xf]
  %v56 = vld [vmem:[%s0 + $0x4] sm:$0xf]
  %v57 = vld [vmem:[%s0 + $0x8] sm:$0xf]
  %v58 = vld [vmem:[%s0 + $0xc] sm:$0xf]
  %v59 = vld [vmem:[%s0 + $0x10] sm:$0xf]
  %v60 = vld [vmem:[%s0 + $0x14] sm:$0xf]
  %v61 = vld [vmem:[%s0 + $0x18] sm:$0xf]
  %v62 = vld [vmem:[%s0 + $0x1c] sm:$0xf]
  %v63 = vld [vmem:[%s0 + $0x20] sm:$0xf]
  %v64 = vld [vmem:[%s0 + $0x24] sm:$0xf]
  %v65 = vld [vmem:[%s0 + $0x28] sm:$0xf]
  %v66 = vld [vmem:[%s0 + $0x2c] sm:$0xf]
  %v67 = vld [vmem:[%s0 + $0x30] sm:$0xf]
  %v68 = vld [vmem:[%s0 + $0x34] sm:$0xf]
  %v69 = vld [vmem:[%s0 + $0x38] sm:$0xf]
  %v70 = vld [vmem:[%s0 + $0x3c] sm:$0xf]
  %v71 = vld [vmem:[%s1] sm:$0x3]
  %v88 = vunpack.c.l.b16 %v55
  %v89 = vunpack.c.l.b16 %v56
  %v90 = vunpack.c.l.b16 %v57
  %v91 = vunpack.c.l.b16 %v58
  %v92 = vunpack.c.l.b16 %v59
  %v93 = vunpack.c.l.b16 %v60
  %v94 = vunpack.c.l.b16 %v61
  %v95 = vunpack.c.l.b16 %v62
  %v96 = vunpack.c.l.b16 %v63
  %v97 = vunpack.c.l.b16 %v64
  %v98 = vunpack.c.l.b16 %v65
  %v99 = vunpack.c.l.b16 %v66
  %v100 = vunpack.c.l.b16 %v67
  %v101 = vunpack.c.l.b16 %v68
  %v102 = vunpack.c.l.b16 %v69
  %v103 = vunpack.c.l.b16 %v70
  %v104 = vpack.c.b16 %v89, %v88
  %v105 = vpack.c.b16 %v91, %v90
  %v106 = vpack.c.b16 %v93, %v92
  %v107 = vpack.c.b16 %v95, %v94
  %v108 = vpack.c.b16 %v97, %v96
  %v109 = vpack.c.b16 %v99, %v98
  %v110 = vpack.c.b16 %v101, %v100
  %v111 = vpack.c.b16 %v103, %v102
  %vm112 = vcmask 31744
  %v114 = vsel %vm112, %v104, 0
  %v117 = vsel %vm112, %v105, 0
  %v120 = vsel %vm112, %v106, 0
  %v123 = vsel %vm112, %v107, 0
  %v126 = vsel %vm112, %v108, 0
  %v129 = vsel %vm112, %v109, 0
  %v132 = vsel %vm112, %v110, 0
  %v135 = vsel %vm112, %v111, 0
  %vm137 = vcmask 1041408
  %v139 = vsel %vm137, %v71, 0
  %141 = vmatprep.subr.bf16.mxu0 0
  %142 = vmatpush1.bf16.msra.mxu0 %v139
  %143 = vmatprep.subr.bf16.mxu0 0
  %144 = vmatpush1.bf16.msra.mxu0 0
  %145 = vmatprep.subr.bf16.mxu0 0
  %146 = vmatpush1.bf16.msra.mxu0 0
  %147 = vmatprep.subr.bf16.mxu0 0
  %148 = vmatpush1.bf16.msra.mxu0 0
  %149 = vmatprep.subr.bf16.mxu0 0
  %150 = vmatpush1.bf16.msra.mxu0 0
  %151 = vmatprep.subr.bf16.mxu0 0
  %152 = vmatpush1.bf16.msra.mxu0 0
  %153 = vmatprep.subr.bf16.mxu0 0
  %154 = vmatpush1.bf16.msra.mxu0 0
  %155 = vmatprep.subr.bf16.mxu0 0
  %156 = vmatpush1.bf16.msra.mxu0 0
  %157 = vmatprep.subr.bf16.mxu0 0
  %158 = vmatpush1.bf16.msra.mxu0 0
  %159 = vmatprep.subr.bf16.mxu0 0
  %160 = vmatpush1.bf16.msra.mxu0 0
  %161 = vmatprep.subr.bf16.mxu0 0
  %162 = vmatpush1.bf16.msra.mxu0 0
  %163 = vmatprep.subr.bf16.mxu0 0
  %164 = vmatpush1.bf16.msra.mxu0 0
  %165 = vmatprep.subr.bf16.mxu0 0
  %166 = vmatpush1.bf16.msra.mxu0 0
  %167 = vmatprep.subr.bf16.mxu0 0
  %168 = vmatpush1.bf16.msra.mxu0 0
  %169 = vmatprep.subr.bf16.mxu0 0
  %170 = vmatpush1.bf16.msra.mxu0 0
  %171 = vmatprep.subr.bf16.mxu0 0
  %172 = vmatpush1.bf16.msra.mxu0 0
  %173 = vmatprep.mubr.bf16.mxu0 0
  %174 = vmatmul.mubr.bf16.gmra.mrb[0].mxu0 %v114
  %v175 = vpop.f32.mrb[0].mxu0
  %v176 = vadd.f32 0.0, %v175
  %v177 = vpop.f32.mrb[0].mxu0
  %v178 = vpop.f32.mrb[0].mxu0
  %v179 = vadd.f32 0.0, %v178
  %v180 = vpop.f32.mrb[0].mxu0
  %181 = vmatprep.mubr.bf16.mxu0 0
  %182 = vmatmul.mubr.bf16.gmra.mrb[0].mxu0 %v117
  %v183 = vpop.f32.mrb[0].mxu0
  %v184 = vadd.f32 0.0, %v183
  %v185 = vpop.f32.mrb[0].mxu0
  %v186 = vpop.f32.mrb[0].mxu0
  %v187 = vadd.f32 0.0, %v186
  %v188 = vpop.f32.mrb[0].mxu0
  %189 = vmatprep.mubr.bf16.mxu0 0
  %190 = vmatmul.mubr.bf16.gmra.mrb[0].mxu0 %v120
  %v191 = vpop.f32.mrb[0].mxu0
  %v192 = vadd.f32 0.0, %v191
  %v193 = vpop.f32.mrb[0].mxu0
  %v194 = vpop.f32.mrb[0].mxu0
  %v195 = vadd.f32 0.0, %v194
  %v196 = vpop.f32.mrb[0].mxu0
  %197 = vmatprep.mubr.bf16.mxu0 0
  %198 = vmatmul.mubr.bf16.gmra.mrb[0].mxu0 %v123
  %v199 = vpop.f32.mrb[0].mxu0
  %v200 = vadd.f32 0.0, %v199
  %v201 = vpop.f32.mrb[0].mxu0
  %v202 = vpop.f32.mrb[0].mxu0
  %v203 = vadd.f32 0.0, %v202
  %v204 = vpop.f32.mrb[0].mxu0
  %205 = vmatprep.mubr.bf16.mxu0 0
  %206 = vmatmul.mubr.bf16.gmra.mrb[0].mxu0 %v126
  %v207 = vpop.f32.mrb[0].mxu0
  %v208 = vadd.f32 0.0, %v207
  %v209 = vpop.f32.mrb[0].mxu0
  %v210 = vpop.f32.mrb[0].mxu0
  %v211 = vadd.f32 0.0, %v210
  %v212 = vpop.f32.mrb[0].mxu0
  %213 = vmatprep.mubr.bf16.mxu0 0
  %214 = vmatmul.mubr.bf16.gmra.mrb[0].mxu0 %v129
  %v215 = vpop.f32.mrb[0].mxu0
  %v216 = vadd.f32 0.0, %v215
  %v217 = vpop.f32.mrb[0].mxu0
  %v218 = vpop.f32.mrb[0].mxu0
  %v219 = vadd.f32 0.0, %v218
  %v220 = vpop.f32.mrb[0].mxu0
  %221 = vmatprep.mubr.bf16.mxu0 0
  %222 = vmatmul.mubr.bf16.gmra.mrb[0].mxu0 %v132
  %v223 = vpop.f32.mrb[0].mxu0
  %v224 = vadd.f32 0.0, %v223
  %v225 = vpop.f32.mrb[0].mxu0
  %v226 = vpop.f32.mrb[0].mxu0
  %v227 = vadd.f32 0.0, %v226
  %v228 = vpop.f32.mrb[0].mxu0
  %229 = vmatprep.mubr.bf16.mxu0 0
  %230 = vmatmul.mubr.bf16.gmra.mrb[0].mxu0 %v135
  %v231 = vpop.f32.mrb[0].mxu0
  %v232 = vadd.f32 0.0, %v231
  %v233 = vpop.f32.mrb[0].mxu0
  %v234 = vpop.f32.mrb[0].mxu0
  %v235 = vadd.f32 0.0, %v234
  %v236 = vpop.f32.mrb[0].mxu0
  %237 = vdwg.mxu0
  %v238 = vadd.f32 %v39, %v176
  %v239 = vadd.f32 %v40, %v179
  %v240 = vadd.f32 %v41, %v184
  %v241 = vadd.f32 %v42, %v187
  %v242 = vadd.f32 %v43, %v192
  %v243 = vadd.f32 %v44, %v195
  %v244 = vadd.f32 %v45, %v200
  %v245 = vadd.f32 %v46, %v203
  %v246 = vadd.f32 %v47, %v208
  %v247 = vadd.f32 %v48, %v211
  %v248 = vadd.f32 %v49, %v216
  %v249 = vadd.f32 %v50, %v219
  %v250 = vadd.f32 %v51, %v224
  %v251 = vadd.f32 %v52, %v227
  %v252 = vadd.f32 %v53, %v232
  %v253 = vadd.f32 %v54, %v235
  %vm254 = vcmask 130048
  %255 = vst.msk [vmem:[#allocation2] sm:$0xff] %vm254, %v238
  %256 = vst.msk [vmem:[#allocation2 + $0x8] sm:$0xff] %vm254, %v239
  %257 = vst.msk [vmem:[#allocation2 + $0x10] sm:$0xff] %vm254, %v240
  %258 = vst.msk [vmem:[#allocation2 + $0x18] sm:$0xff] %vm254, %v241
  %259 = vst.msk [vmem:[#allocation2 + $0x20] sm:$0xff] %vm254, %v242
  %260 = vst.msk [vmem:[#allocation2 + $0x28] sm:$0xff] %vm254, %v243
  %261 = vst.msk [vmem:[#allocation2 + $0x30] sm:$0xff] %vm254, %v244
  %262 = vst.msk [vmem:[#allocation2 + $0x38] sm:$0xff] %vm254, %v245
  %263 = vst.msk [vmem:[#allocation2 + $0x40] sm:$0xff] %vm254, %v246
  %264 = vst.msk [vmem:[#allocation2 + $0x48] sm:$0xff] %vm254, %v247
  %265 = vst.msk [vmem:[#allocation2 + $0x50] sm:$0xff] %vm254, %v248
  %266 = vst.msk [vmem:[#allocation2 + $0x58] sm:$0xff] %vm254, %v249
  %267 = vst.msk [vmem:[#allocation2 + $0x60] sm:$0xff] %vm254, %v250
  %268 = vst.msk [vmem:[#allocation2 + $0x68] sm:$0xff] %vm254, %v251
  %269 = vst.msk [vmem:[#allocation2 + $0x70] sm:$0xff] %vm254, %v252
  %270 = vst.msk [vmem:[#allocation2 + $0x78] sm:$0xff] %vm254, %v253
  // Predicated region
  $region22: #{conv_block_forward.7} parent=0 // pred_check
    %p271 = pneg %p18
  $region23: #{conv_block_forward.7} parent=0 // pred_check_branch
    %273 = sbr.rel (%p271) target = $region25
  $region24: #{conv_block_forward.7} parent=0 // pred_region
    %v274 = vld [vmem:[#allocation2] sm:$0xff]
    %v275 = vld [vmem:[#allocation2 + $0x8] sm:$0xff]
    %v276 = vld [vmem:[#allocation2 + $0x10] sm:$0xff]
    %v277 = vld [vmem:[#allocation2 + $0x18] sm:$0xff]
    %v278 = vld [vmem:[#allocation2 + $0x20] sm:$0xff]
    %v279 = vld [vmem:[#allocation2 + $0x28] sm:$0xff]
    %v280 = vld [vmem:[#allocation2 + $0x30] sm:$0xff]
    %v281 = vld [vmem:[#allocation2 + $0x38] sm:$0xff]
    %v282 = vld [vmem:[#allocation2 + $0x40] sm:$0xff]
    %v283 = vld [vmem:[#allocation2 + $0x48] sm:$0xff]
    %v284 = vld [vmem:[#allocation2 + $0x50] sm:$0xff]
    %v285 = vld [vmem:[#allocation2 + $0x58] sm:$0xff]
    %v286 = vld [vmem:[#allocation2 + $0x60] sm:$0xff]
    %v287 = vld [vmem:[#allocation2 + $0x68] sm:$0xff]
    %v288 = vld [vmem:[#allocation2 + $0x70] sm:$0xff]
    %v289 = vld [vmem:[#allocation2 + $0x78] sm:$0xff]
    %v290 = vld [vmem:[%s2] sm:$0x1]
    %v292 = vlaneseq
    %v293 = vshrl.u32 %v292, 7
    %v294 = vsub.s32 0, %v293
    %v295 = vrot.slane %v290, %v294
    %v297 = vadd.f32 %v274, %v295
    %v298 = vadd.f32 %v275, %v295
    %v299 = vadd.f32 %v276, %v295
    %v300 = vadd.f32 %v277, %v295
    %v301 = vadd.f32 %v278, %v295
    %v302 = vadd.f32 %v279, %v295
    %v303 = vadd.f32 %v280, %v295
    %v304 = vadd.f32 %v281, %v295
    %v305 = vadd.f32 %v282, %v295
    %v306 = vadd.f32 %v283, %v295
    %v307 = vadd.f32 %v284, %v295
    %v308 = vadd.f32 %v285, %v295
    %v309 = vadd.f32 %v286, %v295
    %v310 = vadd.f32 %v287, %v295
    %v311 = vadd.f32 %v288, %v295
    %v312 = vadd.f32 %v289, %v295
    %v313 = vld [vmem:[%s3] sm:$0xf]
    %v314 = vld [vmem:[%s3 + $0x4] sm:$0xf]
    %v315 = vld [vmem:[%s3 + $0x8] sm:$0xf]
    %v316 = vld [vmem:[%s3 + $0xc] sm:$0xf]
    %v317 = vld [vmem:[%s3 + $0x10] sm:$0xf]
    %v318 = vld [vmem:[%s3 + $0x14] sm:$0xf]
    %v319 = vld [vmem:[%s3 + $0x18] sm:$0xf]
    %v320 = vld [vmem:[%s3 + $0x1c] sm:$0xf]
    %v321 = vld [vmem:[%s3 + $0x20] sm:$0xf]
    %v322 = vld [vmem:[%s3 + $0x24] sm:$0xf]
    %v323 = vld [vmem:[%s3 + $0x28] sm:$0xf]
    %v324 = vld [vmem:[%s3 + $0x2c] sm:$0xf]
    %v325 = vld [vmem:[%s3 + $0x30] sm:$0xf]
    %v326 = vld [vmem:[%s3 + $0x34] sm:$0xf]
    %v327 = vld [vmem:[%s3 + $0x38] sm:$0xf]
    %v328 = vld [vmem:[%s3 + $0x3c] sm:$0xf]
    %v329 = vunpack.c.l.bf16 %v313
    %v330 = vunpack.c.l.bf16 %v314
    %v331 = vunpack.c.l.bf16 %v315
    %v332 = vunpack.c.l.bf16 %v316
    %v333 = vunpack.c.l.bf16 %v317
    %v334 = vunpack.c.l.bf16 %v318
    %v335 = vunpack.c.l.bf16 %v319
    %v336 = vunpack.c.l.bf16 %v320
    %v337 = vunpack.c.l.bf16 %v321
    %v338 = vunpack.c.l.bf16 %v322
    %v339 = vunpack.c.l.bf16 %v323
    %v340 = vunpack.c.l.bf16 %v324
    %v341 = vunpack.c.l.bf16 %v325
    %v342 = vunpack.c.l.bf16 %v326
    %v343 = vunpack.c.l.bf16 %v327
    %v344 = vunpack.c.l.bf16 %v328
    %v345 = vadd.f32 %v297, %v329
    %v346 = vadd.f32 %v298, %v330
    %v347 = vadd.f32 %v299, %v331
    %v348 = vadd.f32 %v300, %v332
    %v349 = vadd.f32 %v301, %v333
    %v350 = vadd.f32 %v302, %v334
    %v351 = vadd.f32 %v303, %v335
    %v352 = vadd.f32 %v304, %v336
    %v353 = vadd.f32 %v305, %v337
    %v354 = vadd.f32 %v306, %v338
    %v355 = vadd.f32 %v307, %v339
    %v356 = vadd.f32 %v308, %v340
    %v357 = vadd.f32 %v309, %v341
    %v358 = vadd.f32 %v310, %v342
    %v359 = vadd.f32 %v311, %v343
    %v360 = vadd.f32 %v312, %v344
    %v361 = vmax.f32 %v345, 0.0
    %v362 = vmax.f32 %v346, 0.0
    %v363 = vmax.f32 %v347, 0.0
    %v364 = vmax.f32 %v348, 0.0
    %v365 = vmax.f32 %v349, 0.0
    %v366 = vmax.f32 %v350, 0.0
    %v367 = vmax.f32 %v351, 0.0
    %v368 = vmax.f32 %v352, 0.0
    %v369 = vmax.f32 %v353, 0.0
    %v370 = vmax.f32 %v354, 0.0
    %v371 = vmax.f32 %v355, 0.0
    %v372 = vmax.f32 %v356, 0.0
    %v373 = vmax.f32 %v357, 0.0
    %v374 = vmax.f32 %v358, 0.0
    %v375 = vmax.f32 %v359, 0.0
    %v376 = vmax.f32 %v360, 0.0
    %v377 = vpack.c.bf16 %v362, %v361
    %v378 = vpack.c.bf16 %v364, %v363
    %v379 = vpack.c.bf16 %v366, %v365
    %v380 = vpack.c.bf16 %v368, %v367
    %v381 = vpack.c.bf16 %v370, %v369
    %v382 = vpack.c.bf16 %v372, %v371
    %v383 = vpack.c.bf16 %v374, %v373
    %v384 = vpack.c.bf16 %v376, %v375
    %v393 = vunpack.c.l.b16 %v377
    %v394 = vunpack.c.h.b16 %v377
    %v395 = vunpack.c.l.b16 %v378
    %v396 = vunpack.c.h.b16 %v378
    %v397 = vunpack.c.l.b16 %v379
    %v398 = vunpack.c.h.b16 %v379
    %v399 = vunpack.c.l.b16 %v380
    %v400 = vunpack.c.h.b16 %v380
    %v401 = vunpack.c.l.b16 %v381
    %v402 = vunpack.c.h.b16 %v381
    %v403 = vunpack.c.l.b16 %v382
    %v404 = vunpack.c.h.b16 %v382
    %v405 = vunpack.c.l.b16 %v383
    %v406 = vunpack.c.h.b16 %v383
    %v407 = vunpack.c.l.b16 %v384
    %v408 = vunpack.c.h.b16 %v384
    %v409 = vpack.c.b16 %v393, %v393
    %v410 = vpack.c.b16 %v394, %v394
    %v411 = vpack.c.b16 %v395, %v395
    %v412 = vpack.c.b16 %v396, %v396
    %v413 = vpack.c.b16 %v397, %v397
    %v414 = vpack.c.b16 %v398, %v398
    %v415 = vpack.c.b16 %v399, %v399
    %v416 = vpack.c.b16 %v400, %v400
    %v417 = vpack.c.b16 %v401, %v401
    %v418 = vpack.c.b16 %v402, %v402
    %v419 = vpack.c.b16 %v403, %v403
    %v420 = vpack.c.b16 %v404, %v404
    %v421 = vpack.c.b16 %v405, %v405
    %v422 = vpack.c.b16 %v406, %v406
    %v423 = vpack.c.b16 %v407, %v407
    %v424 = vpack.c.b16 %v408, %v408
    %vm441 = vcmask 125952
    %442 = vst.msk [vmem:[%s4] sm:$0xf] %vm441, %v409
    %443 = vst.msk [vmem:[%s4 + $0x4] sm:$0xf] %vm441, %v410
    %444 = vst.msk [vmem:[%s4 + $0x8] sm:$0xf] %vm441, %v411
    %445 = vst.msk [vmem:[%s4 + $0xc] sm:$0xf] %vm441, %v412
    %446 = vst.msk [vmem:[%s4 + $0x10] sm:$0xf] %vm441, %v413
    %447 = vst.msk [vmem:[%s4 + $0x14] sm:$0xf] %vm441, %v414
    %448 = vst.msk [vmem:[%s4 + $0x18] sm:$0xf] %vm441, %v415
    %449 = vst.msk [vmem:[%s4 + $0x1c] sm:$0xf] %vm441, %v416
    %450 = vst.msk [vmem:[%s4 + $0x20] sm:$0xf] %vm441, %v417
    %451 = vst.msk [vmem:[%s4 + $0x24] sm:$0xf] %vm441, %v418
    %452 = vst.msk [vmem:[%s4 + $0x28] sm:$0xf] %vm441, %v419
    %453 = vst.msk [vmem:[%s4 + $0x2c] sm:$0xf] %vm441, %v420
    %454 = vst.msk [vmem:[%s4 + $0x30] sm:$0xf] %vm441, %v421
    %455 = vst.msk [vmem:[%s4 + $0x34] sm:$0xf] %vm441, %v422
    %456 = vst.msk [vmem:[%s4 + $0x38] sm:$0xf] %vm441, %v423
    %457 = vst.msk [vmem:[%s4 + $0x3c] sm:$0xf] %vm441, %v424
  $region25: #{conv_block_forward.7} parent=0 // pred_fallthru
    _
  // Predicated region
  $region26: #{conv_block_forward.7} parent=0 // pred_check
    _
  $region27: #{conv_block_forward.7} parent=0 // pred_check_branch
    %459 = sbr.rel (0) target = $region29
  $region28: #{conv_block_forward.7} parent=0 // pred_region
    _
  $region29: #{conv_block_forward.7} parent=0 // pred_fallthru
    _
  // Predicated region
  $region30: #{conv_block_forward.7} parent=0 // pred_check
    _
  $region31: #{conv_block_forward.7} parent=0 // pred_check_branch
    %461 = sbr.rel (0) target = $region33
  $region32: #{conv_block_forward.7} parent=0 // pred_region
    _
  $region33: #{conv_block_forward.7} parent=0 // pred_fallthru
    _

// kernel: conv_block_forward.5
$region0: #{conv_block_forward.5}
  #allocation0 [shape = 'u32[]', space=smem, size = 0x4, offset = 0x4, fixed_abs, tag = 'smem constant byte address 0x4 - core index']
  #allocation1 [shape = 'u32[144,128]{1,0:T(1,128)}', space=vmem, size = 0x12000, scoped, tag = 'internal scratch']
  #allocation2 [shape = 'f32[64,4]{1,0:T(8,128)}', space=vmem, size = 0x8000, scoped, tag = 'scratch operand']
  %s0 = inlined_call_operand.vmem [shape: bf16[2,9,2,9,8], index: 0, kind: input, shape index: {}]
  %s1 = inlined_call_operand.vmem [shape: bf16[3,8,4], index: 1, kind: input, shape index: {}]
  %s2 = inlined_call_operand.vmem [shape: bf16[3,1,4,4], index: 2, kind: input, shape index: {}]
  %s3 = inlined_call_operand.vmem [shape: f32[1,4], index: 3, kind: input, shape index: {}]
  %s4 = inlined_call_operand.vmem [shape: bf16[2,8,8,4], index: 4, kind: output, shape index: {}]
  %s5 = sld [smem:[#allocation0]]
  $region49: #{conv_block_forward.5} parent=0
    _
  %s7 = ssub.s32 1, %s5
  %s8 = scalar_select 0, %s7, %s5
  loop: start=0, step=1, limit=4
  $region2: #{conv_block_forward.5} parent=0 // loop_pre_header
    _
  $region3: #{conv_block_forward.5} parent=0 // loop_header
    %s10 = sphi 0, %s14
    %p11 = scmp.ge.s32.totalorder %s10, 4
    %s17 = sphi 0, %s29
    %s18 = sphi 0, %s25
    %s19 = sphi 0, %s17
    %s20 = sphi 0, %s18
    %s21 = sphi 0, %s19
    %s22 = sphi 0, %s20
    %s32 = sphi 0, %s34
    %s35 = sphi 0, %s32
    %s36 = sphi 0, %s35
    %s52 = sphi 0, %s36
    %s56 = sphi 0, %s56
    %s58 = sphi 0, %s56
    %s59 = sphi 0, %s58
    %s73 = sphi 0, %s59
    %s77 = sphi 0, %s77
    %s79 = sphi 0, %s77
    %s80 = sphi 0, %s79
    %s94 = sphi 0, %s80
    %s98 = sphi 0, %s98
    %s100 = sphi 0, %s98
    %s101 = sphi 0, %s100
    %s115 = sphi 0, %s101
    %s123 = sphi 0, %s125
    %s126 = sphi 0, %s123
    %s127 = sphi 0, %s126
    %s143 = sphi 0, %s127
  $region4: #{conv_block_forward.5} parent=0 // loop_header_branch
    %13 = sbr.rel (%p11) target = $region8
  $region5: #{conv_block_forward.5} parent=0 // loop_body
    %s15 = ssub.s32 %s10, 1
    %s16 = ssub.s32 %s10, 2
    %s23 = sadd.s32 1, %s18
    %p24 = scmp.ge.s32.totalorder %s23, 1
    %s25 = scalar_select %p24, 0, %s23
    %s26 = sadd.s32 1, %s17
    %s27 = scalar_select %p24, %s26, %s17
    %p28 = scmp.ge.s32.totalorder %s27, 2
    %s29 = scalar_select %p28, 0, %s27
    %s30 = ssub.s32 %s17, %s29
    %p31 = scmp.eq.s32.totalorder %s30, 0
    %s33 = sadd.s32 %s32, 1
    %s34 = scalar_select %p31, %s32, %s33
    %p37 = pneg %p31
    %p38 = scmp.eq.s32.totalorder %s10, 1
    %p39 = por %p37, %p38
    %p40 = scmp.ne.s32.totalorder %s32, %s35
    %p41 = scmp.eq.s32.totalorder %s10, 0
    %p42 = por %p40, %p41
    %p43 = scmp.ne.s32.totalorder %s32, %s35
    %p44 = scmp.eq.s32.totalorder %s15, 1
    %p45 = por %p43, %p44
    %p46 = scmp.ne.s32.totalorder %s35, %s36
    %p47 = scmp.eq.s32.totalorder %s15, 0
    %p48 = por %p46, %p47
    %p49 = scmp.ne.s32.totalorder %s35, %s36
    %p50 = scmp.eq.s32.totalorder %s16, 1
    %p51 = por %p49, %p50
    %p53 = scmp.ne.s32.totalorder %s36, %s52
    %p54 = scmp.eq.s32.totalorder %s16, 0
    %p55 = por %p53, %p54
    %s57 = sadd.s32 %s56, 1
    %p60 = scmp.eq.s32.totalorder %s10, 1
    %p61 = scmp.ne.s32.totalorder %s56, %s58
    %p62 = scmp.eq.s32.totalorder %s10, 0
    %p63 = por %p61, %p62
    %p64 = scmp.ne.s32.totalorder %s56, %s58
    %p65 = scmp.eq.s32.totalorder %s15, 1
    %p66 = por %p64, %p65
    %p67 = scmp.ne.s32.totalorder %s58, %s59
    %p68 = scmp.eq.s32.totalorder %s15, 0
    %p69 = por %p67, %p68
    %p70 = scmp.ne.s32.totalorder %s58, %s59
    %p71 = scmp.eq.s32.totalorder %s16, 1
    %p72 = por %p70, %p71
    %p74 = scmp.ne.s32.totalorder %s59, %s73
    %p75 = scmp.eq.s32.totalorder %s16, 0
    %p76 = por %p74, %p75
    %s78 = sadd.s32 %s77, 1
    %p81 = scmp.eq.s32.totalorder %s10, 1
    %p82 = scmp.ne.s32.totalorder %s77, %s79
    %p83 = scmp.eq.s32.totalorder %s10, 0
    %p84 = por %p82, %p83
    %p85 = scmp.ne.s32.totalorder %s77, %s79
    %p86 = scmp.eq.s32.totalorder %s15, 1
    %p87 = por %p85, %p86
    %p88 = scmp.ne.s32.totalorder %s79, %s80
    %p89 = scmp.eq.s32.totalorder %s15, 0
    %p90 = por %p88, %p89
    %p91 = scmp.ne.s32.totalorder %s79, %s80
    %p92 = scmp.eq.s32.totalorder %s16, 1
    %p93 = por %p91, %p92
    %p95 = scmp.ne.s32.totalorder %s80, %s94
    %p96 = scmp.eq.s32.totalorder %s16, 0
    %p97 = por %p95, %p96
    %s99 = sadd.s32 %s98, 1
    %p102 = scmp.eq.s32.totalorder %s10, 1
    %p103 = scmp.ne.s32.totalorder %s98, %s100
    %p104 = scmp.eq.s32.totalorder %s10, 0
    %p105 = por %p103, %p104
    %p106 = scmp.ne.s32.totalorder %s98, %s100
    %p107 = scmp.eq.s32.totalorder %s15, 1
    %p108 = por %p106, %p107
    %p109 = scmp.ne.s32.totalorder %s100, %s101
    %p110 = scmp.eq.s32.totalorder %s15, 0
    %p111 = por %p109, %p110
    %p112 = scmp.ne.s32.totalorder %s100, %s101
    %p113 = scmp.eq.s32.totalorder %s16, 1
    %p114 = por %p112, %p113
    %p116 = scmp.ne.s32.totalorder %s101, %s115
    %p117 = scmp.eq.s32.totalorder %s16, 0
    %p118 = por %p116, %p117
    %s119 = ssub.s32 %s17, %s29
    %s120 = ssub.s32 %s18, %s25
    %s121 = sor.u32 %s119, %s120
    %p122 = scmp.eq.s32.totalorder %s121, 0
    %s124 = sadd.s32 %s123, 1
    %s125 = scalar_select %p122, %s123, %s124
    %p128 = pneg %p122
    %p129 = scmp.eq.s32.totalorder %s10, 1
    %p130 = por %p128, %p129
    %p131 = scmp.ne.s32.totalorder %s123, %s126
    %p132 = scmp.eq.s32.totalorder %s10, 0
    %p133 = por %p131, %p132
    %p134 = scmp.ne.s32.totalorder %s123, %s126
    %p135 = scmp.eq.s32.totalorder %s15, 1
    %p136 = por %p134, %p135
    %p137 = scmp.ne.s32.totalorder %s126, %s127
    %p138 = scmp.eq.s32.totalorder %s15, 0
    %p139 = por %p137, %p138
    %p140 = scmp.ne.s32.totalorder %s126, %s127
    %p141 = scmp.eq.s32.totalorder %s16, 1
    %p142 = por %p140, %p141
    %p144 = scmp.ne.s32.totalorder %s127, %s143
    %p145 = scmp.eq.s32.totalorder %s16, 0
    %p146 = por %p144, %p145
    %p147 = scmp.le.s32.totalorder 1, %s10
    %p148 = scmp.lt.s32.totalorder %s10, 3
    %p149 = pnand %p147, %p148
    %p150 = pneg %p149
    // Predicated region
    $region9: #{conv_block_forward.5} parent=5 // pred_check
      _
    $region10: #{conv_block_forward.5} parent=5 // pred_check_branch
      %152 = sbr.rel (%p149) target = $region12
    $region11: #{conv_block_forward.5} parent=5 // pred_region
      %s153 = ssub.s32 %s10, 1
      // Predicated region
      $region13: #{conv_block_forward.5} parent=11 // pred_check
        %p154 = pneg %p69
      $region14: #{conv_block_forward.5} parent=11 // pred_check_branch
        %156 = sbr.rel (%p154) target = $region16
      $region15: #{conv_block_forward.5} parent=11 // pred_region
        _
      $region16: #{conv_block_forward.5} parent=11 // pred_fallthru
        _
      // Predicated region
      $region17: #{conv_block_forward.5} parent=11 // pred_check
        %p157 = pneg %p90
      $region18: #{conv_block_forward.5} parent=11 // pred_check_branch
        %159 = sbr.rel (%p157) target = $region20
      $region19: #{conv_block_forward.5} parent=11 // pred_region
        _
      $region20: #{conv_block_forward.5} parent=11 // pred_fallthru
        _
      // Predicated region
      $region21: #{conv_block_forward.5} parent=11 // pred_check
        %p160 = pneg %p111
      $region22: #{conv_block_forward.5} parent=11 // pred_check_branch
        %162 = sbr.rel (%p160) target = $region24
      $region23: #{conv_block_forward.5} parent=11 // pred_region
        _
      $region24: #{conv_block_forward.5} parent=11 // pred_fallthru
        _
    $region12: #{conv_block_forward.5} parent=5 // pred_fallthru
      _
    %p163 = scmp.lt.s32.totalorder %s10, 2
    // Predicated region
    $region25: #{conv_block_forward.5} parent=5 // pred_check
      %p164 = pneg %p163
    $region26: #{conv_block_forward.5} parent=5 // pred_check_branch
      %166 = sbr.rel (%p164) target = $region28
    $region27: #{conv_block_forward.5} parent=5 // pred_region
      // Predicated region
      $region29: #{conv_block_forward.5} parent=27 // pred_check
        %p167 = pneg %p42
      $region30: #{conv_block_forward.5} parent=27 // pred_check_branch
        %169 = sbr.rel (%p167) target = $region32
      $region31: #{conv_block_forward.5} parent=27 // pred_region
        %p170 = scmp.lt.s32.totalorder %s17, 1
        %s171 = scalar_select %p170, %s17, 1
        %s172 = smul.addr %s171, 36
        %s173 = smul.addr %s172, 4
        %s174 = scalar_lea.vmem %s0, %s173
      $region32: #{conv_block_forward.5} parent=27 // pred_fallthru
        _
    $region28: #{conv_block_forward.5} parent=5 // pred_fallthru
      _
    %p175 = scmp.le.s32.totalorder 1, %s10
    %p176 = scmp.lt.s32.totalorder %s10, 3
    %p177 = pnand %p175, %p176
    %p178 = pneg %p177
    // Predicated region
    $region33: #{conv_block_forward.5} parent=5 // pred_check
      _
    $region34: #{conv_block_forward.5} parent=5 // pred_check_branch
      %180 = sbr.rel (%p177) target = $region36
    $region35: #{conv_block_forward.5} parent=5 // pred_region
      %s181 = ssub.s32 %s10, 1
      %p182 = scmp.lt.s32.totalorder %s19, 1
      %s183 = scalar_select %p182, %s19, 1
      %s184 = smul.addr %s183, 36
      %s185 = smul.addr %s184, 4
      %s186 = scalar_lea.vmem %s0, %s185
      %p187 = pneg %p48
      %p188 = pneg %p45
      %p189 = pneg %p69
      %p190 = pneg %p66
      %p191 = pneg %p90
      %p192 = pneg %p87
      %p193 = pneg %p111
      %p194 = pneg %p108
      %p195 = pneg %p139
      %p196 = pneg %p136
      %s197 = smul.u32 8, %s20
      %p198 = scmp.lt.s32.totalorder %s19, 1
      %s199 = scalar_select %p198, %s19, 1
      %p200 = scmp.lt.s32.totalorder %s197, 7
      %s201 = scalar_select %p200, %s197, 7
      %s202 = smul.addr %s199, 8
      %s203 = sadd.s32 %s201, %s202
      %s204 = smul.addr %s203, 4
      %s205 = scalar_lea.vmem %s4, %s204
      %p206 = scmp.lt.s32.totalorder %s19, 1
      %s207 = scalar_select %p206, %s19, 1
      %s208 = smul.addr %s207, 36
      %s209 = smul.addr %s208, 4
      %s210 = scalar_lea.vmem %s0, %s209
      %s211 = smul.u32 8, %s20
      %p212 = scmp.lt.s32.totalorder %s19, 1
      %s213 = scalar_select %p212, %s19, 1
      %p214 = scmp.lt.s32.totalorder %s211, 7
      %s215 = scalar_select %p214, %s211, 7
      %s216 = smul.addr %s213, 8
      %s217 = sadd.s32 %s215, %s216
      %s218 = smul.addr %s217, 4
      %s219 = scalar_lea.vmem %s4, %s218
      %s220 = smul.u32 8, %s20
      %s222 = smul.u32 %s20, 8
      %vm223 = vcmask 31744
      %224 = vst.msk [vmem:[#allocation2] sm:$0xff] %vm223, 0.0
      %225 = vst.msk [vmem:[#allocation2 + $0x8] sm:$0xff] %vm223, 0.0
      %226 = vst.msk [vmem:[#allocation2 + $0x10] sm:$0xff] %vm223, 0.0
      %227 = vst.msk [vmem:[#allocation2 + $0x18] sm:$0xff] %vm223, 0.0
      %228 = vst.msk [vmem:[#allocation2 + $0x20] sm:$0xff] %vm223, 0.0
      %229 = vst.msk [vmem:[#allocation2 + $0x28] sm:$0xff] %vm223, 0.0
      %230 = vst.msk [vmem:[#allocation2 + $0x30] sm:$0xff] %vm223, 0.0
      %231 = vst.msk [vmem:[#allocation2 + $0x38] sm:$0xff] %vm223, 0.0
      %s232 = smul.u32 %s222, 4
      %s233 = smul.addr %s232, 4
      %s234 = scalar_lea.vmem %s210, %s233
      %v235 = vld [vmem:[%s234] sm:$0xf]
      %v236 = vld [vmem:[%s234 + $0x10] sm:$0xf]
      %v237 = vld [vmem:[%s234 + $0x20] sm:$0xf]
      %v238 = vld [vmem:[%s234 + $0x30] sm:$0xf]
      %v239 = vld [vmem:[%s234 + $0x40] sm:$0xf]
      %v240 = vld [vmem:[%s234 + $0x50] sm:$0xf]
      %v241 = vld [vmem:[%s234 + $0x60] sm:$0xf]
      %v242 = vld [vmem:[%s234 + $0x70] sm:$0xf]
      %v243 = vld [vmem:[#allocation2] sm:$0xff]
      %v244 = vld [vmem:[#allocation2 + $0x8] sm:$0xff]
      %v245 = vld [vmem:[#allocation2 + $0x10] sm:$0xff]
      %v246 = vld [vmem:[#allocation2 + $0x18] sm:$0xff]
      %v247 = vld [vmem:[#allocation2 + $0x20] sm:$0xff]
      %v248 = vld [vmem:[#allocation2 + $0x28] sm:$0xff]
      %v249 = vld [vmem:[#allocation2 + $0x30] sm:$0xff]
      %v250 = vld [vmem:[#allocation2 + $0x38] sm:$0xff]
      %v251 = vld [vmem:[%s1] sm:$0xf]
      %v260 = vunpack.c.l.b16 %v235
      %v261 = vunpack.c.l.b16 %v236
      %v262 = vunpack.c.l.b16 %v237
      %v263 = vunpack.c.l.b16 %v238
      %v264 = vunpack.c.l.b16 %v239
      %v265 = vunpack.c.l.b16 %v240
      %v266 = vunpack.c.l.b16 %v241
      %v267 = vunpack.c.l.b16 %v242
      %v268 = vpack.c.b16 %v261, %v260
      %v269 = vpack.c.b16 %v263, %v262
      %v270 = vpack.c.b16 %v265, %v264
      %v271 = vpack.c.b16 %v267, %v266
      %vm272 = vcmask 64512
      %v274 = vsel %vm272, %v268, 0
      %v277 = vsel %vm272, %v269, 0
      %v280 = vsel %vm272, %v270, 0
      %v283 = vsel %vm272, %v271, 0
      %vm285 = vcmask 1043456
      %v287 = vsel %vm285, %v251, 0
      %289 = vmatprep.subr.bf16.mxu0 0
      %290 = vmatpush1.bf16.msra.mxu0 %v287
      %291 = vmatprep.subr.bf16.mxu0 0
      %292 = vmatpush1.bf16.msra.mxu0 0
      %293 = vmatprep.subr.bf16.mxu0 0
      %294 = vmatpush1.bf16.msra.mxu0 0
      %295 = vmatprep.subr.bf16.mxu0 0
      %296 = vmatpush1.bf16.msra.mxu0 0
      %297 = vmatprep.subr.bf16.mxu0 0
      %298 = vmatpush1.bf16.msra.mxu0 0
      %299 = vmatprep.subr.bf16.mxu0 0
      %300 = vmatpush1.bf16.msra.mxu0 0
      %301 = vmatprep.subr.bf16.mxu0 0
      %302 = vmatpush1.bf16.msra.mxu0 0
      %303 = vmatprep.subr.bf16.mxu0 0
      %304 = vmatpush1.bf16.msra.mxu0 0
      %305 = vmatprep.subr.bf16.mxu0 0
      %306 = vmatpush1.bf16.msra.mxu0 0
      %307 = vmatprep.subr.bf16.mxu0 0
      %308 = vmatpush1.bf16.msra.mxu0 0
      %309 = vmatprep.subr.bf16.mxu0 0
      %310 = vmatpush1.bf16.msra.mxu0 0
      %311 = vmatprep.subr.bf16.mxu0 0
      %312 = vmatpush1.bf16.msra.mxu0 0
      %313 = vmatprep.subr.bf16.mxu0 0
      %314 = vmatpush1.bf16.msra.mxu0 0
      %315 = vmatprep.subr.bf16.mxu0 0
      %316 = vmatpush1.bf16.msra.mxu0 0
      %317 = vmatprep.subr.bf16.mxu0 0
      %318 = vmatpush1.bf16.msra.mxu0 0
      %319 = vmatprep.subr.bf16.mxu0 0
      %320 = vmatpush1.bf16.msra.mxu0 0
      %321 = vmatprep.mubr.bf16.mxu0 0
      %322 = vmatmul.mubr.bf16.gmra.mrb[0].mxu0 %v274
      %v323 = vpop.f32.mrb[0].mxu0
      %v324 = vadd.f32 0.0, %v323
      %v325 = vpop.f32.mrb[0].mxu0
      %v326 = vpop.f32.mrb[0].mxu0
      %v327 = vadd.f32 0.0, %v326
      %v328 = vpop.f32.mrb[0].mxu0
      %329 = vmatprep.mubr.bf16.mxu0 0
      %330 = vmatmul.mubr.bf16.gmra.mrb[0].mxu0 %v277
      %v331 = vpop.f32.mrb[0].mxu0
      %v332 = vadd.f32 0.0, %v331
      %v333 = vpop.f32.mrb[0].mxu0
      %v334 = vpop.f32.mrb[0].mxu0
      %v335 = vadd.f32 0.0, %v334
      %v336 = vpop.f32.mrb[0].mxu0
      %337 = vmatprep.mubr.bf16.mxu0 0
      %338 = vmatmul.mubr.bf16.gmra.mrb[0].mxu0 %v280
      %v339 = vpop.f32.mrb[0].mxu0
      %v340 = vadd.f32 0.0, %v339
      %v341 = vpop.f32.mrb[0].mxu0
      %v342 = vpop.f32.mrb[0].mxu0
      %v343 = vadd.f32 0.0, %v342
      %v344 = vpop.f32.mrb[0].mxu0
      %345 = vmatprep.mubr.bf16.mxu0 0
      %346 = vmatmul.mubr.bf16.gmra.mrb[0].mxu0 %v283
      %v347 = vpop.f32.mrb[0].mxu0
      %v348 = vadd.f32 0.0, %v347
      %v349 = vpop.f32.mrb[0].mxu0
      %v350 = vpop.f32.mrb[0].mxu0
      %v351 = vadd.f32 0.0, %v350
      %v352 = vpop.f32.mrb[0].mxu0
      %353 = vdwg.mxu0
      %v354 = vadd.f32 %v243, %v324
      %v355 = vadd.f32 %v244, %v327
      %v356 = vadd.f32 %v245, %v332
      %v357 = vadd.f32 %v246, %v335
      %v358 = vadd.f32 %v247, %v340
      %v359 = vadd.f32 %v248, %v343
      %v360 = vadd.f32 %v249, %v348
      %v361 = vadd.f32 %v250, %v351
      %362 = vst.msk [vmem:[#allocation2] sm:$0xff] %vm223, %v354
      %363 = vst.msk [vmem:[#allocation2 + $0x8] sm:$0xff] %vm223, %v355
      %364 = vst.msk [vmem:[#allocation2 + $0x10] sm:$0xff] %vm223, %v356
      %365 = vst.msk [vmem:[#allocation2 + $0x18] sm:$0xff] %vm223, %v357
      %366 = vst.msk [vmem:[#allocation2 + $0x20] sm:$0xff] %vm223, %v358
      %367 = vst.msk [vmem:[#allocation2 + $0x28] sm:$0xff] %vm223, %v359
      %368 = vst.msk [vmem:[#allocation2 + $0x30] sm:$0xff] %vm223, %v360
      %369 = vst.msk [vmem:[#allocation2 + $0x38] sm:$0xff] %vm223, %v361
      %v370 = vld [vmem:[%s234] sm:$0xf]
      %v371 = vld [vmem:[%s234 + $0x4] sm:$0x1]
      %v372 = vld [vmem:[%s234 + $0x10] sm:$0xf]
      %v373 = vld [vmem:[%s234 + $0x14] sm:$0x1]
      %v374 = vld [vmem:[%s234 + $0x20] sm:$0xf]
      %v375 = vld [vmem:[%s234 + $0x24] sm:$0x1]
      %v376 = vld [vmem:[%s234 + $0x30] sm:$0xf]
      %v377 = vld [vmem:[%s234 + $0x34] sm:$0x1]
      %v378 = vld [vmem:[%s234 + $0x40] sm:$0xf]
      %v379 = vld [vmem:[%s234 + $0x44] sm:$0x1]
      %v380 = vld [vmem:[%s234 + $0x50] sm:$0xf]
      %v381 = vld [vmem:[%s234 + $0x54] sm:$0x1]
      %v382 = vld [vmem:[%s234 + $0x60] sm:$0xf]
      %v383 = vld [vmem:[%s234 + $0x64] sm:$0x1]
      %v384 = vld [vmem:[%s234 + $0x70] sm:$0xf]
      %v385 = vld [vmem:[%s234 + $0x74] sm:$0x1]
      %v386 = vld [vmem:[#allocation2] sm:$0xff]
      %v387 = vld [vmem:[#allocation2 + $0x8] sm:$0xff]
      %v388 = vld [vmem:[#allocation2 + $0x10] sm:$0xff]
      %v389 = vld [vmem:[#allocation2 + $0x18] sm:$0xff]
      %v390 = vld [vmem:[#allocation2 + $0x20] sm:$0xff]
      %v391 = vld [vmem:[#allocation2 + $0x28] sm:$0xff]
      %v392 = vld [vmem:[#allocation2 + $0x30] sm:$0xff]
      %v393 = vld [vmem:[#allocation2 + $0x38] sm:$0xff]
      %vm394 = vsmask.f32 3328
      %vm395 = vsmask.f32 7440
      %vm396 = vmor %vm394, %vm395
      %v398 = vshrl.u32 %v370, 16
      %v400 = vrot.slane %v398, 4
      %v401 = vshll.u32 %v370, 16
      %v403 = vrot.slane %v401, 5
      %v404 = vor.u32 %v400, %v403
      %v405 = vrot.slane %v404, 4
      %v407 = vshll.u32 %v371, 16
      %v409 = vrot.slane %v407, 5
      %v410 = vsel %vm396, %v405, %v409
      %v412 = vshrl.u32 %v372, 16
      %v414 = vrot.slane %v412, 4
      %v415 = vshll.u32 %v372, 16
      %v417 = vrot.slane %v415, 5
      %v418 = vor.u32 %v414, %v417
      %v419 = vrot.slane %v418, 4
      %v421 = vshll.u32 %v373, 16
      %v423 = vrot.slane %v421, 5
      %v424 = vsel %vm396, %v419, %v423
      %v426 = vshrl.u32 %v374, 16
      %v428 = vrot.slane %v426, 4
      %v429 = vshll.u32 %v374, 16
      %v431 = vrot.slane %v429, 5
      %v432 = vor.u32 %v428, %v431
      %v433 = vrot.slane %v432, 4
      %v435 = vshll.u32 %v375, 16
      %v437 = vrot.slane %v435, 5
      %v438 = vsel %vm396, %v433, %v437
      %v440 = vshrl.u32 %v376, 16
      %v442 = vrot.slane %v440, 4
      %v443 = vshll.u32 %v376, 16
      %v445 = vrot.slane %v443, 5
      %v446 = vor.u32 %v442, %v445
      %v447 = vrot.slane %v446, 4
      %v449 = vshll.u32 %v377, 16
      %v451 = vrot.slane %v449, 5
      %v452 = vsel %vm396, %v447, %v451
      %v454 = vshrl.u32 %v378, 16
      %v456 = vrot.slane %v454, 4
      %v457 = vshll.u32 %v378, 16
      %v459 = vrot.slane %v457, 5
      %v460 = vor.u32 %v456, %v459
      %v461 = vrot.slane %v460, 4
      %v463 = vshll.u32 %v379, 16
      %v465 = vrot.slane %v463, 5
      %v466 = vsel %vm396, %v461, %v465
      %v468 = vshrl.u32 %v380, 16
      %v470 = vrot.slane %v468, 4
      %v471 = vshll.u32 %v380, 16
      %v473 = vrot.slane %v471, 5
      %v474 = vor.u32 %v470, %v473
      %v475 = vrot.slane %v474, 4
      %v477 = vshll.u32 %v381, 16
      %v479 = vrot.slane %v477, 5
      %v480 = vsel %vm396, %v475, %v479
      %v482 = vshrl.u32 %v382, 16
      %v484 = vrot.slane %v482, 4
      %v485 = vshll.u32 %v382, 16
      %v487 = vrot.slane %v485, 5
      %v488 = vor.u32 %v484, %v487
      %v489 = vrot.slane %v488, 4
      %v491 = vshll.u32 %v383, 16
      %v493 = vrot.slane %v491, 5
      %v494 = vsel %vm396, %v489, %v493
      %v496 = vshrl.u32 %v384, 16
      %v498 = vrot.slane %v496, 4
      %v499 = vshll.u32 %v384, 16
      %v501 = vrot.slane %v499, 5
      %v502 = vor.u32 %v498, %v501
      %v503 = vrot.slane %v502, 4
      %v505 = vshll.u32 %v385, 16
      %v507 = vrot.slane %v505, 5
      %v508 = vsel %vm396, %v503, %v507
      %v509 = vld [vmem:[%s2] sm:$0x3]
      %v510 = vunpack.c.l.b16 %v410
      %v511 = vunpack.c.l.b16 %v424
      %v512 = vunpack.c.l.b16 %v438
      %v513 = vunpack.c.l.b16 %v452
      %v514 = vunpack.c.l.b16 %v466
      %v515 = vunpack.c.l.b16 %v480
      %v516 = vunpack.c.l.b16 %v494
      %v517 = vunpack.c.l.b16 %v508
      %v518 = vpack.c.b16 %v511, %v510
      %v519 = vpack.c.b16 %v513, %v512
      %v520 = vpack.c.b16 %v515, %v514
      %v521 = vpack.c.b16 %v517, %v516
      %v523 = vsel %vm223, %v518, 0
      %v526 = vsel %vm223, %v519, 0
      %v529 = vsel %vm223, %v520, 0
      %v532 = vsel %vm223, %v521, 0
      %vm534 = vcmask 1041408
      %v536 = vsel %vm534, %v509, 0
      %538 = vmatprep.subr.bf16.mxu0 0
      %539 = vmatpush1.bf16.msra.mxu0 %v536
      %540 = vmatprep.subr.bf16.mxu0 0
      %541 = vmatpush1.bf16.msra.mxu0 0
      %542 = vmatprep.subr.bf16.mxu0 0
      %543 = vmatpush1.bf16.msra.mxu0 0
      %544 = vmatprep.subr.bf16.mxu0 0
      %545 = vmatpush1.bf16.msra.mxu0 0
      %546 = vmatprep.subr.bf16.mxu0 0
      %547 = vmatpush1.bf16.msra.mxu0 0
      %548 = vmatprep.subr.bf16.mxu0 0
      %549 = vmatpush1.bf16.msra.mxu0 0
      %550 = vmatprep.subr.bf16.mxu0 0
      %551 = vmatpush1.bf16.msra.mxu0 0
      %552 = vmatprep.subr.bf16.mxu0 0
      %553 = vmatpush1.bf16.msra.mxu0 0
      %554 = vmatprep.subr.bf16.mxu0 0
      %555 = vmatpush1.bf16.msra.mxu0 0
      %556 = vmatprep.subr.bf16.mxu0 0
      %557 = vmatpush1.bf16.msra.mxu0 0
      %558 = vmatprep.subr.bf16.mxu0 0
      %559 = vmatpush1.bf16.msra.mxu0 0
      %560 = vmatprep.subr.bf16.mxu0 0
      %561 = vmatpush1.bf16.msra.mxu0 0
      %562 = vmatprep.subr.bf16.mxu0 0
      %563 = vmatpush1.bf16.msra.mxu0 0
      %564 = vmatprep.subr.bf16.mxu0 0
      %565 = vmatpush1.bf16.msra.mxu0 0
      %566 = vmatprep.subr.bf16.mxu0 0
      %567 = vmatpush1.bf16.msra.mxu0 0
      %568 = vmatprep.subr.bf16.mxu0 0
      %569 = vmatpush1.bf16.msra.mxu0 0
      %570 = vmatprep.mubr.bf16.mxu0 0
      %571 = vmatmul.mubr.bf16.gmra.mrb[0].mxu0 %v523
      %v572 = vpop.f32.mrb[0].mxu0
      %v573 = vadd.f32 0.0, %v572
      %v574 = vpop.f32.mrb[0].mxu0
      %v575 = vpop.f32.mrb[0].mxu0
      %v576 = vadd.f32 0.0, %v575
      %v577 = vpop.f32.mrb[0].mxu0
      %578 = vmatprep.mubr.bf16.mxu0 0
      %579 = vmatmul.mubr.bf16.gmra.mrb[0].mxu0 %v526
      %v580 = vpop.f32.mrb[0].mxu0
      %v581 = vadd.f32 0.0, %v580
      %v582 = vpop.f32.mrb[0].mxu0
      %v583 = vpop.f32.mrb[0].mxu0
      %v584 = vadd.f32 0.0, %v583
      %v585 = vpop.f32.mrb[0].mxu0
      %586 = vmatprep.mubr.bf16.mxu0 0
      %587 = vmatmul.mubr.bf16.gmra.mrb[0].mxu0 %v529
      %v588 = vpop.f32.mrb[0].mxu0
      %v589 = vadd.f32 0.0, %v588
      %v590 = vpop.f32.mrb[0].mxu0
      %v591 = vpop.f32.mrb[0].mxu0
      %v592 = vadd.f32 0.0, %v591
      %v593 = vpop.f32.mrb[0].mxu0
      %594 = vmatprep.mubr.bf16.mxu0 0
      %595 = vmatmul.mubr.bf16.gmra.mrb[0].mxu0 %v532
      %v596 = vpop.f32.mrb[0].mxu0
      %v597 = vadd.f32 0.0, %v596
      %v598 = vpop.f32.mrb[0].mxu0
      %v599 = vpop.f32.mrb[0].mxu0
      %v600 = vadd.f32 0.0, %v599
      %v601 = vpop.f32.mrb[0].mxu0
      %602 = vdwg.mxu0
      %v603 = vadd.f32 %v386, %v573
      %v604 = vadd.f32 %v387, %v576
      %v605 = vadd.f32 %v388, %v581
      %v606 = vadd.f32 %v389, %v584
      %v607 = vadd.f32 %v390, %v589
      %v608 = vadd.f32 %v391, %v592
      %v609 = vadd.f32 %v392, %v597
      %v610 = vadd.f32 %v393, %v600
      %611 = vst.msk [vmem:[#allocation2] sm:$0xff] %vm223, %v603
      %612 = vst.msk [vmem:[#allocation2 + $0x8] sm:$0xff] %vm223, %v604
      %613 = vst.msk [vmem:[#allocation2 + $0x10] sm:$0xff] %vm223, %v605
      %614 = vst.msk [vmem:[#allocation2 + $0x18] sm:$0xff] %vm223, %v606
      %615 = vst.msk [vmem:[#allocation2 + $0x20] sm:$0xff] %vm223, %v607
      %616 = vst.msk [vmem:[#allocation2 + $0x28] sm:$0xff] %vm223, %v608
      %617 = vst.msk [vmem:[#allocation2 + $0x30] sm:$0xff] %vm223, %v609
      %618 = vst.msk [vmem:[#allocation2 + $0x38] sm:$0xff] %vm223, %v610
      %s619 = sadd.s32 2, %s232
      %s620 = smul.addr %s619, 4
      %s621 = scalar_lea.vmem %s210, %s620
      %v622 = vld [vmem:[%s621] sm:$0xf]
      %v623 = vld [vmem:[%s621 + $0x10] sm:$0xf]
      %v624 = vld [vmem:[%s621 + $0x20] sm:$0xf]
      %v625 = vld [vmem:[%s621 + $0x30] sm:$0xf]
      %v626 = vld [vmem:[%s621 + $0x40] sm:$0xf]
      %v627 = vld [vmem:[%s621 + $0x50] sm:$0xf]
      %v628 = vld [vmem:[%s621 + $0x60] sm:$0xf]
      %v629 = vld [vmem:[%s621 + $0x70] sm:$0xf]
      %v630 = vld [vmem:[#allocation2] sm:$0xff]
      %v631 = vld [vmem:[#allocation2 + $0x8] sm:$0xff]
      %v632 = vld [vmem:[#allocation2 + $0x10] sm:$0xff]
      %v633 = vld [vmem:[#allocation2 + $0x18] sm:$0xff]
      %v634 = vld [vmem:[#allocation2 + $0x20] sm:$0xff]
      %v635 = vld [vmem:[#allocation2 + $0x28] sm:$0xff]
      %v636 = vld [vmem:[#allocation2 + $0x30] sm:$0xff]
      %v637 = vld [vmem:[#allocation2 + $0x38] sm:$0xff]
      %s638 = scalar_lea.vmem %s1, 4
      %v639 = vld [vmem:[%s638] sm:$0xf]
      %v648 = vunpack.c.l.b16 %v622
      %v649 = vunpack.c.l.b16 %v623
      %v650 = vunpack.c.l.b16 %v624
      %v651 = vunpack.c.l.b16 %v625
      %v652 = vunpack.c.l.b16 %v626
      %v653 = vunpack.c.l.b16 %v627
      %v654 = vunpack.c.l.b16 %v628
      %v655 = vunpack.c.l.b16 %v629
      %v656 = vpack.c.b16 %v649, %v648
      %v657 = vpack.c.b16 %v651, %v650
      %v658 = vpack.c.b16 %v653, %v652
      %v659 = vpack.c.b16 %v655, %v654
      %v661 = vsel %vm272, %v656, 0
      %v664 = vsel %vm272, %v657, 0
      %v667 = vsel %vm272, %v658, 0
      %v670 = vsel %vm272, %v659, 0
      %v673 = vsel %vm285, %v639, 0
      %675 = vmatprep.subr.bf16.mxu0 0
      %676 = vmatpush1.bf16.msra.mxu0 %v673
      %677 = vmatprep.subr.bf16.mxu0 0
      %678 = vmatpush1.bf16.msra.mxu0 0
      %679 = vmatprep.subr.bf16.mxu0 0
      %680 = vmatpush1.bf16.msra.mxu0 0
      %681 = vmatprep.subr.bf16.mxu0 0
      %682 = vmatpush1.bf16.msra.mxu0 0
      %683 = vmatprep.subr.bf16.mxu0 0
      %684 = vmatpush1.bf16.msra.mxu0 0
      %685 = vmatprep.subr.bf16.mxu0 0
      %686 = vmatpush1.bf16.msra.mxu0 0
      %687 = vmatprep.subr.bf16.mxu0 0
      %688 = vmatpush1.bf16.msra.mxu0 0
      %689 = vmatprep.subr.bf16.mxu0 0
      %690 = vmatpush1.bf16.msra.mxu0 0
      %691 = vmatprep.subr.bf16.mxu0 0
      %692 = vmatpush1.bf16.msra.mxu0 0
      %693 = vmatprep.subr.bf16.mxu0 0
      %694 = vmatpush1.bf16.msra.mxu0 0
      %695 = vmatprep.subr.bf16.mxu0 0
      %696 = vmatpush1.bf16.msra.mxu0 0
      %697 = vmatprep.subr.bf16.mxu0 0
      %698 = vmatpush1.bf16.msra.mxu0 0
      %699 = vmatprep.subr.bf16.mxu0 0
      %700 = vmatpush1.bf16.msra.mxu0 0
      %701 = vmatprep.subr.bf16.mxu0 0
      %702 = vmatpush1.bf16.msra.mxu0 0
      %703 = vmatprep.subr.bf16.mxu0 0
      %704 = vmatpush1.bf16.msra.mxu0 0
      %705 = vmatprep.subr.bf16.mxu0 0
      %706 = vmatpush1.bf16.msra.mxu0 0
      %707 = vmatprep.mubr.bf16.mxu0 0
      %708 = vmatmul.mubr.bf16.gmra.mrb[0].mxu0 %v661
      %v709 = vpop.f32.mrb[0].mxu0
      %v710 = vadd.f32 0.0, %v709
      %v711 = vpop.f32.mrb[0].mxu0
      %v712 = vpop.f32.mrb[0].mxu0
      %v713 = vadd.f32 0.0, %v712
      %v714 = vpop.f32.mrb[0].mxu0
      %715 = vmatprep.mubr.bf16.mxu0 0
      %716 = vmatmul.mubr.bf16.gmra.mrb[0].mxu0 %v664
      %v717 = vpop.f32.mrb[0].mxu0
      %v718 = vadd.f32 0.0, %v717
      %v719 = vpop.f32.mrb[0].mxu0
      %v720 = vpop.f32.mrb[0].mxu0
      %v721 = vadd.f32 0.0, %v720
      %v722 = vpop.f32.mrb[0].mxu0
      %723 = vmatprep.mubr.bf16.mxu0 0
      %724 = vmatmul.mubr.bf16.gmra.mrb[0].mxu0 %v667
      %v725 = vpop.f32.mrb[0].mxu0
      %v726 = vadd.f32 0.0, %v725
      %v727 = vpop.f32.mrb[0].mxu0
      %v728 = vpop.f32.mrb[0].mxu0
      %v729 = vadd.f32 0.0, %v728
      %v730 = vpop.f32.mrb[0].mxu0
      %731 = vmatprep.mubr.bf16.mxu0 0
      %732 = vmatmul.mubr.bf16.gmra.mrb[0].mxu0 %v670
      %v733 = vpop.f32.mrb[0].mxu0
      %v734 = vadd.f32 0.0, %v733
      %v735 = vpop.f32.mrb[0].mxu0
      %v736 = vpop.f32.mrb[0].mxu0
      %v737 = vadd.f32 0.0, %v736
      %v738 = vpop.f32.mrb[0].mxu0
      %739 = vdwg.mxu0
      %v740 = vadd.f32 %v630, %v710
      %v741 = vadd.f32 %v631, %v713
      %v742 = vadd.f32 %v632, %v718
      %v743 = vadd.f32 %v633, %v721
      %v744 = vadd.f32 %v634, %v726
      %v745 = vadd.f32 %v635, %v729
      %v746 = vadd.f32 %v636, %v734
      %v747 = vadd.f32 %v637, %v737
      %748 = vst.msk [vmem:[#allocation2] sm:$0xff] %vm223, %v740
      %749 = vst.msk [vmem:[#allocation2 + $0x8] sm:$0xff] %vm223, %v741
      %750 = vst.msk [vmem:[#allocation2 + $0x10] sm:$0xff] %vm223, %v742
      %751 = vst.msk [vmem:[#allocation2 + $0x18] sm:$0xff] %vm223, %v743
      %752 = vst.msk [vmem:[#allocation2 + $0x20] sm:$0xff] %vm223, %v744
      %753 = vst.msk [vmem:[#allocation2 + $0x28] sm:$0xff] %vm223, %v745
      %754 = vst.msk [vmem:[#allocation2 + $0x30] sm:$0xff] %vm223, %v746
      %755 = vst.msk [vmem:[#allocation2 + $0x38] sm:$0xff] %vm223, %v747
      %v756 = vld [vmem:[%s621] sm:$0xf]
      %v757 = vld [vmem:[%s621 + $0x4] sm:$0x1]
      %v758 = vld [vmem:[%s621 + $0x10] sm:$0xf]
      %v759 = vld [vmem:[%s621 + $0x14] sm:$0x1]
      %v760 = vld [vmem:[%s621 + $0x20] sm:$0xf]
      %v761 = vld [vmem:[%s621 + $0x24] sm:$0x1]
      %v762 = vld [vmem:[%s621 + $0x30] sm:$0xf]
      %v763 = vld [vmem:[%s621 + $0x34] sm:$0x1]
      %v764 = vld [vmem:[%s621 + $0x40] sm:$0xf]
      %v765 = vld [vmem:[%s621 + $0x44] sm:$0x1]
      %v766 = vld [vmem:[%s621 + $0x50] sm:$0xf]
      %v767 = vld [vmem:[%s621 + $0x54] sm:$0x1]
      %v768 = vld [vmem:[%s621 + $0x60] sm:$0xf]
      %v769 = vld [vmem:[%s621 + $0x64] sm:$0x1]
      %v770 = vld [vmem:[%s621 + $0x70] sm:$0xf]
      %v771 = vld [vmem:[%s621 + $0x74] sm:$0x1]
      %v772 = vld [vmem:[#allocation2] sm:$0xff]
      %v773 = vld [vmem:[#allocation2 + $0x8] sm:$0xff]
      %v774 = vld [vmem:[#allocation2 + $0x10] sm:$0xff]
      %v775 = vld [vmem:[#allocation2 + $0x18] sm:$0xff]
      %v776 = vld [vmem:[#allocation2 + $0x20] sm:$0xff]
      %v777 = vld [vmem:[#allocation2 + $0x28] sm:$0xff]
      %v778 = vld [vmem:[#allocation2 + $0x30] sm:$0xff]
      %v779 = vld [vmem:[#allocation2 + $0x38] sm:$0xff]
      %v781 = vshrl.u32 %v756, 16
      %v783 = vrot.slane %v781, 4
      %v784 = vshll.u32 %v756, 16
      %v786 = vrot.slane %v784, 5
      %v787 = vor.u32 %v783, %v786
      %v788 = vrot.slane %v787, 4
      %v790 = vshll.u32 %v757, 16
      %v792 = vrot.slane %v790, 5
      %v793 = vsel %vm396, %v788, %v792
      %v795 = vshrl.u32 %v758, 16
      %v797 = vrot.slane %v795, 4
      %v798 = vshll.u32 %v758, 16
      %v800 = vrot.slane %v798, 5
      %v801 = vor.u32 %v797, %v800
      %v802 = vrot.slane %v801, 4
      %v804 = vshll.u32 %v759, 16
      %v806 = vrot.slane %v804, 5
      %v807 = vsel %vm396, %v802, %v806
      %v809 = vshrl.u32 %v760, 16
      %v811 = vrot.slane %v809, 4
      %v812 = vshll.u32 %v760, 16
      %v814 = vrot.slane %v812, 5
      %v815 = vor.u32 %v811, %v814
      %v816 = vrot.slane %v815, 4
      %v818 = vshll.u32 %v761, 16
      %v820 = vrot.slane %v818, 5
      %v821 = vsel %vm396, %v816, %v820
      %v823 = vshrl.u32 %v762, 16
      %v825 = vrot.slane %v823, 4
      %v826 = vshll.u32 %v762, 16
      %v828 = vrot.slane %v826, 5
      %v829 = vor.u32 %v825, %v828
      %v830 = vrot.slane %v829, 4
      %v832 = vshll.u32 %v763, 16
      %v834 = vrot.slane %v832, 5
      %v835 = vsel %vm396, %v830, %v834
      %v837 = vshrl.u32 %v764, 16
      %v839 = vrot.slane %v837, 4
      %v840 = vshll.u32 %v764, 16
      %v842 = vrot.slane %v840, 5
      %v843 = vor.u32 %v839, %v842
      %v844 = vrot.slane %v843, 4
      %v846 = vshll.u32 %v765, 16
      %v848 = vrot.slane %v846, 5
      %v849 = vsel %vm396, %v844, %v848
      %v851 = vshrl.u32 %v766, 16
      %v853 = vrot.slane %v851, 4
      %v854 = vshll.u32 %v766, 16
      %v856 = vrot.slane %v854, 5
      %v857 = vor.u32 %v853, %v856
      %v858 = vrot.slane %v857, 4
      %v860 = vshll.u32 %v767, 16
      %v862 = vrot.slane %v860, 5
      %v863 = vsel %vm396, %v858, %v862
      %v865 = vshrl.u32 %v768, 16
      %v867 = vrot.slane %v865, 4
      %v868 = vshll.u32 %v768, 16
      %v870 = vrot.slane %v868, 5
      %v871 = vor.u32 %v867, %v870
      %v872 = vrot.slane %v871, 4
      %v874 = vshll.u32 %v769, 16
      %v876 = vrot.slane %v874, 5
      %v877 = vsel %vm396, %v872, %v876
      %v879 = vshrl.u32 %v770, 16
      %v881 = vrot.slane %v879, 4
      %v882 = vshll.u32 %v770, 16
      %v884 = vrot.slane %v882, 5
      %v885 = vor.u32 %v881, %v884
      %v886 = vrot.slane %v885, 4
      %v888 = vshll.u32 %v771, 16
      %v890 = vrot.slane %v888, 5
      %v891 = vsel %vm396, %v886, %v890
      %s892 = scalar_lea.vmem %s2, 2
      %v893 = vld [vmem:[%s892] sm:$0x3]
      %v894 = vunpack.c.l.b16 %v793
      %v895 = vunpack.c.l.b16 %v807
      %v896 = vunpack.c.l.b16 %v821
      %v897 = vunpack.c.l.b16 %v835
      %v898 = vunpack.c.l.b16 %v849
      %v899 = vunpack.c.l.b16 %v863
      %v900 = vunpack.c.l.b16 %v877
      %v901 = vunpack.c.l.b16 %v891
      %v902 = vpack.c.b16 %v895, %v894
      %v903 = vpack.c.b16 %v897, %v896
      %v904 = vpack.c.b16 %v899, %v898
      %v905 = vpack.c.b16 %v901, %v900
      %v907 = vsel %vm223, %v902, 0
      %v910 = vsel %vm223, %v903, 0
      %v913 = vsel %vm223, %v904, 0
      %v916 = vsel %vm223, %v905, 0
      %v919 = vsel %vm534, %v893, 0
      %921 = vmatprep.subr.bf16.mxu0 0
      %922 = vmatpush1.bf16.msra.mxu0 %v919
      %923 = vmatprep.subr.bf16.mxu0 0
      %924 = vmatpush1.bf16.msra.mxu0 0
      %925 = vmatprep.subr.bf16.mxu0 0
      %926 = vmatpush1.bf16.msra.mxu0 0
      %927 = vmatprep.subr.bf16.mxu0 0
      %928 = vmatpush1.bf16.msra.mxu0 0
      %929 = vmatprep.subr.bf16.mxu0 0
      %930 = vmatpush1.bf16.msra.mxu0 0
      %931 = vmatprep.subr.bf16.mxu0 0
      %932 = vmatpush1.bf16.msra.mxu0 0
      %933 = vmatprep.subr.bf16.mxu0 0
      %934 = vmatpush1.bf16.msra.mxu0 0
      %935 = vmatprep.subr.bf16.mxu0 0
      %936 = vmatpush1.bf16.msra.mxu0 0
      %937 = vmatprep.subr.bf16.mxu0 0
      %938 = vmatpush1.bf16.msra.mxu0 0
      %939 = vmatprep.subr.bf16.mxu0 0
      %940 = vmatpush1.bf16.msra.mxu0 0
      %941 = vmatprep.subr.bf16.mxu0 0
      %942 = vmatpush1.bf16.msra.mxu0 0
      %943 = vmatprep.subr.bf16.mxu0 0
      %944 = vmatpush1.bf16.msra.mxu0 0
      %945 = vmatprep.subr.bf16.mxu0 0
      %946 = vmatpush1.bf16.msra.mxu0 0
      %947 = vmatprep.subr.bf16.mxu0 0
      %948 = vmatpush1.bf16.msra.mxu0 0
      %949 = vmatprep.subr.bf16.mxu0 0
      %950 = vmatpush1.bf16.msra.mxu0 0
      %951 = vmatprep.subr.bf16.mxu0 0
      %952 = vmatpush1.bf16.msra.mxu0 0
      %953 = vmatprep.mubr.bf16.mxu0 0
      %954 = vmatmul.mubr.bf16.gmra.mrb[0].mxu0 %v907
      %v955 = vpop.f32.mrb[0].mxu0
      %v956 = vadd.f32 0.0, %v955
      %v957 = vpop.f32.mrb[0].mxu0
      %v958 = vpop.f32.mrb[0].mxu0
      %v959 = vadd.f32 0.0, %v958
      %v960 = vpop.f32.mrb[0].mxu0
      %961 = vmatprep.mubr.bf16.mxu0 0
      %962 = vmatmul.mubr.bf16.gmra.mrb[0].mxu0 %v910
      %v963 = vpop.f32.mrb[0].mxu0
      %v964 = vadd.f32 0.0, %v963
      %v965 = vpop.f32.mrb[0].mxu0
      %v966 = vpop.f32.mrb[0].mxu0
      %v967 = vadd.f32 0.0, %v966
      %v968 = vpop.f32.mrb[0].mxu0
      %969 = vmatprep.mubr.bf16.mxu0 0
      %970 = vmatmul.mubr.bf16.gmra.mrb[0].mxu0 %v913
      %v971 = vpop.f32.mrb[0].mxu0
      %v972 = vadd.f32 0.0, %v971
      %v973 = vpop.f32.mrb[0].mxu0
      %v974 = vpop.f32.mrb[0].mxu0
      %v975 = vadd.f32 0.0, %v974
      %v976 = vpop.f32.mrb[0].mxu0
      %977 = vmatprep.mubr.bf16.mxu0 0
      %978 = vmatmul.mubr.bf16.gmra.mrb[0].mxu0 %v916
      %v979 = vpop.f32.mrb[0].mxu0
      %v980 = vadd.f32 0.0, %v979
      %v981 = vpop.f32.mrb[0].mxu0
      %v982 = vpop.f32.mrb[0].mxu0
      %v983 = vadd.f32 0.0, %v982
      %v984 = vpop.f32.mrb[0].mxu0
      %985 = vdwg.mxu0
      %v986 = vadd.f32 %v772, %v956
      %v987 = vadd.f32 %v773, %v959
      %v988 = vadd.f32 %v774, %v964
      %v989 = vadd.f32 %v775, %v967
      %v990 = vadd.f32 %v776, %v972
      %v991 = vadd.f32 %v777, %v975
      %v992 = vadd.f32 %v778, %v980
      %v993 = vadd.f32 %v779, %v983
      %994 = vst.msk [vmem:[#allocation2] sm:$0xff] %vm223, %v986
      %995 = vst.msk [vmem:[#allocation2 + $0x8] sm:$0xff] %vm223, %v987
      %996 = vst.msk [vmem:[#allocation2 + $0x10] sm:$0xff] %vm223, %v988
      %997 = vst.msk [vmem:[#allocation2 + $0x18] sm:$0xff] %vm223, %v989
      %998 = vst.msk [vmem:[#allocation2 + $0x20] sm:$0xff] %vm223, %v990
      %999 = vst.msk [vmem:[#allocation2 + $0x28] sm:$0xff] %vm223, %v991
      %1000 = vst.msk [vmem:[#allocation2 + $0x30] sm:$0xff] %vm223, %v992
      %1001 = vst.msk [vmem:[#allocation2 + $0x38] sm:$0xff] %vm223, %v993
      %s1002 = sadd.s32 %s222, 1
      %s1003 = smul.u32 %s1002, 4
      %s1004 = smul.addr %s1003, 4
      %s1005 = scalar_lea.vmem %s210, %s1004
      %v1006 = vld [vmem:[%s1005] sm:$0xf]
      %v1007 = vld [vmem:[%s1005 + $0x10] sm:$0xf]
      %v1008 = vld [vmem:[%s1005 + $0x20] sm:$0xf]
      %v1009 = vld [vmem:[%s1005 + $0x30] sm:$0xf]
      %v1010 = vld [vmem:[%s1005 + $0x40] sm:$0xf]
      %v1011 = vld [vmem:[%s1005 + $0x50] sm:$0xf]
      %v1012 = vld [vmem:[%s1005 + $0x60] sm:$0xf]
      %v1013 = vld [vmem:[%s1005 + $0x70] sm:$0xf]
      %v1014 = vld [vmem:[#allocation2] sm:$0xff]
      %v1015 = vld [vmem:[#allocation2 + $0x8] sm:$0xff]
      %v1016 = vld [vmem:[#allocation2 + $0x10] sm:$0xff]
      %v1017 = vld [vmem:[#allocation2 + $0x18] sm:$0xff]
      %v1018 = vld [vmem:[#allocation2 + $0x20] sm:$0xff]
      %v1019 = vld [vmem:[#allocation2 + $0x28] sm:$0xff]
      %v1020 = vld [vmem:[#allocation2 + $0x30] sm:$0xff]
      %v1021 = vld [vmem:[#allocation2 + $0x38] sm:$0xff]
      %s1022 = scalar_lea.vmem %s1, 8
      %v1023 = vld [vmem:[%s1022] sm:$0xf]
      %v1032 = vunpack.c.l.b16 %v1006
      %v1033 = vunpack.c.l.b16 %v1007
      %v1034 = vunpack.c.l.b16 %v1008
      %v1035 = vunpack.c.l.b16 %v1009
      %v1036 = vunpack.c.l.b16 %v1010
      %v1037 = vunpack.c.l.b16 %v1011
      %v1038 = vunpack.c.l.b16 %v1012
      %v1039 = vunpack.c.l.b16 %v1013
      %v1040 = vpack.c.b16 %v1033, %v1032
      %v1041 = vpack.c.b16 %v1035, %v1034
      %v1042 = vpack.c.b16 %v1037, %v1036
      %v1043 = vpack.c.b16 %v1039, %v1038
      %v1045 = vsel %vm272, %v1040, 0
      %v1048 = vsel %vm272, %v1041, 0
      %v1051 = vsel %vm272, %v1042, 0
      %v1054 = vsel %vm272, %v1043, 0
      %v1057 = vsel %vm285, %v1023, 0
      %1059 = vmatprep.subr.bf16.mxu0 0
      %1060 = vmatpush1.bf16.msra.mxu0 %v1057
      %1061 = vmatprep.subr.bf16.mxu0 0
      %1062 = vmatpush1.bf16.msra.mxu0 0
      %1063 = vmatprep.subr.bf16.mxu0 0
      %1064 = vmatpush1.bf16.msra.mxu0 0
      %1065 = vmatprep.subr.bf16.mxu0 0
      %1066 = vmatpush1.bf16.msra.mxu0 0
      %1067 = vmatprep.subr.bf16.mxu0 0
      %1068 = vmatpush1.bf16.msra.mxu0 0
      %1069 = vmatprep.subr.bf16.mxu0 0
      %1070 = vmatpush1.bf16.msra.mxu0 0
      %1071 = vmatprep.subr.bf16.mxu0 0
      %1072 = vmatpush1.bf16.msra.mxu0 0
      %1073 = vmatprep.subr.bf16.mxu0 0
      %1074 = vmatpush1.bf16.msra.mxu0 0
      %1075 = vmatprep.subr.bf16.mxu0 0
      %1076 = vmatpush1.bf16.msra.mxu0 0
      %1077 = vmatprep.subr.bf16.mxu0 0
      %1078 = vmatpush1.bf16.msra.mxu0 0
      %1079 = vmatprep.subr.bf16.mxu0 0
      %1080 = vmatpush1.bf16.msra.mxu0 0
      %1081 = vmatprep.subr.bf16.mxu0 0
      %1082 = vmatpush1.bf16.msra.mxu0 0
      %1083 = vmatprep.subr.bf16.mxu0 0
      %1084 = vmatpush1.bf16.msra.mxu0 0
      %1085 = vmatprep.subr.bf16.mxu0 0
      %1086 = vmatpush1.bf16.msra.mxu0 0
      %1087 = vmatprep.subr.bf16.mxu0 0
      %1088 = vmatpush1.bf16.msra.mxu0 0
      %1089 = vmatprep.subr.bf16.mxu0 0
      %1090 = vmatpush1.bf16.msra.mxu0 0
      %1091 = vmatprep.mubr.bf16.mxu0 0
      %1092 = vmatmul.mubr.bf16.gmra.mrb[0].mxu0 %v1045
      %v1093 = vpop.f32.mrb[0].mxu0
      %v1094 = vadd.f32 0.0, %v1093
      %v1095 = vpop.f32.mrb[0].mxu0
      %v1096 = vpop.f32.mrb[0].mxu0
      %v1097 = vadd.f32 0.0, %v1096
      %v1098 = vpop.f32.mrb[0].mxu0
      %1099 = vmatprep.mubr.bf16.mxu0 0
      %1100 = vmatmul.mubr.bf16.gmra.mrb[0].mxu0 %v1048
      %v1101 = vpop.f32.mrb[0].mxu0
      %v1102 = vadd.f32 0.0, %v1101
      %v1103 = vpop.f32.mrb[0].mxu0
      %v1104 = vpop.f32.mrb[0].mxu0
      %v1105 = vadd.f32 0.0, %v1104
      %v1106 = vpop.f32.mrb[0].mxu0
      %1107 = vmatprep.mubr.bf16.mxu0 0
      %1108 = vmatmul.mubr.bf16.gmra.mrb[0].mxu0 %v1051
      %v1109 = vpop.f32.mrb[0].mxu0
      %v1110 = vadd.f32 0.0, %v1109
      %v1111 = vpop.f32.mrb[0].mxu0
      %v1112 = vpop.f32.mrb[0].mxu0
      %v1113 = vadd.f32 0.0, %v1112
      %v1114 = vpop.f32.mrb[0].mxu0
      %1115 = vmatprep.mubr.bf16.mxu0 0
      %1116 = vmatmul.mubr.bf16.gmra.mrb[0].mxu0 %v1054
      %v1117 = vpop.f32.mrb[0].mxu0
      %v1118 = vadd.f32 0.0, %v1117
      %v1119 = vpop.f32.mrb[0].mxu0
      %v1120 = vpop.f32.mrb[0].mxu0
      %v1121 = vadd.f32 0.0, %v1120
      %v1122 = vpop.f32.mrb[0].mxu0
      %1123 = vdwg.mxu0
      %v1124 = vadd.f32 %v1014, %v1094
      %v1125 = vadd.f32 %v1015, %v1097
      %v1126 = vadd.f32 %v1016, %v1102
      %v1127 = vadd.f32 %v1017, %v1105
      %v1128 = vadd.f32 %v1018, %v1110
      %v1129 = vadd.f32 %v1019, %v1113
      %v1130 = vadd.f32 %v1020, %v1118
      %v1131 = vadd.f32 %v1021, %v1121
      %1132 = vst.msk [vmem:[#allocation2] sm:$0xff] %vm223, %v1124
      %1133 = vst.msk [vmem:[#allocation2 + $0x8] sm:$0xff] %vm223, %v1125
      %1134 = vst.msk [vmem:[#allocation2 + $0x10] sm:$0xff] %vm223, %v1126
      %1135 = vst.msk [vmem:[#allocation2 + $0x18] sm:$0xff] %vm223, %v1127
      %1136 = vst.msk [vmem:[#allocation2 + $0x20] sm:$0xff] %vm223, %v1128
      %1137 = vst.msk [vmem:[#allocation2 + $0x28] sm:$0xff] %vm223, %v1129
      %1138 = vst.msk [vmem:[#allocation2 + $0x30] sm:$0xff] %vm223, %v1130
      %1139 = vst.msk [vmem:[#allocation2 + $0x38] sm:$0xff] %vm223, %v1131
      %v1140 = vld [vmem:[%s1005] sm:$0xf]
      %v1141 = vld [vmem:[%s1005 + $0x4] sm:$0x1]
      %v1142 = vld [vmem:[%s1005 + $0x10] sm:$0xf]
      %v1143 = vld [vmem:[%s1005 + $0x14] sm:$0x1]
      %v1144 = vld [vmem:[%s1005 + $0x20] sm:$0xf]
      %v1145 = vld [vmem:[%s1005 + $0x24] sm:$0x1]
      %v1146 = vld [vmem:[%s1005 + $0x30] sm:$0xf]
      %v1147 = vld [vmem:[%s1005 + $0x34] sm:$0x1]
      %v1148 = vld [vmem:[%s1005 + $0x40] sm:$0xf]
      %v1149 = vld [vmem:[%s1005 + $0x44] sm:$0x1]
      %v1150 = vld [vmem:[%s1005 + $0x50] sm:$0xf]
      %v1151 = vld [vmem:[%s1005 + $0x54] sm:$0x1]
      %v1152 = vld [vmem:[%s1005 + $0x60] sm:$0xf]
      %v1153 = vld [vmem:[%s1005 + $0x64] sm:$0x1]
      %v1154 = vld [vmem:[%s1005 + $0x70] sm:$0xf]
      %v1155 = vld [vmem:[%s1005 + $0x74] sm:$0x1]
      %v1156 = vld [vmem:[#allocation2] sm:$0xff]
      %v1157 = vld [vmem:[#allocation2 + $0x8] sm:$0xff]
      %v1158 = vld [vmem:[#allocation2 + $0x10] sm:$0xff]
      %v1159 = vld [vmem:[#allocation2 + $0x18] sm:$0xff]
      %v1160 = vld [vmem:[#allocation2 + $0x20] sm:$0xff]
      %v1161 = vld [vmem:[#allocation2 + $0x28] sm:$0xff]
      %v1162 = vld [vmem:[#allocation2 + $0x30] sm:$0xff]
      %v1163 = vld [vmem:[#allocation2 + $0x38] sm:$0xff]
      %v1165 = vshrl.u32 %v1140, 16
      %v1167 = vrot.slane %v1165, 4
      %v1168 = vshll.u32 %v1140, 16
      %v1170 = vrot.slane %v1168, 5
      %v1171 = vor.u32 %v1167, %v1170
      %v1172 = vrot.slane %v1171, 4
      %v1174 = vshll.u32 %v1141, 16
      %v1176 = vrot.slane %v1174, 5
      %v1177 = vsel %vm396, %v1172, %v1176
      %v1179 = vshrl.u32 %v1142, 16
      %v1181 = vrot.slane %v1179, 4
      %v1182 = vshll.u32 %v1142, 16
      %v1184 = vrot.slane %v1182, 5
      %v1185 = vor.u32 %v1181, %v1184
      %v1186 = vrot.slane %v1185, 4
      %v1188 = vshll.u32 %v1143, 16
      %v1190 = vrot.slane %v1188, 5
      %v1191 = vsel %vm396, %v1186, %v1190
      %v1193 = vshrl.u32 %v1144, 16
      %v1195 = vrot.slane %v1193, 4
      %v1196 = vshll.u32 %v1144, 16
      %v1198 = vrot.slane %v1196, 5
      %v1199 = vor.u32 %v1195, %v1198
      %v1200 = vrot.slane %v1199, 4
      %v1202 = vshll.u32 %v1145, 16
      %v1204 = vrot.slane %v1202, 5
      %v1205 = vsel %vm396, %v1200, %v1204
      %v1207 = vshrl.u32 %v1146, 16
      %v1209 = vrot.slane %v1207, 4
      %v1210 = vshll.u32 %v1146, 16
      %v1212 = vrot.slane %v1210, 5
      %v1213 = vor.u32 %v1209, %v1212
      %v1214 = vrot.slane %v1213, 4
      %v1216 = vshll.u32 %v1147, 16
      %v1218 = vrot.slane %v1216, 5
      %v1219 = vsel %vm396, %v1214, %v1218
      %v1221 = vshrl.u32 %v1148, 16
      %v1223 = vrot.slane %v1221, 4
      %v1224 = vshll.u32 %v1148, 16
      %v1226 = vrot.slane %v1224, 5
      %v1227 = vor.u32 %v1223, %v1226
      %v1228 = vrot.slane %v1227, 4
      %v1230 = vshll.u32 %v1149, 16
      %v1232 = vrot.slane %v1230, 5
      %v1233 = vsel %vm396, %v1228, %v1232
      %v1235 = vshrl.u32 %v1150, 16
      %v1237 = vrot.slane %v1235, 4
      %v1238 = vshll.u32 %v1150, 16
      %v1240 = vrot.slane %v1238, 5
      %v1241 = vor.u32 %v1237, %v1240
      %v1242 = vrot.slane %v1241, 4
      %v1244 = vshll.u32 %v1151, 16
      %v1246 = vrot.slane %v1244, 5
      %v1247 = vsel %vm396, %v1242, %v1246
      %v1249 = vshrl.u32 %v1152, 16
      %v1251 = vrot.slane %v1249, 4
      %v1252 = vshll.u32 %v1152, 16
      %v1254 = vrot.slane %v1252, 5
      %v1255 = vor.u32 %v1251, %v1254
      %v1256 = vrot.slane %v1255, 4
      %v1258 = vshll.u32 %v1153, 16
      %v1260 = vrot.slane %v1258, 5
      %v1261 = vsel %vm396, %v1256, %v1260
      %v1263 = vshrl.u32 %v1154, 16
      %v1265 = vrot.slane %v1263, 4
      %v1266 = vshll.u32 %v1154, 16
      %v1268 = vrot.slane %v1266, 5
      %v1269 = vor.u32 %v1265, %v1268
      %v1270 = vrot.slane %v1269, 4
      %v1272 = vshll.u32 %v1155, 16
      %v1274 = vrot.slane %v1272, 5
      %v1275 = vsel %vm396, %v1270, %v1274
      %s1276 = scalar_lea.vmem %s2, 4
      %v1277 = vld [vmem:[%s1276] sm:$0x3]
      %v1278 = vunpack.c.l.b16 %v1177
      %v1279 = vunpack.c.l.b16 %v1191
      %v1280 = vunpack.c.l.b16 %v1205
      %v1281 = vunpack.c.l.b16 %v1219
      %v1282 = vunpack.c.l.b16 %v1233
      %v1283 = vunpack.c.l.b16 %v1247
      %v1284 = vunpack.c.l.b16 %v1261
      %v1285 = vunpack.c.l.b16 %v1275
      %v1286 = vpack.c.b16 %v1279, %v1278
      %v1287 = vpack.c.b16 %v1281, %v1280
      %v1288 = vpack.c.b16 %v1283, %v1282
      %v1289 = vpack.c.b16 %v1285, %v1284
      %v1291 = vsel %vm223, %v1286, 0
      %v1294 = vsel %vm223, %v1287, 0
      %v1297 = vsel %vm223, %v1288, 0
      %v1300 = vsel %vm223, %v1289, 0
      %v1303 = vsel %vm534, %v1277, 0
      %1305 = vmatprep.subr.bf16.mxu0 0
      %1306 = vmatpush1.bf16.msra.mxu0 %v1303
      %1307 = vmatprep.subr.bf16.mxu0 0
      %1308 = vmatpush1.bf16.msra.mxu0 0
      %1309 = vmatprep.subr.bf16.mxu0 0
      %1310 = vmatpush1.bf16.msra.mxu0 0
      %1311 = vmatprep.subr.bf16.mxu0 0
      %1312 = vmatpush1.bf16.msra.mxu0 0
      %1313 = vmatprep.subr.bf16.mxu0 0
      %1314 = vmatpush1.bf16.msra.mxu0 0
      %1315 = vmatprep.subr.bf16.mxu0 0
      %1316 = vmatpush1.bf16.msra.mxu0 0
      %1317 = vmatprep.subr.bf16.mxu0 0
      %1318 = vmatpush1.bf16.msra.mxu0 0
      %1319 = vmatprep.subr.bf16.mxu0 0
      %1320 = vmatpush1.bf16.msra.mxu0 0
      %1321 = vmatprep.subr.bf16.mxu0 0
      %1322 = vmatpush1.bf16.msra.mxu0 0
      %1323 = vmatprep.subr.bf16.mxu0 0
      %1324 = vmatpush1.bf16.msra.mxu0 0
      %1325 = vmatprep.subr.bf16.mxu0 0
      %1326 = vmatpush1.bf16.msra.mxu0 0
      %1327 = vmatprep.subr.bf16.mxu0 0
      %1328 = vmatpush1.bf16.msra.mxu0 0
      %1329 = vmatprep.subr.bf16.mxu0 0
      %1330 = vmatpush1.bf16.msra.mxu0 0
      %1331 = vmatprep.subr.bf16.mxu0 0
      %1332 = vmatpush1.bf16.msra.mxu0 0
      %1333 = vmatprep.subr.bf16.mxu0 0
      %1334 = vmatpush1.bf16.msra.mxu0 0
      %1335 = vmatprep.subr.bf16.mxu0 0
      %1336 = vmatpush1.bf16.msra.mxu0 0
      %1337 = vmatprep.mubr.bf16.mxu0 0
      %1338 = vmatmul.mubr.bf16.gmra.mrb[0].mxu0 %v1291
      %v1339 = vpop.f32.mrb[0].mxu0
      %v1340 = vadd.f32 0.0, %v1339
      %v1341 = vpop.f32.mrb[0].mxu0
      %v1342 = vpop.f32.mrb[0].mxu0
      %v1343 = vadd.f32 0.0, %v1342
      %v1344 = vpop.f32.mrb[0].mxu0
      %1345 = vmatprep.mubr.bf16.mxu0 0
      %1346 = vmatmul.mubr.bf16.gmra.mrb[0].mxu0 %v1294
      %v1347 = vpop.f32.mrb[0].mxu0
      %v1348 = vadd.f32 0.0, %v1347
      %v1349 = vpop.f32.mrb[0].mxu0
      %v1350 = vpop.f32.mrb[0].mxu0
      %v1351 = vadd.f32 0.0, %v1350
      %v1352 = vpop.f32.mrb[0].mxu0
      %1353 = vmatprep.mubr.bf16.mxu0 0
      %1354 = vmatmul.mubr.bf16.gmra.mrb[0].mxu0 %v1297
      %v1355 = vpop.f32.mrb[0].mxu0
      %v1356 = vadd.f32 0.0, %v1355
      %v1357 = vpop.f32.mrb[0].mxu0
      %v1358 = vpop.f32.mrb[0].mxu0
      %v1359 = vadd.f32 0.0, %v1358
      %v1360 = vpop.f32.mrb[0].mxu0
      %1361 = vmatprep.mubr.bf16.mxu0 0
      %1362 = vmatmul.mubr.bf16.gmra.mrb[0].mxu0 %v1300
      %v1363 = vpop.f32.mrb[0].mxu0
      %v1364 = vadd.f32 0.0, %v1363
      %v1365 = vpop.f32.mrb[0].mxu0
      %v1366 = vpop.f32.mrb[0].mxu0
      %v1367 = vadd.f32 0.0, %v1366
      %v1368 = vpop.f32.mrb[0].mxu0
      %1369 = vdwg.mxu0
      %v1370 = vadd.f32 %v1156, %v1340
      %v1371 = vadd.f32 %v1157, %v1343
      %v1372 = vadd.f32 %v1158, %v1348
      %v1373 = vadd.f32 %v1159, %v1351
      %v1374 = vadd.f32 %v1160, %v1356
      %v1375 = vadd.f32 %v1161, %v1359
      %v1376 = vadd.f32 %v1162, %v1364
      %v1377 = vadd.f32 %v1163, %v1367
      %1378 = vst.msk [vmem:[#allocation2] sm:$0xff] %vm223, %v1370
      %1379 = vst.msk [vmem:[#allocation2 + $0x8] sm:$0xff] %vm223, %v1371
      %1380 = vst.msk [vmem:[#allocation2 + $0x10] sm:$0xff] %vm223, %v1372
      %1381 = vst.msk [vmem:[#allocation2 + $0x18] sm:$0xff] %vm223, %v1373
      %1382 = vst.msk [vmem:[#allocation2 + $0x20] sm:$0xff] %vm223, %v1374
      %1383 = vst.msk [vmem:[#allocation2 + $0x28] sm:$0xff] %vm223, %v1375
      %1384 = vst.msk [vmem:[#allocation2 + $0x30] sm:$0xff] %vm223, %v1376
      %1385 = vst.msk [vmem:[#allocation2 + $0x38] sm:$0xff] %vm223, %v1377
      %v1386 = vld [vmem:[#allocation2] sm:$0xff]
      %v1387 = vld [vmem:[#allocation2 + $0x8] sm:$0xff]
      %v1388 = vld [vmem:[#allocation2 + $0x10] sm:$0xff]
      %v1389 = vld [vmem:[#allocation2 + $0x18] sm:$0xff]
      %v1390 = vld [vmem:[#allocation2 + $0x20] sm:$0xff]
      %v1391 = vld [vmem:[#allocation2 + $0x28] sm:$0xff]
      %v1392 = vld [vmem:[#allocation2 + $0x30] sm:$0xff]
      %v1393 = vld [vmem:[#allocation2 + $0x38] sm:$0xff]
      %v1394 = vld [vmem:[%s3] sm:$0x1]
      %v1396 = vlaneseq
      %v1397 = vshrl.u32 %v1396, 7
      %v1398 = vsub.s32 0, %v1397
      %v1399 = vrot.slane %v1394, %v1398
      %v1401 = vadd.f32 %v1386, %v1399
      %v1402 = vadd.f32 %v1387, %v1399
      %v1403 = vadd.f32 %v1388, %v1399
      %v1404 = vadd.f32 %v1389, %v1399
      %v1405 = vadd.f32 %v1390, %v1399
      %v1406 = vadd.f32 %v1391, %v1399
      %v1407 = vadd.f32 %v1392, %v1399
      %v1408 = vadd.f32 %v1393, %v1399
      %v1409 = vmax.f32 %v1401, 0.0
      %v1410 = vmax.f32 %v1402, 0.0
      %v1411 = vmax.f32 %v1403, 0.0
      %v1412 = vmax.f32 %v1404, 0.0
      %v1413 = vmax.f32 %v1405, 0.0
      %v1414 = vmax.f32 %v1406, 0.0
      %v1415 = vmax.f32 %v1407, 0.0
      %v1416 = vmax.f32 %v1408, 0.0
      %v1417 = vpack.c.bf16 %v1409, %v1409
      %v1418 = vpack.c.bf16 %v1410, %v1410
      %v1419 = vpack.c.bf16 %v1411, %v1411
      %v1420 = vpack.c.bf16 %v1412, %v1412
      %v1421 = vpack.c.bf16 %v1413, %v1413
      %v1422 = vpack.c.bf16 %v1414, %v1414
      %v1423 = vpack.c.bf16 %v1415, %v1415
      %v1424 = vpack.c.bf16 %v1416, %v1416
      %vm1425 = vcmask 27648
      %1426 = vst.msk [vmem:[%s219] sm:$0xf] %vm1425, %v1417
      %1427 = vst.msk [vmem:[%s219 + $0x4] sm:$0xf] %vm1425, %v1418
      %1428 = vst.msk [vmem:[%s219 + $0x8] sm:$0xf] %vm1425, %v1419
      %1429 = vst.msk [vmem:[%s219 + $0xc] sm:$0xf] %vm1425, %v1420
      %1430 = vst.msk [vmem:[%s219 + $0x10] sm:$0xf] %vm1425, %v1421
      %1431 = vst.msk [vmem:[%s219 + $0x14] sm:$0xf] %vm1425, %v1422
      %1432 = vst.msk [vmem:[%s219 + $0x18] sm:$0xf] %vm1425, %v1423
      %1433 = vst.msk [vmem:[%s219 + $0x1c] sm:$0xf] %vm1425, %v1424
      %s1434 = smul.u32 8, %s20
      %p1435 = scmp.lt.s32.totalorder %s19, 1
      %s1436 = scalar_select %p1435, %s19, 1
      %p1437 = scmp.lt.s32.totalorder %s1434, 7
      %s1438 = scalar_select %p1437, %s1434, 7
      %s1439 = smul.addr %s1436, 8
      %s1440 = sadd.s32 %s1438, %s1439
      %s1441 = smul.addr %s1440, 4
      %s1442 = scalar_lea.vmem %s4, %s1441
      // Predicated region
      $region37: #{conv_block_forward.5} parent=35 // pred_check
        %p1443 = pneg %p136
      $region38: #{conv_block_forward.5} parent=35 // pred_check_branch
        %1445 = sbr.rel (%p1443) target = $region40
      $region39: #{conv_block_forward.5} parent=35 // pred_region
        %s1446 = smul.u32 8, %s20
      $region40: #{conv_block_forward.5} parent=35 // pred_fallthru
        _
    $region36: #{conv_block_forward.5} parent=5 // pred_fallthru
      _
    %p1447 = scmp.le.s32.totalorder 2, %s10
    // Predicated region
    $region41: #{conv_block_forward.5} parent=5 // pred_check
      %p1448 = pneg %p1447
    $region42: #{conv_block_forward.5} parent=5 // pred_check_branch
      %1450 = sbr.rel (%p1448) target = $region44
    $region43: #{conv_block_forward.5} parent=5 // pred_region
      %s1451 = ssub.s32 %s10, 2
      // Predicated region
      $region45: #{conv_block_forward.5} parent=43 // pred_check
        %p1452 = pneg %p142
      $region46: #{conv_block_forward.5} parent=43 // pred_check_branch
        %1454 = sbr.rel (%p1452) target = $region48
      $region47: #{conv_block_forward.5} parent=43 // pred_region
        %s1455 = smul.u32 8, %s22
        %p1456 = scmp.lt.s32.totalorder %s21, 1
        %s1457 = scalar_select %p1456, %s21, 1
        %p1458 = scmp.lt.s32.totalorder %s1455, 7
        %s1459 = scalar_select %p1458, %s1455, 7
        %s1460 = smul.addr %s1457, 8
        %s1461 = sadd.s32 %s1459, %s1460
        %s1462 = smul.addr %s1461, 4
        %s1463 = scalar_lea.vmem %s4, %s1462
      $region48: #{conv_block_forward.5} parent=43 // pred_fallthru
        _
    $region44: #{conv_block_forward.5} parent=5 // pred_fallthru
      _
  $region6: #{conv_block_forward.5} parent=0 // loop_footer
    %s14 = sadd.s32 1, %s10
  $region7: #{conv_block_forward.5} parent=0 // loop_footer_branch
    %9 = sbr.rel target = $region3
  $region8: #{conv_block_forward.5} parent=0 // loop_exit
    _

</llo_original>
